<compile_context>
chip_gen: v6e
topology: v6e:2x2x1
jax: 0.10.0
libtpu: 0.0.40
codegen_flags: <defaults>
</compile_context>

<pallas_src>
import functools
import math

import jax
import jax.numpy as jnp
from jax import lax
from jax.experimental import pallas as pl
from jax.experimental.pallas import tpu as pltpu

NUM_HEADS = 4
LN_EPS = 1e-5


# ----------------------------- kernel helpers -----------------------------

def _layer_norm(x, w, b):
    # x: (N, E) f32; w, b: (1, E) f32
    mu = jnp.mean(x, axis=-1, keepdims=True)
    var = jnp.mean(jnp.square(x - mu), axis=-1, keepdims=True)
    return (x - mu) * lax.rsqrt(var + LN_EPS) * w + b


def _gelu(x, approx):
    if approx:
        # tanh approximation -> EUP slot (frees VALU in the FFN epilogue)
        c = math.sqrt(2.0 / math.pi)
        return 0.5 * x * (1.0 + jnp.tanh(c * (x + 0.044715 * x * x * x)))
    # exact erf GELU (matches torch.nn.functional.gelu default)
    return 0.5 * x * (1.0 + lax.erf(x * (1.0 / math.sqrt(2.0))))


def _linear(x_bf16, w_bf16, b_f32):
    # x: (N, in) bf16, w: (out, in) bf16 torch layout, b: (1, out) f32.
    y = lax.dot_general(x_bf16, w_bf16, (((1,), (1,)), ((), ())),
                        preferred_element_type=jnp.float32)
    return y + b_f32


# --------------------------------- kernel ---------------------------------

def _encoder_layer_kernel(*refs, num_heads, masked, self_attn, mask_offset,
                          approx_gelu):
    # ---- unpack refs (inputs, output, scratch) ----
    i = 0
    if self_attn:
        x_tile_ref, x_full_ref = refs[i], refs[i + 1]
        i += 2
        k_src_ref = v_src_ref = x_full_ref
    else:
        x_tile_ref, k_src_ref, v_src_ref = refs[i], refs[i + 1], refs[i + 2]
        i += 3
    (ln0w_ref, ln0b_ref,
     wq_ref, bq_ref, wk_ref, bk_ref, wv_ref, bv_ref, wo_ref, bo_ref,
     ln1w_ref, ln1b_ref, fc1w_ref, fc1b_ref, fc2w_ref, fc2b_ref) = refs[i:i + 16]
    i += 16
    o_ref = refs[i]
    k_cache, v_cache, q_hm = refs[i + 1], refs[i + 2], refs[i + 3]

    H = num_heads
    q_tile, E = o_ref.shape
    hd = E // H
    Tk = k_cache.shape[1]
    scaling = 1.0 / math.sqrt(hd)
    qi = pl.program_id(1)

    ln0w = ln0w_ref[...]
    ln0b = ln0b_ref[...]

    # ---- K/V: LayerNorm + head-major projection once per batch element,
    #      cached in VMEM scratch and reused by every query tile. Grid axis 1 is
    #      "arbitrary", so qi==0 always precedes the other tiles of this batch. ----
    @pl.when(qi == 0)
    def _fill_kv_cache():
        kn = _layer_norm(k_src_ref[...].astype(jnp.float32),
                         ln0w, ln0b).astype(jnp.bfloat16)
        if self_attn:
            vn = kn                      # LayerNorm computed once, shared by k/v
        else:
            vn = _layer_norm(v_src_ref[...].astype(jnp.float32),
                             ln0w, ln0b).astype(jnp.bfloat16)
        for h in range(H):               # leading-dim weight/cache indexing only
            k_h = lax.dot_general(kn, wk_ref[h], (((1,), (1,)), ((), ())),
                                  preferred_element_type=jnp.float32) + bk_ref[h]
            k_cache[h] = k_h.astype(jnp.bfloat16)            # (Tk, hd)
            # V stored transposed (hd, Tk): P@V then yields (H, hd, q_tile) so the
            # head merge before the output projection is a free leading reshape.
            v_h = lax.dot_general(wv_ref[h], vn, (((1,), (1,)), ((), ())),
                                  preferred_element_type=jnp.float32) + bv_ref[h]
            v_cache[h] = v_h.astype(jnp.bfloat16)            # (hd, Tk)

    # ---- attention block for this query tile ----
    residual = x_tile_ref[...].astype(jnp.float32)           # f32 residual path
    qn = _layer_norm(residual, ln0w, ln0b).astype(jnp.bfloat16)
    for h in range(H):                                        # live range ends at store
        q_h = lax.dot_general(qn, wq_ref[h], (((1,), (1,)), ((), ())),
                              preferred_element_type=jnp.float32) + bq_ref[h]
        q_hm[h] = (q_h * scaling).astype(jnp.bfloat16)        # (q_tile, hd)

    qh = q_hm[...]                                            # (H, q_tile, hd) bf16
    kh = k_cache[...]                                         # (H, Tk, hd)     bf16
    vh = v_cache[...]                                         # (H, hd, Tk)     bf16

    # scores: head-batched, contract-last, f32 accumulation
    s = lax.dot_general(qh, kh, (((2,), (2,)), ((0,), (0,))),
                        preferred_element_type=jnp.float32)   # (H, q_tile, Tk)
    if masked:
        # buffered_future_mask built in-kernel from iota (no mask DMA)
        qpos = qi * q_tile + lax.broadcasted_iota(jnp.int32, (q_tile, Tk), 0)
        kpos = lax.broadcasted_iota(jnp.int32, (q_tile, Tk), 1)
        s = s + jnp.where(kpos - qpos >= mask_offset,
                          jnp.float32(-1e30), jnp.float32(0.0))[None]
    m = jnp.max(s, axis=-1, keepdims=True)
    p = jnp.exp(s - m)
    denom = jnp.sum(p, axis=-1, keepdims=True)
    p = p * pl.reciprocal(denom, approx=True)                 # EUP divide (approx)

    # P@V head-batched; result (H, hd, q_tile) merges into (E, q_tile) for free
    o = lax.dot_general(vh, p.astype(jnp.bfloat16), (((2,), (2,)), ((0,), (0,))),
                        preferred_element_type=jnp.float32)   # (H, hd, q_tile)
    o_flat = o.astype(jnp.bfloat16).reshape(E, q_tile)
    # single full-width (K = E) output projection: out = o_flat.T @ wo.T + bo
    attn = lax.dot_general(o_flat, wo_ref[...], (((0,), (1,)), ((), ())),
                           preferred_element_type=jnp.float32) + bo_ref[...]
    x = residual + attn

    # ---- feed-forward block (pre-norm) ----
    residual = x
    xn = _layer_norm(x, ln1w_ref[...], ln1b_ref[...]).astype(jnp.bfloat16)
    h1 = _linear(xn, fc1w_ref[...], fc1b_ref[...])            # (q_tile, 4E) f32
    h1 = _gelu(h1, approx_gelu)
    y = _linear(h1.astype(jnp.bfloat16), fc2w_ref[...], fc2b_ref[...])
    o_ref[...] = (residual + y).astype(o_ref.dtype)


# ------------------------------ JAX wrapper -------------------------------

def _const_index_map(ndim):
    return lambda b, qi: (0,) * ndim


def _vmem_limit_bytes():
    # derive from the actual chip (64 MiB physical on v7x, 128 MiB on v5e/v6e)
    try:
        cap = int(pltpu.get_tpu_info().vmem_capacity_bytes)
        return max(32 * 1024 * 1024, min(cap - (12 << 20), 100 * 1024 * 1024))
    except Exception:
        return 48 * 1024 * 1024


def _build_mask(t_q, t_k):
    # buffered_future_mask: triu(neg_inf, diagonal = 1 + |dim2 - dim1|).
    i = jnp.arange(t_q)[:, None]
    j = jnp.arange(t_k)[None, :]
    return jnp.where(j - i >= 1 + abs(t_k - t_q), -1e30, 0.0).astype(jnp.float32)


def transformer_encoder_layer(x, params, x_k=None, x_v=None, attn_mask=False,
                              q_tile=None, approx_gelu=False):
    """x, x_k, x_v: (seq_len, batch, embed_dim). Returns the same layout as x."""
    T, B, E = x.shape
    self_attn = (x_k is None) and (x_v is None)
    if not self_attn:
        assert x_k is not None and x_v is not None
    H = NUM_HEADS
    assert E % H == 0
    hd = E // H

    if q_tile is None:
        if T <= 256:
            q_tile = T
        elif T % 256 == 0:
            q_tile = 256          # v6e 2x256 MXU: fill the systolic rows
        elif T % 128 == 0:
            q_tile = 128
        else:
            q_tile = T
    assert T % q_tile == 0
    assert q_tile % 8 == 0 or q_tile == T
    nq = T // q_tile
    masked = bool(attn_mask)

    # time-major (T, B, E) -> batch-major (B, T, E); kept in f32 so the residual
    # path carries full-precision inputs (MXU operands are cast to bf16 in-kernel).
    xb = jnp.transpose(x, (1, 0, 2)).astype(jnp.float32)
    if self_attn:
        Tk = T
        act_args = (xb, xb)
        act_specs = [
            # per-tile block: plain ref[...] read for residual/query
            pl.BlockSpec((None, q_tile, E), lambda b, qi: (b, qi, 0)),
            # full-T block: only read at qi==0 (K/V projection); single-buffered
            pl.BlockSpec((None, T, E), lambda b, qi: (b, 0, 0),
                         pipeline_mode=pl.Buffered(1)),
        ]
    else:
        Tk = x_k.shape[0]
        kb = jnp.transpose(x_k, (1, 0, 2)).astype(jnp.float32)
        vb = jnp.transpose(x_v, (1, 0, 2)).astype(jnp.float32)
        act_args = (xb, kb, vb)
        act_specs = [
            pl.BlockSpec((None, q_tile, E), lambda b, qi: (b, qi, 0)),
            pl.BlockSpec((None, Tk, E), lambda b, qi: (b, 0, 0),
                         pipeline_mode=pl.Buffered(1)),
            pl.BlockSpec((None, Tk, E), lambda b, qi: (b, 0, 0),
                         pipeline_mode=pl.Buffered(1)),
        ]

    p = params
    row = lambda a: a.reshape(1, -1).astype(jnp.float32)
    headw = lambda w: w.reshape(H, hd, E).astype(jnp.bfloat16)   # (H, hd, E) slabs
    weight_args = (
        row(p['ln0w']), row(p['ln0b']),
        headw(p['wq']), p['bq'].reshape(H, 1, hd).astype(jnp.float32),
        headw(p['wk']), p['bk'].reshape(H, 1, hd).astype(jnp.float32),
        headw(p['wv']), p['bv'].reshape(H, hd, 1).astype(jnp.float32),
        p['wo'].astype(jnp.bfloat16), row(p['bo']),
        row(p['ln1w']), row(p['ln1b']),
        p['fc1w'].astype(jnp.bfloat16), row(p['fc1b']),
        p['fc2w'].astype(jnp.bfloat16), row(p['fc2b']),
    )
    # constant index maps + single buffering -> weights VMEM-resident, no 2x footprint
    weight_specs = [pl.BlockSpec(w.shape, _const_index_map(w.ndim),
                                 pipeline_mode=pl.Buffered(1)) for w in weight_args]

    scratch = [
        pltpu.VMEM((H, Tk, hd), jnp.bfloat16),      # K cache, head-major
        pltpu.VMEM((H, hd, Tk), jnp.bfloat16),      # V cache, head-major, transposed
        pltpu.VMEM((H, q_tile, hd), jnp.bfloat16),  # Q, head-major, per tile
    ]

    mask_offset = (1 + abs(Tk - T)) if masked else 0

    kernel = functools.partial(
        _encoder_layer_kernel, num_heads=H, masked=masked, self_attn=self_attn,
        mask_offset=mask_offset, approx_gelu=approx_gelu)

    grid_spec = pltpu.PrefetchScalarGridSpec(
        num_scalar_prefetch=0,
        grid=(B, nq),
        in_specs=list(act_specs) + list(weight_specs),
        out_specs=pl.BlockSpec((None, q_tile, E), lambda b, qi: (b, qi, 0)),
        scratch_shapes=scratch,
    )

    out_b = pl.pallas_call(
        kernel,
        grid_spec=grid_spec,
        out_shape=jax.ShapeDtypeStruct((B, T, E), jnp.float32),
        compiler_params=pltpu.CompilerParams(
            # batch axis parallel (dual-TC sharding on v7x); q-tile axis "arbitrary"
            # so the per-batch K/V cache fill at qi==0 precedes that batch's tiles.
            dimension_semantics=("parallel", "arbitrary"),
            vmem_limit_bytes=_vmem_limit_bytes(),
        ),
    )(*act_args, *weight_args)

    return jnp.transpose(out_b, (1, 0, 2))       # back to (seq_len, batch, embed)


# -------------------------- deterministic params ---------------------------

def init_params(key, embed_dim):
    E = embed_dim
    ks = jax.random.split(key, 10)

    def xavier(k, shape):
        fan_out, fan_in = shape
        bound = math.sqrt(6.0 / (fan_in + fan_out))
        return jax.random.uniform(k, shape, jnp.float32, -bound, bound)

    in_proj_w = xavier(ks[0], (3 * E, E))      # MultiheadAttention in_proj
    out_proj_w = xavier(ks[1], (E, E))
    fc1_w = xavier(ks[2], (4 * E, E))
    fc2_w = xavier(ks[3], (E, 4 * E))

    ln0_w = 1.0 + 0.1 * jax.random.normal(ks[4], (E,), jnp.float32)
    ln0_b = 0.1 * jax.random.normal(ks[5], (E,), jnp.float32)
    ln1_w = 1.0 + 0.1 * jax.random.normal(ks[6], (E,), jnp.float32)
    ln1_b = 0.1 * jax.random.normal(ks[7], (E,), jnp.float32)

    b_qkv = 0.05 * jax.random.normal(ks[8], (3 * E,), jnp.float32)
    b_other = 0.05 * jax.random.normal(ks[9], (E + 4 * E + E,), jnp.float32)

    return dict(
        wq=in_proj_w[:E], wk=in_proj_w[E:2 * E], wv=in_proj_w[2 * E:],
        bq=b_qkv[:E], bk=b_qkv[E:2 * E], bv=b_qkv[2 * E:],
        wo=out_proj_w, bo=b_other[:E],
        fc1w=fc1_w, fc1b=b_other[E:E + 4 * E],
        fc2w=fc2_w, fc2b=b_other[E + 4 * E:],
        ln0w=ln0_w, ln0b=ln0_b, ln1w=ln1_w, ln1b=ln1_b,
    )


# ---------------------------- pure-JAX reference ---------------------------

def reference_forward(x, p, x_k=None, x_v=None, attn_mask=False):
    T, B, E = x.shape
    H, hd = NUM_HEADS, E // NUM_HEADS
    xk = x if x_k is None else x_k
    xv = x if x_v is None else x_v
    Tk = xk.shape[0]

    def ln(v, w, b):
        mu = v.mean(-1, keepdims=True)
        var = ((v - mu) ** 2).mean(-1, keepdims=True)
        return (v - mu) / jnp.sqrt(var + LN_EPS) * w + b

    residual = x
    qn = ln(x, p['ln0w'], p['ln0b'])
    kn = ln(xk, p['ln0w'], p['ln0b'])
    vn = ln(xv, p['ln0w'], p['ln0b'])
    q = (qn @ p['wq'].T + p['bq']) / math.sqrt(hd)
    k = kn @ p['wk'].T + p['bk']
    v = vn @ p['wv'].T + p['bv']
    qh = q.reshape(T, B, H, hd)
    kh = k.reshape(Tk, B, H, hd)
    vh = v.reshape(Tk, B, H, hd)
    s = jnp.einsum('qbhd,kbhd->bhqk', qh, kh)
    if attn_mask:
        s = s + _build_mask(T, Tk)
    a = jax.nn.softmax(s, axis=-1)
    o = jnp.einsum('bhqk,kbhd->qbhd', a, vh).reshape(T, B, E)
    o = o @ p['wo'].T + p['bo']
    x = residual + o

    residual = x
    xn = ln(x, p['ln1w'], p['ln1b'])
    hh = jax.nn.gelu(xn @ p['fc1w'].T + p['fc1b'], approximate=False)
    y = hh @ p['fc2w'].T + p['fc2b']
    return residual + y


# ---------------------------------- main -----------------------------------

if __name__ == "__main__":
    key = jax.random.PRNGKey(0)
    kx, kk, kv, kp = jax.random.split(key, 4)

    T, B, E = 16, 2, 32       # (seq_len, batch, embed_dim), num_heads = 4
    Tk = 24                   # cross-modal key/value sequence length
    x = jax.random.normal(kx, (T, B, E), jnp.float32)
    x_k = jax.random.normal(kk, (Tk, B, E), jnp.float32)
    x_v = jax.random.normal(kv, (Tk, B, E), jnp.float32)
    params = init_params(kp, E)

    def check(out, ref, name):
        out = jax.block_until_ready(out)
        assert out.shape == ref.shape, f"{name}: shape {out.shape} vs {ref.shape}"
        err = float(jnp.max(jnp.abs(out - ref)))
        scale = float(jnp.max(jnp.abs(ref)))
        tol = 2e-2 * max(1.0, scale)   # bf16 MXU compute vs f32 reference
        assert err < tol, f"{name}: max abs err {err} vs tol {tol}"

    # 1) self-attention, no mask, q tiled into two blocks -> grid (B, 2)
    out1 = transformer_encoder_layer(x, params, q_tile=8)
    check(out1, reference_forward(x, params), "self")

    # 2) self-attention with the buffered future mask (iota-generated in-kernel)
    out2 = transformer_encoder_layer(x, params, attn_mask=True, q_tile=8)
    check(out2, reference_forward(x, params, attn_mask=True), "self+mask")

    # 3) cross-modal attention (different key/value sequence length)
    out3 = transformer_encoder_layer(x, params, x_k=x_k, x_v=x_v, q_tile=8)
    check(out3, reference_forward(x, params, x_k=x_k, x_v=x_v), "cross")

    print("KERNEL_OK")
</pallas_src>

<mosaic_0001>
module attributes {stable_mosaic.version = 11 : i64} {
  func.func @_encoder_layer_kernel(%arg0: i32, %arg1: i32, %arg2: memref<1x8x32xf32, #tpu.memory_space<vmem>>, %arg3: memref<1x16x32xf32, #tpu.memory_space<vmem>>, %arg4: memref<1x32xf32, #tpu.memory_space<vmem>>, %arg5: memref<1x32xf32, #tpu.memory_space<vmem>>, %arg6: memref<4x8x32xbf16, #tpu.memory_space<vmem>>, %arg7: memref<4x1x8xf32, #tpu.memory_space<vmem>>, %arg8: memref<4x8x32xbf16, #tpu.memory_space<vmem>>, %arg9: memref<4x1x8xf32, #tpu.memory_space<vmem>>, %arg10: memref<4x8x32xbf16, #tpu.memory_space<vmem>>, %arg11: memref<4x8x1xf32, #tpu.memory_space<vmem>>, %arg12: memref<32x32xbf16, #tpu.memory_space<vmem>>, %arg13: memref<1x32xf32, #tpu.memory_space<vmem>>, %arg14: memref<1x32xf32, #tpu.memory_space<vmem>>, %arg15: memref<1x32xf32, #tpu.memory_space<vmem>>, %arg16: memref<128x32xbf16, #tpu.memory_space<vmem>>, %arg17: memref<1x128xf32, #tpu.memory_space<vmem>>, %arg18: memref<32x128xbf16, #tpu.memory_space<vmem>>, %arg19: memref<1x32xf32, #tpu.memory_space<vmem>>, %arg20: memref<1x8x32xf32, #tpu.memory_space<vmem>>, %arg21: memref<4x16x8xbf16, #tpu.memory_space<vmem>>, %arg22: memref<4x8x16xbf16, #tpu.memory_space<vmem>>, %arg23: memref<4x8x8xbf16, #tpu.memory_space<vmem>>) attributes {dimension_semantics = [#tpu.dimension_semantics<parallel>, #tpu.dimension_semantics<arbitrary>], iteration_bounds = array<i64: 2, 2>, scalar_prefetch = 0 : i64, scratch_operands = 3 : i64, tpu.core_type = #tpu.core_type<tc>, window_params = [{transform_indices = @transform_0, window_bounds = array<i64: 1, 8, 32>}, {pipeline_mode = #tpu.pipeline_mode<synchronous>, transform_indices = @transform_1, window_bounds = array<i64: 1, 16, 32>}, {pipeline_mode = #tpu.pipeline_mode<synchronous>, transform_indices = @transform_2, window_bounds = array<i64: 1, 32>}, {pipeline_mode = #tpu.pipeline_mode<synchronous>, transform_indices = @transform_3, window_bounds = array<i64: 1, 32>}, {pipeline_mode = #tpu.pipeline_mode<synchronous>, transform_indices = @transform_4, window_bounds = array<i64: 4, 8, 32>}, {pipeline_mode = #tpu.pipeline_mode<synchronous>, transform_indices = @transform_5, window_bounds = array<i64: 4, 1, 8>}, {pipeline_mode = #tpu.pipeline_mode<synchronous>, transform_indices = @transform_6, window_bounds = array<i64: 4, 8, 32>}, {pipeline_mode = #tpu.pipeline_mode<synchronous>, transform_indices = @transform_7, window_bounds = array<i64: 4, 1, 8>}, {pipeline_mode = #tpu.pipeline_mode<synchronous>, transform_indices = @transform_8, window_bounds = array<i64: 4, 8, 32>}, {pipeline_mode = #tpu.pipeline_mode<synchronous>, transform_indices = @transform_9, window_bounds = array<i64: 4, 8, 1>}, {pipeline_mode = #tpu.pipeline_mode<synchronous>, transform_indices = @transform_10, window_bounds = array<i64: 32, 32>}, {pipeline_mode = #tpu.pipeline_mode<synchronous>, transform_indices = @transform_11, window_bounds = array<i64: 1, 32>}, {pipeline_mode = #tpu.pipeline_mode<synchronous>, transform_indices = @transform_12, window_bounds = array<i64: 1, 32>}, {pipeline_mode = #tpu.pipeline_mode<synchronous>, transform_indices = @transform_13, window_bounds = array<i64: 1, 32>}, {pipeline_mode = #tpu.pipeline_mode<synchronous>, transform_indices = @transform_14, window_bounds = array<i64: 128, 32>}, {pipeline_mode = #tpu.pipeline_mode<synchronous>, transform_indices = @transform_15, window_bounds = array<i64: 1, 128>}, {pipeline_mode = #tpu.pipeline_mode<synchronous>, transform_indices = @transform_16, window_bounds = array<i64: 32, 128>}, {pipeline_mode = #tpu.pipeline_mode<synchronous>, transform_indices = @transform_17, window_bounds = array<i64: 1, 32>}, {transform_indices = @transform_18, window_bounds = array<i64: 1, 8, 32>}]} {
    %c0 = arith.constant 0 : index
    %c0_0 = arith.constant 0 : index
    %0 = vector.load %arg4[%c0, %c0_0] : memref<1x32xf32, #tpu.memory_space<vmem>>, vector<1x32xf32>
    %c0_1 = arith.constant 0 : index
    %c0_2 = arith.constant 0 : index
    %1 = vector.load %arg5[%c0_1, %c0_2] : memref<1x32xf32, #tpu.memory_space<vmem>>, vector<1x32xf32>
    %c0_i32 = arith.constant 0 : i32
    %2 = arith.cmpi eq, %arg1, %c0_i32 : i32
    %3 = arith.extui %2 : i1 to i32
    %c0_i32_3 = arith.constant 0 : i32
    %4 = arith.cmpi ne, %3, %c0_i32_3 : i32
    scf.if %4 {
      %c0_95 = arith.constant 0 : index
      %c0_96 = arith.constant 0 : index
      %c0_97 = arith.constant 0 : index
      %154 = vector.load %arg3[%c0_95, %c0_96, %c0_97] : memref<1x16x32xf32, #tpu.memory_space<vmem>>, vector<1x16x32xf32>
      %155 = vector.shape_cast %154 : vector<1x16x32xf32> to vector<16x32xf32>
      %cst_98 = arith.constant dense<0.000000e+00> : vector<16xf32>
      %156 = vector.multi_reduction <add>, %155, %cst_98 [1] : vector<16x32xf32> to vector<16xf32>
      %157 = vector.shape_cast %156 : vector<16xf32> to vector<16x1xf32>
      %cst_99 = arith.constant 3.200000e+01 : f32
      %158 = vector.broadcast %cst_99 : f32 to vector<16x1xf32>
      %159 = arith.divf %157, %158 : vector<16x1xf32>
      %160 = vector.broadcast %159 : vector<16x1xf32> to vector<16x32xf32>
      %161 = arith.subf %155, %160 : vector<16x32xf32>
      %162 = arith.mulf %161, %161 : vector<16x32xf32>
      %cst_100 = arith.constant dense<0.000000e+00> : vector<16xf32>
      %163 = vector.multi_reduction <add>, %162, %cst_100 [1] : vector<16x32xf32> to vector<16xf32>
      %164 = vector.shape_cast %163 : vector<16xf32> to vector<16x1xf32>
      %cst_101 = arith.constant 3.200000e+01 : f32
      %165 = vector.broadcast %cst_101 : f32 to vector<16x1xf32>
      %166 = arith.divf %164, %165 : vector<16x1xf32>
      %167 = vector.broadcast %159 : vector<16x1xf32> to vector<16x32xf32>
      %168 = arith.subf %155, %167 : vector<16x32xf32>
      %cst_102 = arith.constant 9.99999974E-6 : f32
      %169 = vector.broadcast %cst_102 : f32 to vector<16x1xf32>
      %170 = arith.addf %166, %169 : vector<16x1xf32>
      %171 = math.rsqrt %170 : vector<16x1xf32>
      %172 = vector.broadcast %171 : vector<16x1xf32> to vector<16x32xf32>
      %173 = arith.mulf %168, %172 : vector<16x32xf32>
      %174 = vector.broadcast %0 : vector<1x32xf32> to vector<16x32xf32>
      %175 = arith.mulf %173, %174 : vector<16x32xf32>
      %176 = vector.broadcast %1 : vector<1x32xf32> to vector<16x32xf32>
      %177 = arith.addf %175, %176 : vector<16x32xf32>
      %178 = arith.truncf %177 : vector<16x32xf32> to vector<16x32xbf16>
      %c0_103 = arith.constant 0 : index
      %c0_104 = arith.constant 0 : index
      %c0_105 = arith.constant 0 : index
      %179 = vector.load %arg8[%c0_103, %c0_104, %c0_105] : memref<4x8x32xbf16, #tpu.memory_space<vmem>>, vector<1x8x32xbf16>
      %180 = vector.shape_cast %179 : vector<1x8x32xbf16> to vector<8x32xbf16>
      %cst_106 = arith.constant dense<0.000000e+00> : vector<16x8xf32>
      %181 = tpu.matmul %178, %180, %cst_106 {dimension_numbers = #tpu.dot_dimension_numbers<[1], [1], [0], [0], [0, 0, 1, 0], [], []>} : vector<16x32xbf16>, vector<8x32xbf16>, vector<16x8xf32> -> vector<16x8xf32>
      %c0_107 = arith.constant 0 : index
      %c0_108 = arith.constant 0 : index
      %c0_109 = arith.constant 0 : index
      %182 = vector.load %arg9[%c0_107, %c0_108, %c0_109] : memref<4x1x8xf32, #tpu.memory_space<vmem>>, vector<1x1x8xf32>
      %183 = vector.shape_cast %182 : vector<1x1x8xf32> to vector<1x8xf32>
      %184 = vector.broadcast %183 : vector<1x8xf32> to vector<16x8xf32>
      %185 = arith.addf %181, %184 : vector<16x8xf32>
      %186 = arith.truncf %185 : vector<16x8xf32> to vector<16x8xbf16>
      %c0_110 = arith.constant 0 : index
      %c0_111 = arith.constant 0 : index
      %c0_112 = arith.constant 0 : index
      %187 = vector.load %arg21[%c0_110, %c0_111, %c0_112] : memref<4x16x8xbf16, #tpu.memory_space<vmem>>, vector<1x16x8xbf16>
      %188 = vector.shape_cast %187 : vector<1x16x8xbf16> to vector<16x8xbf16>
      %189 = vector.shape_cast %186 : vector<16x8xbf16> to vector<1x16x8xbf16>
      tpu.vector_store %arg21[%c0_110, %c0_111, %c0_112], %189 {strides = array<i32>} : memref<4x16x8xbf16, #tpu.memory_space<vmem>>, vector<1x16x8xbf16>,
      %c0_113 = arith.constant 0 : index
      %c0_114 = arith.constant 0 : index
      %c0_115 = arith.constant 0 : index
      %190 = vector.load %arg10[%c0_113, %c0_114, %c0_115] : memref<4x8x32xbf16, #tpu.memory_space<vmem>>, vector<1x8x32xbf16>
      %191 = vector.shape_cast %190 : vector<1x8x32xbf16> to vector<8x32xbf16>
      %cst_116 = arith.constant dense<0.000000e+00> : vector<8x16xf32>
      %192 = tpu.matmul %191, %178, %cst_116 {dimension_numbers = #tpu.dot_dimension_numbers<[1], [1], [0], [0], [0, 0, 1, 0], [], []>} : vector<8x32xbf16>, vector<16x32xbf16>, vector<8x16xf32> -> vector<8x16xf32>
      %c0_117 = arith.constant 0 : index
      %c0_118 = arith.constant 0 : index
      %c0_119 = arith.constant 0 : index
      %193 = vector.load %arg11[%c0_117, %c0_118, %c0_119] : memref<4x8x1xf32, #tpu.memory_space<vmem>>, vector<1x8x1xf32>
      %194 = vector.shape_cast %193 : vector<1x8x1xf32> to vector<8x1xf32>
      %195 = vector.broadcast %194 : vector<8x1xf32> to vector<8x16xf32>
      %196 = arith.addf %192, %195 : vector<8x16xf32>
      %197 = arith.truncf %196 : vector<8x16xf32> to vector<8x16xbf16>
      %c0_120 = arith.constant 0 : index
      %c0_121 = arith.constant 0 : index
      %c0_122 = arith.constant 0 : index
      %198 = vector.load %arg22[%c0_120, %c0_121, %c0_122] : memref<4x8x16xbf16, #tpu.memory_space<vmem>>, vector<1x8x16xbf16>
      %199 = vector.shape_cast %198 : vector<1x8x16xbf16> to vector<8x16xbf16>
      %200 = vector.shape_cast %197 : vector<8x16xbf16> to vector<1x8x16xbf16>
      tpu.vector_store %arg22[%c0_120, %c0_121, %c0_122], %200 {strides = array<i32>} : memref<4x8x16xbf16, #tpu.memory_space<vmem>>, vector<1x8x16xbf16>,
      %c1_123 = arith.constant 1 : index
      %c0_124 = arith.constant 0 : index
      %c0_125 = arith.constant 0 : index
      %201 = vector.load %arg8[%c1_123, %c0_124, %c0_125] : memref<4x8x32xbf16, #tpu.memory_space<vmem>>, vector<1x8x32xbf16>
      %202 = vector.shape_cast %201 : vector<1x8x32xbf16> to vector<8x32xbf16>
      %cst_126 = arith.constant dense<0.000000e+00> : vector<16x8xf32>
      %203 = tpu.matmul %178, %202, %cst_126 {dimension_numbers = #tpu.dot_dimension_numbers<[1], [1], [0], [0], [0, 0, 1, 0], [], []>} : vector<16x32xbf16>, vector<8x32xbf16>, vector<16x8xf32> -> vector<16x8xf32>
      %c1_127 = arith.constant 1 : index
      %c0_128 = arith.constant 0 : index
      %c0_129 = arith.constant 0 : index
      %204 = vector.load %arg9[%c1_127, %c0_128, %c0_129] : memref<4x1x8xf32, #tpu.memory_space<vmem>>, vector<1x1x8xf32>
      %205 = vector.shape_cast %204 : vector<1x1x8xf32> to vector<1x8xf32>
      %206 = vector.broadcast %205 : vector<1x8xf32> to vector<16x8xf32>
      %207 = arith.addf %203, %206 : vector<16x8xf32>
      %208 = arith.truncf %207 : vector<16x8xf32> to vector<16x8xbf16>
      %c1_130 = arith.constant 1 : index
      %c0_131 = arith.constant 0 : index
      %c0_132 = arith.constant 0 : index
      %209 = vector.load %arg21[%c1_130, %c0_131, %c0_132] : memref<4x16x8xbf16, #tpu.memory_space<vmem>>, vector<1x16x8xbf16>
      %210 = vector.shape_cast %209 : vector<1x16x8xbf16> to vector<16x8xbf16>
      %211 = vector.shape_cast %208 : vector<16x8xbf16> to vector<1x16x8xbf16>
      tpu.vector_store %arg21[%c1_130, %c0_131, %c0_132], %211 {strides = array<i32>} : memref<4x16x8xbf16, #tpu.memory_space<vmem>>, vector<1x16x8xbf16>,
      %c1_133 = arith.constant 1 : index
      %c0_134 = arith.constant 0 : index
      %c0_135 = arith.constant 0 : index
      %212 = vector.load %arg10[%c1_133, %c0_134, %c0_135] : memref<4x8x32xbf16, #tpu.memory_space<vmem>>, vector<1x8x32xbf16>
      %213 = vector.shape_cast %212 : vector<1x8x32xbf16> to vector<8x32xbf16>
      %cst_136 = arith.constant dense<0.000000e+00> : vector<8x16xf32>
      %214 = tpu.matmul %213, %178, %cst_136 {dimension_numbers = #tpu.dot_dimension_numbers<[1], [1], [0], [0], [0, 0, 1, 0], [], []>} : vector<8x32xbf16>, vector<16x32xbf16>, vector<8x16xf32> -> vector<8x16xf32>
      %c1_137 = arith.constant 1 : index
      %c0_138 = arith.constant 0 : index
      %c0_139 = arith.constant 0 : index
      %215 = vector.load %arg11[%c1_137, %c0_138, %c0_139] : memref<4x8x1xf32, #tpu.memory_space<vmem>>, vector<1x8x1xf32>
      %216 = vector.shape_cast %215 : vector<1x8x1xf32> to vector<8x1xf32>
      %217 = vector.broadcast %216 : vector<8x1xf32> to vector<8x16xf32>
      %218 = arith.addf %214, %217 : vector<8x16xf32>
      %219 = arith.truncf %218 : vector<8x16xf32> to vector<8x16xbf16>
      %c1_140 = arith.constant 1 : index
      %c0_141 = arith.constant 0 : index
      %c0_142 = arith.constant 0 : index
      %220 = vector.load %arg22[%c1_140, %c0_141, %c0_142] : memref<4x8x16xbf16, #tpu.memory_space<vmem>>, vector<1x8x16xbf16>
      %221 = vector.shape_cast %220 : vector<1x8x16xbf16> to vector<8x16xbf16>
      %222 = vector.shape_cast %219 : vector<8x16xbf16> to vector<1x8x16xbf16>
      tpu.vector_store %arg22[%c1_140, %c0_141, %c0_142], %222 {strides = array<i32>} : memref<4x8x16xbf16, #tpu.memory_space<vmem>>, vector<1x8x16xbf16>,
      %c2_143 = arith.constant 2 : index
      %c0_144 = arith.constant 0 : index
      %c0_145 = arith.constant 0 : index
      %223 = vector.load %arg8[%c2_143, %c0_144, %c0_145] : memref<4x8x32xbf16, #tpu.memory_space<vmem>>, vector<1x8x32xbf16>
      %224 = vector.shape_cast %223 : vector<1x8x32xbf16> to vector<8x32xbf16>
      %cst_146 = arith.constant dense<0.000000e+00> : vector<16x8xf32>
      %225 = tpu.matmul %178, %224, %cst_146 {dimension_numbers = #tpu.dot_dimension_numbers<[1], [1], [0], [0], [0, 0, 1, 0], [], []>} : vector<16x32xbf16>, vector<8x32xbf16>, vector<16x8xf32> -> vector<16x8xf32>
      %c2_147 = arith.constant 2 : index
      %c0_148 = arith.constant 0 : index
      %c0_149 = arith.constant 0 : index
      %226 = vector.load %arg9[%c2_147, %c0_148, %c0_149] : memref<4x1x8xf32, #tpu.memory_space<vmem>>, vector<1x1x8xf32>
      %227 = vector.shape_cast %226 : vector<1x1x8xf32> to vector<1x8xf32>
      %228 = vector.broadcast %227 : vector<1x8xf32> to vector<16x8xf32>
      %229 = arith.addf %225, %228 : vector<16x8xf32>
      %230 = arith.truncf %229 : vector<16x8xf32> to vector<16x8xbf16>
      %c2_150 = arith.constant 2 : index
      %c0_151 = arith.constant 0 : index
      %c0_152 = arith.constant 0 : index
      %231 = vector.load %arg21[%c2_150, %c0_151, %c0_152] : memref<4x16x8xbf16, #tpu.memory_space<vmem>>, vector<1x16x8xbf16>
      %232 = vector.shape_cast %231 : vector<1x16x8xbf16> to vector<16x8xbf16>
      %233 = vector.shape_cast %230 : vector<16x8xbf16> to vector<1x16x8xbf16>
      tpu.vector_store %arg21[%c2_150, %c0_151, %c0_152], %233 {strides = array<i32>} : memref<4x16x8xbf16, #tpu.memory_space<vmem>>, vector<1x16x8xbf16>,
      %c2_153 = arith.constant 2 : index
      %c0_154 = arith.constant 0 : index
      %c0_155 = arith.constant 0 : index
      %234 = vector.load %arg10[%c2_153, %c0_154, %c0_155] : memref<4x8x32xbf16, #tpu.memory_space<vmem>>, vector<1x8x32xbf16>
      %235 = vector.shape_cast %234 : vector<1x8x32xbf16> to vector<8x32xbf16>
      %cst_156 = arith.constant dense<0.000000e+00> : vector<8x16xf32>
      %236 = tpu.matmul %235, %178, %cst_156 {dimension_numbers = #tpu.dot_dimension_numbers<[1], [1], [0], [0], [0, 0, 1, 0], [], []>} : vector<8x32xbf16>, vector<16x32xbf16>, vector<8x16xf32> -> vector<8x16xf32>
      %c2_157 = arith.constant 2 : index
      %c0_158 = arith.constant 0 : index
      %c0_159 = arith.constant 0 : index
      %237 = vector.load %arg11[%c2_157, %c0_158, %c0_159] : memref<4x8x1xf32, #tpu.memory_space<vmem>>, vector<1x8x1xf32>
      %238 = vector.shape_cast %237 : vector<1x8x1xf32> to vector<8x1xf32>
      %239 = vector.broadcast %238 : vector<8x1xf32> to vector<8x16xf32>
      %240 = arith.addf %236, %239 : vector<8x16xf32>
      %241 = arith.truncf %240 : vector<8x16xf32> to vector<8x16xbf16>
      %c2_160 = arith.constant 2 : index
      %c0_161 = arith.constant 0 : index
      %c0_162 = arith.constant 0 : index
      %242 = vector.load %arg22[%c2_160, %c0_161, %c0_162] : memref<4x8x16xbf16, #tpu.memory_space<vmem>>, vector<1x8x16xbf16>
      %243 = vector.shape_cast %242 : vector<1x8x16xbf16> to vector<8x16xbf16>
      %244 = vector.shape_cast %241 : vector<8x16xbf16> to vector<1x8x16xbf16>
      tpu.vector_store %arg22[%c2_160, %c0_161, %c0_162], %244 {strides = array<i32>} : memref<4x8x16xbf16, #tpu.memory_space<vmem>>, vector<1x8x16xbf16>,
      %c3_163 = arith.constant 3 : index
      %c0_164 = arith.constant 0 : index
      %c0_165 = arith.constant 0 : index
      %245 = vector.load %arg8[%c3_163, %c0_164, %c0_165] : memref<4x8x32xbf16, #tpu.memory_space<vmem>>, vector<1x8x32xbf16>
      %246 = vector.shape_cast %245 : vector<1x8x32xbf16> to vector<8x32xbf16>
      %cst_166 = arith.constant dense<0.000000e+00> : vector<16x8xf32>
      %247 = tpu.matmul %178, %246, %cst_166 {dimension_numbers = #tpu.dot_dimension_numbers<[1], [1], [0], [0], [0, 0, 1, 0], [], []>} : vector<16x32xbf16>, vector<8x32xbf16>, vector<16x8xf32> -> vector<16x8xf32>
      %c3_167 = arith.constant 3 : index
      %c0_168 = arith.constant 0 : index
      %c0_169 = arith.constant 0 : index
      %248 = vector.load %arg9[%c3_167, %c0_168, %c0_169] : memref<4x1x8xf32, #tpu.memory_space<vmem>>, vector<1x1x8xf32>
      %249 = vector.shape_cast %248 : vector<1x1x8xf32> to vector<1x8xf32>
      %250 = vector.broadcast %249 : vector<1x8xf32> to vector<16x8xf32>
      %251 = arith.addf %247, %250 : vector<16x8xf32>
      %252 = arith.truncf %251 : vector<16x8xf32> to vector<16x8xbf16>
      %c3_170 = arith.constant 3 : index
      %c0_171 = arith.constant 0 : index
      %c0_172 = arith.constant 0 : index
      %253 = vector.load %arg21[%c3_170, %c0_171, %c0_172] : memref<4x16x8xbf16, #tpu.memory_space<vmem>>, vector<1x16x8xbf16>
      %254 = vector.shape_cast %253 : vector<1x16x8xbf16> to vector<16x8xbf16>
      %255 = vector.shape_cast %252 : vector<16x8xbf16> to vector<1x16x8xbf16>
      tpu.vector_store %arg21[%c3_170, %c0_171, %c0_172], %255 {strides = array<i32>} : memref<4x16x8xbf16, #tpu.memory_space<vmem>>, vector<1x16x8xbf16>,
      %c3_173 = arith.constant 3 : index
      %c0_174 = arith.constant 0 : index
      %c0_175 = arith.constant 0 : index
      %256 = vector.load %arg10[%c3_173, %c0_174, %c0_175] : memref<4x8x32xbf16, #tpu.memory_space<vmem>>, vector<1x8x32xbf16>
      %257 = vector.shape_cast %256 : vector<1x8x32xbf16> to vector<8x32xbf16>
      %cst_176 = arith.constant dense<0.000000e+00> : vector<8x16xf32>
      %258 = tpu.matmul %257, %178, %cst_176 {dimension_numbers = #tpu.dot_dimension_numbers<[1], [1], [0], [0], [0, 0, 1, 0], [], []>} : vector<8x32xbf16>, vector<16x32xbf16>, vector<8x16xf32> -> vector<8x16xf32>
      %c3_177 = arith.constant 3 : index
      %c0_178 = arith.constant 0 : index
      %c0_179 = arith.constant 0 : index
      %259 = vector.load %arg11[%c3_177, %c0_178, %c0_179] : memref<4x8x1xf32, #tpu.memory_space<vmem>>, vector<1x8x1xf32>
      %260 = vector.shape_cast %259 : vector<1x8x1xf32> to vector<8x1xf32>
      %261 = vector.broadcast %260 : vector<8x1xf32> to vector<8x16xf32>
      %262 = arith.addf %258, %261 : vector<8x16xf32>
      %263 = arith.truncf %262 : vector<8x16xf32> to vector<8x16xbf16>
      %c3_180 = arith.constant 3 : index
      %c0_181 = arith.constant 0 : index
      %c0_182 = arith.constant 0 : index
      %264 = vector.load %arg22[%c3_180, %c0_181, %c0_182] : memref<4x8x16xbf16, #tpu.memory_space<vmem>>, vector<1x8x16xbf16>
      %265 = vector.shape_cast %264 : vector<1x8x16xbf16> to vector<8x16xbf16>
      %266 = vector.shape_cast %263 : vector<8x16xbf16> to vector<1x8x16xbf16>
      tpu.vector_store %arg22[%c3_180, %c0_181, %c0_182], %266 {strides = array<i32>} : memref<4x8x16xbf16, #tpu.memory_space<vmem>>, vector<1x8x16xbf16>,
    } else {
    }
    %c0_4 = arith.constant 0 : index
    %c0_5 = arith.constant 0 : index
    %c0_6 = arith.constant 0 : index
    %5 = vector.load %arg2[%c0_4, %c0_5, %c0_6] : memref<1x8x32xf32, #tpu.memory_space<vmem>>, vector<1x8x32xf32>
    %6 = vector.shape_cast %5 : vector<1x8x32xf32> to vector<8x32xf32>
    %cst = arith.constant dense<0.000000e+00> : vector<8xf32>
    %7 = vector.multi_reduction <add>, %6, %cst [1] : vector<8x32xf32> to vector<8xf32>
    %8 = vector.shape_cast %7 : vector<8xf32> to vector<8x1xf32>
    %cst_7 = arith.constant 3.200000e+01 : f32
    %9 = vector.broadcast %cst_7 : f32 to vector<8x1xf32>
    %10 = arith.divf %8, %9 : vector<8x1xf32>
    %11 = vector.broadcast %10 : vector<8x1xf32> to vector<8x32xf32>
    %12 = arith.subf %6, %11 : vector<8x32xf32>
    %13 = arith.mulf %12, %12 : vector<8x32xf32>
    %cst_8 = arith.constant dense<0.000000e+00> : vector<8xf32>
    %14 = vector.multi_reduction <add>, %13, %cst_8 [1] : vector<8x32xf32> to vector<8xf32>
    %15 = vector.shape_cast %14 : vector<8xf32> to vector<8x1xf32>
    %cst_9 = arith.constant 3.200000e+01 : f32
    %16 = vector.broadcast %cst_9 : f32 to vector<8x1xf32>
    %17 = arith.divf %15, %16 : vector<8x1xf32>
    %18 = vector.broadcast %10 : vector<8x1xf32> to vector<8x32xf32>
    %19 = arith.subf %6, %18 : vector<8x32xf32>
    %cst_10 = arith.constant 9.99999974E-6 : f32
    %20 = vector.broadcast %cst_10 : f32 to vector<8x1xf32>
    %21 = arith.addf %17, %20 : vector<8x1xf32>
    %22 = math.rsqrt %21 : vector<8x1xf32>
    %23 = vector.broadcast %22 : vector<8x1xf32> to vector<8x32xf32>
    %24 = arith.mulf %19, %23 : vector<8x32xf32>
    %25 = vector.broadcast %0 : vector<1x32xf32> to vector<8x32xf32>
    %26 = arith.mulf %24, %25 : vector<8x32xf32>
    %27 = vector.broadcast %1 : vector<1x32xf32> to vector<8x32xf32>
    %28 = arith.addf %26, %27 : vector<8x32xf32>
    %29 = arith.truncf %28 : vector<8x32xf32> to vector<8x32xbf16>
    %c0_11 = arith.constant 0 : index
    %c0_12 = arith.constant 0 : index
    %c0_13 = arith.constant 0 : index
    %30 = vector.load %arg6[%c0_11, %c0_12, %c0_13] : memref<4x8x32xbf16, #tpu.memory_space<vmem>>, vector<1x8x32xbf16>
    %31 = vector.shape_cast %30 : vector<1x8x32xbf16> to vector<8x32xbf16>
    %cst_14 = arith.constant dense<0.000000e+00> : vector<8x8xf32>
    %32 = tpu.matmul %29, %31, %cst_14 {dimension_numbers = #tpu.dot_dimension_numbers<[1], [1], [0], [0], [0, 0, 1, 0], [], []>} : vector<8x32xbf16>, vector<8x32xbf16>, vector<8x8xf32> -> vector<8x8xf32>
    %c0_15 = arith.constant 0 : index
    %c0_16 = arith.constant 0 : index
    %c0_17 = arith.constant 0 : index
    %33 = vector.load %arg7[%c0_15, %c0_16, %c0_17] : memref<4x1x8xf32, #tpu.memory_space<vmem>>, vector<1x1x8xf32>
    %34 = vector.shape_cast %33 : vector<1x1x8xf32> to vector<1x8xf32>
    %35 = vector.broadcast %34 : vector<1x8xf32> to vector<8x8xf32>
    %36 = arith.addf %32, %35 : vector<8x8xf32>
    %cst_18 = arith.constant 0.353553385 : f32
    %37 = vector.broadcast %cst_18 : f32 to vector<8x8xf32>
    %38 = arith.mulf %36, %37 : vector<8x8xf32>
    %39 = arith.truncf %38 : vector<8x8xf32> to vector<8x8xbf16>
    %c0_19 = arith.constant 0 : index
    %c0_20 = arith.constant 0 : index
    %c0_21 = arith.constant 0 : index
    %40 = vector.load %arg23[%c0_19, %c0_20, %c0_21] : memref<4x8x8xbf16, #tpu.memory_space<vmem>>, vector<1x8x8xbf16>
    %41 = vector.shape_cast %40 : vector<1x8x8xbf16> to vector<8x8xbf16>
    %42 = vector.shape_cast %39 : vector<8x8xbf16> to vector<1x8x8xbf16>
    tpu.vector_store %arg23[%c0_19, %c0_20, %c0_21], %42 {strides = array<i32>} : memref<4x8x8xbf16, #tpu.memory_space<vmem>>, vector<1x8x8xbf16>,
    %c1 = arith.constant 1 : index
    %c0_22 = arith.constant 0 : index
    %c0_23 = arith.constant 0 : index
    %43 = vector.load %arg6[%c1, %c0_22, %c0_23] : memref<4x8x32xbf16, #tpu.memory_space<vmem>>, vector<1x8x32xbf16>
    %44 = vector.shape_cast %43 : vector<1x8x32xbf16> to vector<8x32xbf16>
    %cst_24 = arith.constant dense<0.000000e+00> : vector<8x8xf32>
    %45 = tpu.matmul %29, %44, %cst_24 {dimension_numbers = #tpu.dot_dimension_numbers<[1], [1], [0], [0], [0, 0, 1, 0], [], []>} : vector<8x32xbf16>, vector<8x32xbf16>, vector<8x8xf32> -> vector<8x8xf32>
    %c1_25 = arith.constant 1 : index
    %c0_26 = arith.constant 0 : index
    %c0_27 = arith.constant 0 : index
    %46 = vector.load %arg7[%c1_25, %c0_26, %c0_27] : memref<4x1x8xf32, #tpu.memory_space<vmem>>, vector<1x1x8xf32>
    %47 = vector.shape_cast %46 : vector<1x1x8xf32> to vector<1x8xf32>
    %48 = vector.broadcast %47 : vector<1x8xf32> to vector<8x8xf32>
    %49 = arith.addf %45, %48 : vector<8x8xf32>
    %cst_28 = arith.constant 0.353553385 : f32
    %50 = vector.broadcast %cst_28 : f32 to vector<8x8xf32>
    %51 = arith.mulf %49, %50 : vector<8x8xf32>
    %52 = arith.truncf %51 : vector<8x8xf32> to vector<8x8xbf16>
    %c1_29 = arith.constant 1 : index
    %c0_30 = arith.constant 0 : index
    %c0_31 = arith.constant 0 : index
    %53 = vector.load %arg23[%c1_29, %c0_30, %c0_31] : memref<4x8x8xbf16, #tpu.memory_space<vmem>>, vector<1x8x8xbf16>
    %54 = vector.shape_cast %53 : vector<1x8x8xbf16> to vector<8x8xbf16>
    %55 = vector.shape_cast %52 : vector<8x8xbf16> to vector<1x8x8xbf16>
    tpu.vector_store %arg23[%c1_29, %c0_30, %c0_31], %55 {strides = array<i32>} : memref<4x8x8xbf16, #tpu.memory_space<vmem>>, vector<1x8x8xbf16>,
    %c2 = arith.constant 2 : index
    %c0_32 = arith.constant 0 : index
    %c0_33 = arith.constant 0 : index
    %56 = vector.load %arg6[%c2, %c0_32, %c0_33] : memref<4x8x32xbf16, #tpu.memory_space<vmem>>, vector<1x8x32xbf16>
    %57 = vector.shape_cast %56 : vector<1x8x32xbf16> to vector<8x32xbf16>
    %cst_34 = arith.constant dense<0.000000e+00> : vector<8x8xf32>
    %58 = tpu.matmul %29, %57, %cst_34 {dimension_numbers = #tpu.dot_dimension_numbers<[1], [1], [0], [0], [0, 0, 1, 0], [], []>} : vector<8x32xbf16>, vector<8x32xbf16>, vector<8x8xf32> -> vector<8x8xf32>
    %c2_35 = arith.constant 2 : index
    %c0_36 = arith.constant 0 : index
    %c0_37 = arith.constant 0 : index
    %59 = vector.load %arg7[%c2_35, %c0_36, %c0_37] : memref<4x1x8xf32, #tpu.memory_space<vmem>>, vector<1x1x8xf32>
    %60 = vector.shape_cast %59 : vector<1x1x8xf32> to vector<1x8xf32>
    %61 = vector.broadcast %60 : vector<1x8xf32> to vector<8x8xf32>
    %62 = arith.addf %58, %61 : vector<8x8xf32>
    %cst_38 = arith.constant 0.353553385 : f32
    %63 = vector.broadcast %cst_38 : f32 to vector<8x8xf32>
    %64 = arith.mulf %62, %63 : vector<8x8xf32>
    %65 = arith.truncf %64 : vector<8x8xf32> to vector<8x8xbf16>
    %c2_39 = arith.constant 2 : index
    %c0_40 = arith.constant 0 : index
    %c0_41 = arith.constant 0 : index
    %66 = vector.load %arg23[%c2_39, %c0_40, %c0_41] : memref<4x8x8xbf16, #tpu.memory_space<vmem>>, vector<1x8x8xbf16>
    %67 = vector.shape_cast %66 : vector<1x8x8xbf16> to vector<8x8xbf16>
    %68 = vector.shape_cast %65 : vector<8x8xbf16> to vector<1x8x8xbf16>
    tpu.vector_store %arg23[%c2_39, %c0_40, %c0_41], %68 {strides = array<i32>} : memref<4x8x8xbf16, #tpu.memory_space<vmem>>, vector<1x8x8xbf16>,
    %c3 = arith.constant 3 : index
    %c0_42 = arith.constant 0 : index
    %c0_43 = arith.constant 0 : index
    %69 = vector.load %arg6[%c3, %c0_42, %c0_43] : memref<4x8x32xbf16, #tpu.memory_space<vmem>>, vector<1x8x32xbf16>
    %70 = vector.shape_cast %69 : vector<1x8x32xbf16> to vector<8x32xbf16>
    %cst_44 = arith.constant dense<0.000000e+00> : vector<8x8xf32>
    %71 = tpu.matmul %29, %70, %cst_44 {dimension_numbers = #tpu.dot_dimension_numbers<[1], [1], [0], [0], [0, 0, 1, 0], [], []>} : vector<8x32xbf16>, vector<8x32xbf16>, vector<8x8xf32> -> vector<8x8xf32>
    %c3_45 = arith.constant 3 : index
    %c0_46 = arith.constant 0 : index
    %c0_47 = arith.constant 0 : index
    %72 = vector.load %arg7[%c3_45, %c0_46, %c0_47] : memref<4x1x8xf32, #tpu.memory_space<vmem>>, vector<1x1x8xf32>
    %73 = vector.shape_cast %72 : vector<1x1x8xf32> to vector<1x8xf32>
    %74 = vector.broadcast %73 : vector<1x8xf32> to vector<8x8xf32>
    %75 = arith.addf %71, %74 : vector<8x8xf32>
    %cst_48 = arith.constant 0.353553385 : f32
    %76 = vector.broadcast %cst_48 : f32 to vector<8x8xf32>
    %77 = arith.mulf %75, %76 : vector<8x8xf32>
    %78 = arith.truncf %77 : vector<8x8xf32> to vector<8x8xbf16>
    %c3_49 = arith.constant 3 : index
    %c0_50 = arith.constant 0 : index
    %c0_51 = arith.constant 0 : index
    %79 = vector.load %arg23[%c3_49, %c0_50, %c0_51] : memref<4x8x8xbf16, #tpu.memory_space<vmem>>, vector<1x8x8xbf16>
    %80 = vector.shape_cast %79 : vector<1x8x8xbf16> to vector<8x8xbf16>
    %81 = vector.shape_cast %78 : vector<8x8xbf16> to vector<1x8x8xbf16>
    tpu.vector_store %arg23[%c3_49, %c0_50, %c0_51], %81 {strides = array<i32>} : memref<4x8x8xbf16, #tpu.memory_space<vmem>>, vector<1x8x8xbf16>,
    %c0_52 = arith.constant 0 : index
    %c0_53 = arith.constant 0 : index
    %c0_54 = arith.constant 0 : index
    %82 = vector.load %arg23[%c0_52, %c0_53, %c0_54] : memref<4x8x8xbf16, #tpu.memory_space<vmem>>, vector<4x8x8xbf16>
    %c0_55 = arith.constant 0 : index
    %c0_56 = arith.constant 0 : index
    %c0_57 = arith.constant 0 : index
    %83 = vector.load %arg21[%c0_55, %c0_56, %c0_57] : memref<4x16x8xbf16, #tpu.memory_space<vmem>>, vector<4x16x8xbf16>
    %c0_58 = arith.constant 0 : index
    %c0_59 = arith.constant 0 : index
    %c0_60 = arith.constant 0 : index
    %84 = vector.load %arg22[%c0_58, %c0_59, %c0_60] : memref<4x8x16xbf16, #tpu.memory_space<vmem>>, vector<4x8x16xbf16>
    %cst_61 = arith.constant dense<0.000000e+00> : vector<4x8x16xf32>
    %85 = tpu.matmul %82, %83, %cst_61 {dimension_numbers = #tpu.dot_dimension_numbers<[2], [2], [1], [1], [0, 0, 0, 1, 1, 1], [0], [0]>} : vector<4x8x8xbf16>, vector<4x16x8xbf16>, vector<4x8x16xf32> -> vector<4x8x16xf32>
    %cst_62 = arith.constant dense<0xFF800000> : vector<4x8xf32>
    %86 = vector.multi_reduction <maximumf>, %85, %cst_62 [2] : vector<4x8x16xf32> to vector<4x8xf32>
    %87 = vector.shape_cast %86 : vector<4x8xf32> to vector<4x8x1xf32>
    %88 = vector.broadcast %87 : vector<4x8x1xf32> to vector<4x8x16xf32>
    %89 = arith.subf %85, %88 : vector<4x8x16xf32>
    %90 = math.exp %89 : vector<4x8x16xf32>
    %cst_63 = arith.constant dense<0.000000e+00> : vector<4x8xf32>
    %91 = vector.multi_reduction <add>, %90, %cst_63 [2] : vector<4x8x16xf32> to vector<4x8xf32>
    %92 = vector.shape_cast %91 : vector<4x8xf32> to vector<4x8x1xf32>
    %93 = tpu.reciprocal %92 {approx = true} : vector<4x8x1xf32> -> vector<4x8x1xf32>
    %94 = vector.broadcast %93 : vector<4x8x1xf32> to vector<4x8x16xf32>
    %95 = arith.mulf %90, %94 : vector<4x8x16xf32>
    %96 = arith.truncf %95 : vector<4x8x16xf32> to vector<4x8x16xbf16>
    %cst_64 = arith.constant dense<0.000000e+00> : vector<4x8x8xf32>
    %97 = tpu.matmul %84, %96, %cst_64 {dimension_numbers = #tpu.dot_dimension_numbers<[2], [2], [1], [1], [0, 0, 0, 1, 1, 1], [0], [0]>} : vector<4x8x16xbf16>, vector<4x8x16xbf16>, vector<4x8x8xf32> -> vector<4x8x8xf32>
    %98 = arith.truncf %97 : vector<4x8x8xf32> to vector<4x8x8xbf16>
    %99 = vector.shape_cast %98 : vector<4x8x8xbf16> to vector<32x8xbf16>
    %c0_65 = arith.constant 0 : index
    %c0_66 = arith.constant 0 : index
    %100 = vector.load %arg12[%c0_65, %c0_66] : memref<32x32xbf16, #tpu.memory_space<vmem>>, vector<32x32xbf16>
    %cst_67 = arith.constant dense<0.000000e+00> : vector<8x32xf32>
    %101 = tpu.matmul %99, %100, %cst_67 {dimension_numbers = #tpu.dot_dimension_numbers<[0], [1], [1], [0], [0, 1, 1, 0], [], []>} : vector<32x8xbf16>, vector<32x32xbf16>, vector<8x32xf32> -> vector<8x32xf32>
    %c0_68 = arith.constant 0 : index
    %c0_69 = arith.constant 0 : index
    %102 = vector.load %arg13[%c0_68, %c0_69] : memref<1x32xf32, #tpu.memory_space<vmem>>, vector<1x32xf32>
    %103 = vector.broadcast %102 : vector<1x32xf32> to vector<8x32xf32>
    %104 = arith.addf %101, %103 : vector<8x32xf32>
    %105 = arith.addf %6, %104 : vector<8x32xf32>
    %c0_70 = arith.constant 0 : index
    %c0_71 = arith.constant 0 : index
    %106 = vector.load %arg14[%c0_70, %c0_71] : memref<1x32xf32, #tpu.memory_space<vmem>>, vector<1x32xf32>
    %c0_72 = arith.constant 0 : index
    %c0_73 = arith.constant 0 : index
    %107 = vector.load %arg15[%c0_72, %c0_73] : memref<1x32xf32, #tpu.memory_space<vmem>>, vector<1x32xf32>
    %cst_74 = arith.constant dense<0.000000e+00> : vector<8xf32>
    %108 = vector.multi_reduction <add>, %105, %cst_74 [1] : vector<8x32xf32> to vector<8xf32>
    %109 = vector.shape_cast %108 : vector<8xf32> to vector<8x1xf32>
    %cst_75 = arith.constant 3.200000e+01 : f32
    %110 = vector.broadcast %cst_75 : f32 to vector<8x1xf32>
    %111 = arith.divf %109, %110 : vector<8x1xf32>
    %112 = vector.broadcast %111 : vector<8x1xf32> to vector<8x32xf32>
    %113 = arith.subf %105, %112 : vector<8x32xf32>
    %114 = arith.mulf %113, %113 : vector<8x32xf32>
    %cst_76 = arith.constant dense<0.000000e+00> : vector<8xf32>
    %115 = vector.multi_reduction <add>, %114, %cst_76 [1] : vector<8x32xf32> to vector<8xf32>
    %116 = vector.shape_cast %115 : vector<8xf32> to vector<8x1xf32>
    %cst_77 = arith.constant 3.200000e+01 : f32
    %117 = vector.broadcast %cst_77 : f32 to vector<8x1xf32>
    %118 = arith.divf %116, %117 : vector<8x1xf32>
    %119 = vector.broadcast %111 : vector<8x1xf32> to vector<8x32xf32>
    %120 = arith.subf %105, %119 : vector<8x32xf32>
    %cst_78 = arith.constant 9.99999974E-6 : f32
    %121 = vector.broadcast %cst_78 : f32 to vector<8x1xf32>
    %122 = arith.addf %118, %121 : vector<8x1xf32>
    %123 = math.rsqrt %122 : vector<8x1xf32>
    %124 = vector.broadcast %123 : vector<8x1xf32> to vector<8x32xf32>
    %125 = arith.mulf %120, %124 : vector<8x32xf32>
    %126 = vector.broadcast %106 : vector<1x32xf32> to vector<8x32xf32>
    %127 = arith.mulf %125, %126 : vector<8x32xf32>
    %128 = vector.broadcast %107 : vector<1x32xf32> to vector<8x32xf32>
    %129 = arith.addf %127, %128 : vector<8x32xf32>
    %130 = arith.truncf %129 : vector<8x32xf32> to vector<8x32xbf16>
    %c0_79 = arith.constant 0 : index
    %c0_80 = arith.constant 0 : index
    %131 = vector.load %arg16[%c0_79, %c0_80] : memref<128x32xbf16, #tpu.memory_space<vmem>>, vector<128x32xbf16>
    %c0_81 = arith.constant 0 : index
    %c0_82 = arith.constant 0 : index
    %132 = vector.load %arg17[%c0_81, %c0_82] : memref<1x128xf32, #tpu.memory_space<vmem>>, vector<1x128xf32>
    %cst_83 = arith.constant dense<0.000000e+00> : vector<8x128xf32>
    %133 = tpu.matmul %130, %131, %cst_83 {dimension_numbers = #tpu.dot_dimension_numbers<[1], [1], [0], [0], [0, 0, 1, 0], [], []>} : vector<8x32xbf16>, vector<128x32xbf16>, vector<8x128xf32> -> vector<8x128xf32>
    %134 = vector.broadcast %132 : vector<1x128xf32> to vector<8x128xf32>
    %135 = arith.addf %133, %134 : vector<8x128xf32>
    %cst_84 = arith.constant 5.000000e-01 : f32
    %136 = vector.broadcast %cst_84 : f32 to vector<8x128xf32>
    %137 = arith.mulf %136, %135 : vector<8x128xf32>
    %cst_85 = arith.constant 0.707106769 : f32
    %138 = vector.broadcast %cst_85 : f32 to vector<8x128xf32>
    %139 = arith.mulf %135, %138 : vector<8x128xf32>
    %140 = math.erf %139 : vector<8x128xf32>
    %cst_86 = arith.constant 1.000000e+00 : f32
    %141 = vector.broadcast %cst_86 : f32 to vector<8x128xf32>
    %142 = arith.addf %141, %140 : vector<8x128xf32>
    %143 = arith.mulf %137, %142 : vector<8x128xf32>
    %144 = arith.truncf %143 : vector<8x128xf32> to vector<8x128xbf16>
    %c0_87 = arith.constant 0 : index
    %c0_88 = arith.constant 0 : index
    %145 = vector.load %arg18[%c0_87, %c0_88] : memref<32x128xbf16, #tpu.memory_space<vmem>>, vector<32x128xbf16>
    %c0_89 = arith.constant 0 : index
    %c0_90 = arith.constant 0 : index
    %146 = vector.load %arg19[%c0_89, %c0_90] : memref<1x32xf32, #tpu.memory_space<vmem>>, vector<1x32xf32>
    %cst_91 = arith.constant dense<0.000000e+00> : vector<8x32xf32>
    %147 = tpu.matmul %144, %145, %cst_91 {dimension_numbers = #tpu.dot_dimension_numbers<[1], [1], [0], [0], [0, 0, 1, 0], [], []>} : vector<8x128xbf16>, vector<32x128xbf16>, vector<8x32xf32> -> vector<8x32xf32>
    %148 = vector.broadcast %146 : vector<1x32xf32> to vector<8x32xf32>
    %149 = arith.addf %147, %148 : vector<8x32xf32>
    %150 = arith.addf %105, %149 : vector<8x32xf32>
    %c0_92 = arith.constant 0 : index
    %c0_93 = arith.constant 0 : index
    %c0_94 = arith.constant 0 : index
    %151 = vector.load %arg20[%c0_92, %c0_93, %c0_94] : memref<1x8x32xf32, #tpu.memory_space<vmem>>, vector<1x8x32xf32>
    %152 = vector.shape_cast %151 : vector<1x8x32xf32> to vector<8x32xf32>
    %153 = vector.shape_cast %150 : vector<8x32xf32> to vector<1x8x32xf32>
    tpu.vector_store %arg20[%c0_92, %c0_93, %c0_94], %153 {strides = array<i32>} : memref<1x8x32xf32, #tpu.memory_space<vmem>>, vector<1x8x32xf32>,
    return
  }
  func.func @transform_0(%arg0: i32, %arg1: i32) -> (i32, i32, i32) {
    %c0_i32 = arith.constant 0 : i32
    %c0_i32_0 = arith.constant 0 : i32
    return %arg0, %arg1, %c0_i32 : i32, i32, i32
  }
  func.func @transform_1(%arg0: i32, %arg1: i32) -> (i32, i32, i32) {
    %c0_i32 = arith.constant 0 : i32
    %c0_i32_0 = arith.constant 0 : i32
    %c0_i32_1 = arith.constant 0 : i32
    return %arg0, %c0_i32, %c0_i32_0 : i32, i32, i32
  }
  func.func @transform_2(%arg0: i32, %arg1: i32) -> (i32, i32) {
    %c0_i32 = arith.constant 0 : i32
    %c0_i32_0 = arith.constant 0 : i32
    %c0_i32_1 = arith.constant 0 : i32
    return %c0_i32, %c0_i32_0 : i32, i32
  }
  func.func @transform_3(%arg0: i32, %arg1: i32) -> (i32, i32) {
    %c0_i32 = arith.constant 0 : i32
    %c0_i32_0 = arith.constant 0 : i32
    %c0_i32_1 = arith.constant 0 : i32
    return %c0_i32, %c0_i32_0 : i32, i32
  }
  func.func @transform_4(%arg0: i32, %arg1: i32) -> (i32, i32, i32) {
    %c0_i32 = arith.constant 0 : i32
    %c0_i32_0 = arith.constant 0 : i32
    %c0_i32_1 = arith.constant 0 : i32
    %c0_i32_2 = arith.constant 0 : i32
    return %c0_i32, %c0_i32_0, %c0_i32_1 : i32, i32, i32
  }
  func.func @transform_5(%arg0: i32, %arg1: i32) -> (i32, i32, i32) {
    %c0_i32 = arith.constant 0 : i32
    %c0_i32_0 = arith.constant 0 : i32
    %c0_i32_1 = arith.constant 0 : i32
    %c0_i32_2 = arith.constant 0 : i32
    return %c0_i32, %c0_i32_0, %c0_i32_1 : i32, i32, i32
  }
  func.func @transform_6(%arg0: i32, %arg1: i32) -> (i32, i32, i32) {
    %c0_i32 = arith.constant 0 : i32
    %c0_i32_0 = arith.constant 0 : i32
    %c0_i32_1 = arith.constant 0 : i32
    %c0_i32_2 = arith.constant 0 : i32
    return %c0_i32, %c0_i32_0, %c0_i32_1 : i32, i32, i32
  }
  func.func @transform_7(%arg0: i32, %arg1: i32) -> (i32, i32, i32) {
    %c0_i32 = arith.constant 0 : i32
    %c0_i32_0 = arith.constant 0 : i32
    %c0_i32_1 = arith.constant 0 : i32
    %c0_i32_2 = arith.constant 0 : i32
    return %c0_i32, %c0_i32_0, %c0_i32_1 : i32, i32, i32
  }
  func.func @transform_8(%arg0: i32, %arg1: i32) -> (i32, i32, i32) {
    %c0_i32 = arith.constant 0 : i32
    %c0_i32_0 = arith.constant 0 : i32
    %c0_i32_1 = arith.constant 0 : i32
    %c0_i32_2 = arith.constant 0 : i32
    return %c0_i32, %c0_i32_0, %c0_i32_1 : i32, i32, i32
  }
  func.func @transform_9(%arg0: i32, %arg1: i32) -> (i32, i32, i32) {
    %c0_i32 = arith.constant 0 : i32
    %c0_i32_0 = arith.constant 0 : i32
    %c0_i32_1 = arith.constant 0 : i32
    %c0_i32_2 = arith.constant 0 : i32
    return %c0_i32, %c0_i32_0, %c0_i32_1 : i32, i32, i32
  }
  func.func @transform_10(%arg0: i32, %arg1: i32) -> (i32, i32) {
    %c0_i32 = arith.constant 0 : i32
    %c0_i32_0 = arith.constant 0 : i32
    %c0_i32_1 = arith.constant 0 : i32
    return %c0_i32, %c0_i32_0 : i32, i32
  }
  func.func @transform_11(%arg0: i32, %arg1: i32) -> (i32, i32) {
    %c0_i32 = arith.constant 0 : i32
    %c0_i32_0 = arith.constant 0 : i32
    %c0_i32_1 = arith.constant 0 : i32
    return %c0_i32, %c0_i32_0 : i32, i32
  }
  func.func @transform_12(%arg0: i32, %arg1: i32) -> (i32, i32) {
    %c0_i32 = arith.constant 0 : i32
    %c0_i32_0 = arith.constant 0 : i32
    %c0_i32_1 = arith.constant 0 : i32
    return %c0_i32, %c0_i32_0 : i32, i32
  }
  func.func @transform_13(%arg0: i32, %arg1: i32) -> (i32, i32) {
    %c0_i32 = arith.constant 0 : i32
    %c0_i32_0 = arith.constant 0 : i32
    %c0_i32_1 = arith.constant 0 : i32
    return %c0_i32, %c0_i32_0 : i32, i32
  }
  func.func @transform_14(%arg0: i32, %arg1: i32) -> (i32, i32) {
    %c0_i32 = arith.constant 0 : i32
    %c0_i32_0 = arith.constant 0 : i32
    %c0_i32_1 = arith.constant 0 : i32
    return %c0_i32, %c0_i32_0 : i32, i32
  }
  func.func @transform_15(%arg0: i32, %arg1: i32) -> (i32, i32) {
    %c0_i32 = arith.constant 0 : i32
    %c0_i32_0 = arith.constant 0 : i32
    %c0_i32_1 = arith.constant 0 : i32
    return %c0_i32, %c0_i32_0 : i32, i32
  }
  func.func @transform_16(%arg0: i32, %arg1: i32) -> (i32, i32) {
    %c0_i32 = arith.constant 0 : i32
    %c0_i32_0 = arith.constant 0 : i32
    %c0_i32_1 = arith.constant 0 : i32
    return %c0_i32, %c0_i32_0 : i32, i32
  }
  func.func @transform_17(%arg0: i32, %arg1: i32) -> (i32, i32) {
    %c0_i32 = arith.constant 0 : i32
    %c0_i32_0 = arith.constant 0 : i32
    %c0_i32_1 = arith.constant 0 : i32
    return %c0_i32, %c0_i32_0 : i32, i32
  }
  func.func @transform_18(%arg0: i32, %arg1: i32) -> (i32, i32, i32) {
    %c0_i32 = arith.constant 0 : i32
    %c0_i32_0 = arith.constant 0 : i32
    return %arg0, %arg1, %c0_i32 : i32, i32, i32
  }
}

</mosaic_0001>

<llo_original>
// kernel: tpu_custom_call.1
$region0: #{tpu_custom_call.1}
  #allocation0 [shape = 'u32[]', space=smem, size = 0x4, offset = 0x4, fixed_abs, tag = 'smem constant byte address 0x4 - core index']
  #allocation1 [shape = 'u32[144,128]{1,0:T(1,128)}', space=vmem, size = 0x12000, scoped, tag = 'internal scratch']
  #allocation2 [shape = 'bf16[4,16,8]{2,1,0:T(8,128)(2,1)}', space=vmem, size = 0x4000, scoped, tag = 'scratch operand']
  #allocation3 [shape = 'bf16[4,8,16]{2,1,0:T(8,128)(2,1)}', space=vmem, size = 0x2000, scoped, tag = 'scratch operand']
  #allocation4 [shape = 'bf16[4,8,8]{2,1,0:T(8,128)(2,1)}', space=vmem, size = 0x2000, scoped, tag = 'scratch operand']
  %s0 = inlined_call_operand.vmem [shape: f32[2,16,32], index: 0, kind: input, shape index: {}]
  %s1 = inlined_call_operand.vmem [shape: f32[2,16,32], index: 1, kind: input, shape index: {}]
  %s2 = inlined_call_operand.hbm [shape: f32[1,32], index: 2, kind: input, shape index: {}]
  %s3 = inlined_call_operand.hbm [shape: f32[1,32], index: 3, kind: input, shape index: {}]
  %s4 = inlined_call_operand.vmem [shape: bf16[4,8,32], index: 4, kind: input, shape index: {}]
  %s5 = inlined_call_operand.hbm [shape: f32[4,1,8], index: 5, kind: input, shape index: {}]
  %s6 = inlined_call_operand.vmem [shape: bf16[4,8,32], index: 6, kind: input, shape index: {}]
  %s7 = inlined_call_operand.hbm [shape: f32[4,1,8], index: 7, kind: input, shape index: {}]
  %s8 = inlined_call_operand.vmem [shape: bf16[4,8,32], index: 8, kind: input, shape index: {}]
  %s9 = inlined_call_operand.vmem [shape: f32[4,8,1], index: 9, kind: input, shape index: {}]
  %s10 = inlined_call_operand.hbm [shape: bf16[32,32], index: 10, kind: input, shape index: {}]
  %s11 = inlined_call_operand.vmem [shape: f32[1,32], index: 11, kind: input, shape index: {}]
  %s12 = inlined_call_operand.hbm [shape: f32[1,32], index: 12, kind: input, shape index: {}]
  %s13 = inlined_call_operand.hbm [shape: f32[1,32], index: 13, kind: input, shape index: {}]
  %s14 = inlined_call_operand.vmem [shape: bf16[128,32], index: 14, kind: input, shape index: {}]
  %s15 = inlined_call_operand.hbm [shape: f32[1,128], index: 15, kind: input, shape index: {}]
  %s16 = inlined_call_operand.vmem [shape: bf16[32,128], index: 16, kind: input, shape index: {}]
  %s17 = inlined_call_operand.vmem [shape: f32[1,32], index: 17, kind: input, shape index: {}]
  %s18 = inlined_call_operand.hbm [shape: f32[2,16,32], index: 18, kind: output, shape index: {}]
  %s19 = sld [smem:[#allocation0]]
  $region141: #{tpu_custom_call.1} parent=0
    _
  %s21 = ssub.s32 1, %s19
  %s22 = scalar_select 0, %s21, %s19
  $region1: #{tpu_custom_call.1} parent=0
    #allocation5 [shape = 'u8[512]{0}', space=vmem, size = 0x400, scoped, tag = 'input window, operand 2, single buffered']
    #allocation6 [shape = 's32[2]{0}', space=sflag, size = 0x8, scoped, tag = 'scoped memory for tpu_custom_call.1']
    #allocation7 [shape = 's32[2]{0}', space=sflag, size = 0x8, scoped, tag = 'scoped memory for tpu_custom_call.1']
    #allocation8 [shape = 'u8[512]{0}', space=vmem, size = 0x400, scoped, tag = 'input window, operand 3, single buffered']
    #allocation9 [shape = 's32[1]{0}', space=sflag, size = 0x4, scoped, tag = 'scoped memory for tpu_custom_call.1']
    #allocation10 [shape = 'u8[2048]{0}', space=vmem, size = 0x800, scoped, tag = 'input window, operand 5, single buffered']
    #allocation11 [shape = 'u8[2048]{0}', space=vmem, size = 0x800, scoped, tag = 'input window, operand 7, single buffered']
    #allocation12 [shape = 's32[1]{0}', space=sflag, size = 0x4, scoped, tag = 'scoped memory for tpu_custom_call.1']
    #allocation13 [shape = 'u8[8192]{0}', space=vmem, size = 0x2000, scoped, tag = 'input window, operand 10, single buffered']
    #allocation14 [shape = 'u8[512]{0}', space=vmem, size = 0x400, scoped, tag = 'input window, operand 12, single buffered']
    #allocation15 [shape = 's32[1]{0}', space=sflag, size = 0x4, scoped, tag = 'scoped memory for tpu_custom_call.1']
    #allocation16 [shape = 'u8[512]{0}', space=vmem, size = 0x400, scoped, tag = 'input window, operand 13, single buffered']
    #allocation17 [shape = 'u8[512]{0}', space=vmem, size = 0x400, scoped, tag = 'input window, operand 15, single buffered']
    #allocation18 [shape = 's32[1]{0}', space=sflag, size = 0x4, scoped, tag = 'scoped memory for tpu_custom_call.1']
    #allocation19 [shape = 'u8[8192]{0}', space=vmem, size = 0x2000, scoped, tag = 'output window, operand 0']
    %23 = vsyncpa [#allocation6], 0
    %24 = vsyncpa [#allocation9], 0
    %25 = vsyncpa [#allocation12], 0
    %26 = vsyncpa [#allocation15], 0
    %27 = vsyncpa [#allocation18], 0
    %28 = vsyncpa [#allocation7], 0
    %s29 = scalar_lea.sflag [#allocation7], 1
    %30 = vsyncpa %s29, 0
    loop: start=0, step=1, limit=6
    $region2: #{tpu_custom_call.1} parent=1 // loop_pre_header
      _
    $region3: #{tpu_custom_call.1} parent=1 // loop_header
      %s32 = sphi 0, %s36
      %p33 = scmp.ge.s32.totalorder %s32, 6
      %s39 = sphi 0, %s51
      %s40 = sphi 0, %s47
      %s41 = sphi 0, %s39
      %s42 = sphi 0, %s40
      %s43 = sphi 0, %s41
      %s44 = sphi 0, %s42
      %s56 = sphi 0, %s58
      %s59 = sphi 0, %s56
      %s60 = sphi 0, %s59
      %s76 = sphi 0, %s60
      %s82 = sphi 0, %s84
      %s85 = sphi 0, %s82
      %s86 = sphi 0, %s85
      %s102 = sphi 0, %s86
      %s106 = sphi 0, %s106
      %s108 = sphi 0, %s106
      %s109 = sphi 0, %s108
      %s123 = sphi 0, %s109
      %s127 = sphi 0, %s127
      %s129 = sphi 0, %s127
      %s130 = sphi 0, %s129
      %s144 = sphi 0, %s130
      %s148 = sphi 0, %s148
      %s150 = sphi 0, %s148
      %s151 = sphi 0, %s150
      %s165 = sphi 0, %s151
      %s169 = sphi 0, %s169
      %s171 = sphi 0, %s169
      %s172 = sphi 0, %s171
      %s186 = sphi 0, %s172
      %s190 = sphi 0, %s190
      %s192 = sphi 0, %s190
      %s193 = sphi 0, %s192
      %s207 = sphi 0, %s193
      %s211 = sphi 0, %s211
      %s213 = sphi 0, %s211
      %s214 = sphi 0, %s213
      %s228 = sphi 0, %s214
      %s232 = sphi 0, %s232
      %s234 = sphi 0, %s232
      %s235 = sphi 0, %s234
      %s249 = sphi 0, %s235
      %s253 = sphi 0, %s253
      %s255 = sphi 0, %s253
      %s256 = sphi 0, %s255
      %s270 = sphi 0, %s256
      %s274 = sphi 0, %s274
      %s276 = sphi 0, %s274
      %s277 = sphi 0, %s276
      %s291 = sphi 0, %s277
      %s295 = sphi 0, %s295
      %s297 = sphi 0, %s295
      %s298 = sphi 0, %s297
      %s312 = sphi 0, %s298
      %s316 = sphi 0, %s316
      %s318 = sphi 0, %s316
      %s319 = sphi 0, %s318
      %s333 = sphi 0, %s319
      %s337 = sphi 0, %s337
      %s339 = sphi 0, %s337
      %s340 = sphi 0, %s339
      %s354 = sphi 0, %s340
      %s358 = sphi 0, %s358
      %s360 = sphi 0, %s358
      %s361 = sphi 0, %s360
      %s375 = sphi 0, %s361
      %s379 = sphi 0, %s379
      %s381 = sphi 0, %s379
      %s382 = sphi 0, %s381
      %s396 = sphi 0, %s382
      %s400 = sphi 0, %s400
      %s402 = sphi 0, %s400
      %s403 = sphi 0, %s402
      %s417 = sphi 0, %s403
      %s421 = sphi 0, %s421
      %s423 = sphi 0, %s421
      %s424 = sphi 0, %s423
      %s438 = sphi 0, %s424
      %s446 = sphi 0, %s448
      %s449 = sphi 0, %s446
      %s450 = sphi 0, %s449
      %s466 = sphi 0, %s450
    $region4: #{tpu_custom_call.1} parent=1 // loop_header_branch
      %35 = sbr.rel (%p33) target = $region8
    $region5: #{tpu_custom_call.1} parent=1 // loop_body
      %s37 = ssub.s32 %s32, 1
      %s38 = ssub.s32 %s32, 2
      %s45 = sadd.s32 1, %s40
      %p46 = scmp.ge.s32.totalorder %s45, 2
      %s47 = scalar_select %p46, 0, %s45
      %s48 = sadd.s32 1, %s39
      %s49 = scalar_select %p46, %s48, %s39
      %p50 = scmp.ge.s32.totalorder %s49, 2
      %s51 = scalar_select %p50, 0, %s49
      %s52 = ssub.s32 %s39, %s51
      %s53 = ssub.s32 %s40, %s47
      %s54 = sor.u32 %s52, %s53
      %p55 = scmp.eq.s32.totalorder %s54, 0
      %s57 = sadd.s32 %s56, 1
      %s58 = scalar_select %p55, %s56, %s57
      %p61 = pneg %p55
      %p62 = scmp.eq.s32.totalorder %s32, 3
      %p63 = por %p61, %p62
      %p64 = scmp.ne.s32.totalorder %s56, %s59
      %p65 = scmp.eq.s32.totalorder %s32, 0
      %p66 = por %p64, %p65
      %p67 = scmp.ne.s32.totalorder %s56, %s59
      %p68 = scmp.eq.s32.totalorder %s37, 3
      %p69 = por %p67, %p68
      %p70 = scmp.ne.s32.totalorder %s59, %s60
      %p71 = scmp.eq.s32.totalorder %s37, 0
      %p72 = por %p70, %p71
      %p73 = scmp.ne.s32.totalorder %s59, %s60
      %p74 = scmp.eq.s32.totalorder %s38, 3
      %p75 = por %p73, %p74
      %p77 = scmp.ne.s32.totalorder %s60, %s76
      %p78 = scmp.eq.s32.totalorder %s38, 0
      %p79 = por %p77, %p78
      %s80 = ssub.s32 %s39, %s51
      %p81 = scmp.eq.s32.totalorder %s80, 0
      %s83 = sadd.s32 %s82, 1
      %s84 = scalar_select %p81, %s82, %s83
      %p87 = pneg %p81
      %p88 = scmp.eq.s32.totalorder %s32, 3
      %p89 = por %p87, %p88
      %p90 = scmp.ne.s32.totalorder %s82, %s85
      %p91 = scmp.eq.s32.totalorder %s32, 0
      %p92 = por %p90, %p91
      %p93 = scmp.ne.s32.totalorder %s82, %s85
      %p94 = scmp.eq.s32.totalorder %s37, 3
      %p95 = por %p93, %p94
      %p96 = scmp.ne.s32.totalorder %s85, %s86
      %p97 = scmp.eq.s32.totalorder %s37, 0
      %p98 = por %p96, %p97
      %p99 = scmp.ne.s32.totalorder %s85, %s86
      %p100 = scmp.eq.s32.totalorder %s38, 3
      %p101 = por %p99, %p100
      %p103 = scmp.ne.s32.totalorder %s86, %s102
      %p104 = scmp.eq.s32.totalorder %s38, 0
      %p105 = por %p103, %p104
      %s107 = sadd.s32 %s106, 1
      %p110 = scmp.eq.s32.totalorder %s32, 3
      %p111 = scmp.ne.s32.totalorder %s106, %s108
      %p112 = scmp.eq.s32.totalorder %s32, 0
      %p113 = por %p111, %p112
      %p114 = scmp.ne.s32.totalorder %s106, %s108
      %p115 = scmp.eq.s32.totalorder %s37, 3
      %p116 = por %p114, %p115
      %p117 = scmp.ne.s32.totalorder %s108, %s109
      %p118 = scmp.eq.s32.totalorder %s37, 0
      %p119 = por %p117, %p118
      %p120 = scmp.ne.s32.totalorder %s108, %s109
      %p121 = scmp.eq.s32.totalorder %s38, 3
      %p122 = por %p120, %p121
      %p124 = scmp.ne.s32.totalorder %s109, %s123
      %p125 = scmp.eq.s32.totalorder %s38, 0
      %p126 = por %p124, %p125
      %s128 = sadd.s32 %s127, 1
      %p131 = scmp.eq.s32.totalorder %s32, 3
      %p132 = scmp.ne.s32.totalorder %s127, %s129
      %p133 = scmp.eq.s32.totalorder %s32, 0
      %p134 = por %p132, %p133
      %p135 = scmp.ne.s32.totalorder %s127, %s129
      %p136 = scmp.eq.s32.totalorder %s37, 3
      %p137 = por %p135, %p136
      %p138 = scmp.ne.s32.totalorder %s129, %s130
      %p139 = scmp.eq.s32.totalorder %s37, 0
      %p140 = por %p138, %p139
      %p141 = scmp.ne.s32.totalorder %s129, %s130
      %p142 = scmp.eq.s32.totalorder %s38, 3
      %p143 = por %p141, %p142
      %p145 = scmp.ne.s32.totalorder %s130, %s144
      %p146 = scmp.eq.s32.totalorder %s38, 0
      %p147 = por %p145, %p146
      %s149 = sadd.s32 %s148, 1
      %p152 = scmp.eq.s32.totalorder %s32, 3
      %p153 = scmp.ne.s32.totalorder %s148, %s150
      %p154 = scmp.eq.s32.totalorder %s32, 0
      %p155 = por %p153, %p154
      %p156 = scmp.ne.s32.totalorder %s148, %s150
      %p157 = scmp.eq.s32.totalorder %s37, 3
      %p158 = por %p156, %p157
      %p159 = scmp.ne.s32.totalorder %s150, %s151
      %p160 = scmp.eq.s32.totalorder %s37, 0
      %p161 = por %p159, %p160
      %p162 = scmp.ne.s32.totalorder %s150, %s151
      %p163 = scmp.eq.s32.totalorder %s38, 3
      %p164 = por %p162, %p163
      %p166 = scmp.ne.s32.totalorder %s151, %s165
      %p167 = scmp.eq.s32.totalorder %s38, 0
      %p168 = por %p166, %p167
      %s170 = sadd.s32 %s169, 1
      %p173 = scmp.eq.s32.totalorder %s32, 3
      %p174 = scmp.ne.s32.totalorder %s169, %s171
      %p175 = scmp.eq.s32.totalorder %s32, 0
      %p176 = por %p174, %p175
      %p177 = scmp.ne.s32.totalorder %s169, %s171
      %p178 = scmp.eq.s32.totalorder %s37, 3
      %p179 = por %p177, %p178
      %p180 = scmp.ne.s32.totalorder %s171, %s172
      %p181 = scmp.eq.s32.totalorder %s37, 0
      %p182 = por %p180, %p181
      %p183 = scmp.ne.s32.totalorder %s171, %s172
      %p184 = scmp.eq.s32.totalorder %s38, 3
      %p185 = por %p183, %p184
      %p187 = scmp.ne.s32.totalorder %s172, %s186
      %p188 = scmp.eq.s32.totalorder %s38, 0
      %p189 = por %p187, %p188
      %s191 = sadd.s32 %s190, 1
      %p194 = scmp.eq.s32.totalorder %s32, 3
      %p195 = scmp.ne.s32.totalorder %s190, %s192
      %p196 = scmp.eq.s32.totalorder %s32, 0
      %p197 = por %p195, %p196
      %p198 = scmp.ne.s32.totalorder %s190, %s192
      %p199 = scmp.eq.s32.totalorder %s37, 3
      %p200 = por %p198, %p199
      %p201 = scmp.ne.s32.totalorder %s192, %s193
      %p202 = scmp.eq.s32.totalorder %s37, 0
      %p203 = por %p201, %p202
      %p204 = scmp.ne.s32.totalorder %s192, %s193
      %p205 = scmp.eq.s32.totalorder %s38, 3
      %p206 = por %p204, %p205
      %p208 = scmp.ne.s32.totalorder %s193, %s207
      %p209 = scmp.eq.s32.totalorder %s38, 0
      %p210 = por %p208, %p209
      %s212 = sadd.s32 %s211, 1
      %p215 = scmp.eq.s32.totalorder %s32, 3
      %p216 = scmp.ne.s32.totalorder %s211, %s213
      %p217 = scmp.eq.s32.totalorder %s32, 0
      %p218 = por %p216, %p217
      %p219 = scmp.ne.s32.totalorder %s211, %s213
      %p220 = scmp.eq.s32.totalorder %s37, 3
      %p221 = por %p219, %p220
      %p222 = scmp.ne.s32.totalorder %s213, %s214
      %p223 = scmp.eq.s32.totalorder %s37, 0
      %p224 = por %p222, %p223
      %p225 = scmp.ne.s32.totalorder %s213, %s214
      %p226 = scmp.eq.s32.totalorder %s38, 3
      %p227 = por %p225, %p226
      %p229 = scmp.ne.s32.totalorder %s214, %s228
      %p230 = scmp.eq.s32.totalorder %s38, 0
      %p231 = por %p229, %p230
      %s233 = sadd.s32 %s232, 1
      %p236 = scmp.eq.s32.totalorder %s32, 3
      %p237 = scmp.ne.s32.totalorder %s232, %s234
      %p238 = scmp.eq.s32.totalorder %s32, 0
      %p239 = por %p237, %p238
      %p240 = scmp.ne.s32.totalorder %s232, %s234
      %p241 = scmp.eq.s32.totalorder %s37, 3
      %p242 = por %p240, %p241
      %p243 = scmp.ne.s32.totalorder %s234, %s235
      %p244 = scmp.eq.s32.totalorder %s37, 0
      %p245 = por %p243, %p244
      %p246 = scmp.ne.s32.totalorder %s234, %s235
      %p247 = scmp.eq.s32.totalorder %s38, 3
      %p248 = por %p246, %p247
      %p250 = scmp.ne.s32.totalorder %s235, %s249
      %p251 = scmp.eq.s32.totalorder %s38, 0
      %p252 = por %p250, %p251
      %s254 = sadd.s32 %s253, 1
      %p257 = scmp.eq.s32.totalorder %s32, 3
      %p258 = scmp.ne.s32.totalorder %s253, %s255
      %p259 = scmp.eq.s32.totalorder %s32, 0
      %p260 = por %p258, %p259
      %p261 = scmp.ne.s32.totalorder %s253, %s255
      %p262 = scmp.eq.s32.totalorder %s37, 3
      %p263 = por %p261, %p262
      %p264 = scmp.ne.s32.totalorder %s255, %s256
      %p265 = scmp.eq.s32.totalorder %s37, 0
      %p266 = por %p264, %p265
      %p267 = scmp.ne.s32.totalorder %s255, %s256
      %p268 = scmp.eq.s32.totalorder %s38, 3
      %p269 = por %p267, %p268
      %p271 = scmp.ne.s32.totalorder %s256, %s270
      %p272 = scmp.eq.s32.totalorder %s38, 0
      %p273 = por %p271, %p272
      %s275 = sadd.s32 %s274, 1
      %p278 = scmp.eq.s32.totalorder %s32, 3
      %p279 = scmp.ne.s32.totalorder %s274, %s276
      %p280 = scmp.eq.s32.totalorder %s32, 0
      %p281 = por %p279, %p280
      %p282 = scmp.ne.s32.totalorder %s274, %s276
      %p283 = scmp.eq.s32.totalorder %s37, 3
      %p284 = por %p282, %p283
      %p285 = scmp.ne.s32.totalorder %s276, %s277
      %p286 = scmp.eq.s32.totalorder %s37, 0
      %p287 = por %p285, %p286
      %p288 = scmp.ne.s32.totalorder %s276, %s277
      %p289 = scmp.eq.s32.totalorder %s38, 3
      %p290 = por %p288, %p289
      %p292 = scmp.ne.s32.totalorder %s277, %s291
      %p293 = scmp.eq.s32.totalorder %s38, 0
      %p294 = por %p292, %p293
      %s296 = sadd.s32 %s295, 1
      %p299 = scmp.eq.s32.totalorder %s32, 3
      %p300 = scmp.ne.s32.totalorder %s295, %s297
      %p301 = scmp.eq.s32.totalorder %s32, 0
      %p302 = por %p300, %p301
      %p303 = scmp.ne.s32.totalorder %s295, %s297
      %p304 = scmp.eq.s32.totalorder %s37, 3
      %p305 = por %p303, %p304
      %p306 = scmp.ne.s32.totalorder %s297, %s298
      %p307 = scmp.eq.s32.totalorder %s37, 0
      %p308 = por %p306, %p307
      %p309 = scmp.ne.s32.totalorder %s297, %s298
      %p310 = scmp.eq.s32.totalorder %s38, 3
      %p311 = por %p309, %p310
      %p313 = scmp.ne.s32.totalorder %s298, %s312
      %p314 = scmp.eq.s32.totalorder %s38, 0
      %p315 = por %p313, %p314
      %s317 = sadd.s32 %s316, 1
      %p320 = scmp.eq.s32.totalorder %s32, 3
      %p321 = scmp.ne.s32.totalorder %s316, %s318
      %p322 = scmp.eq.s32.totalorder %s32, 0
      %p323 = por %p321, %p322
      %p324 = scmp.ne.s32.totalorder %s316, %s318
      %p325 = scmp.eq.s32.totalorder %s37, 3
      %p326 = por %p324, %p325
      %p327 = scmp.ne.s32.totalorder %s318, %s319
      %p328 = scmp.eq.s32.totalorder %s37, 0
      %p329 = por %p327, %p328
      %p330 = scmp.ne.s32.totalorder %s318, %s319
      %p331 = scmp.eq.s32.totalorder %s38, 3
      %p332 = por %p330, %p331
      %p334 = scmp.ne.s32.totalorder %s319, %s333
      %p335 = scmp.eq.s32.totalorder %s38, 0
      %p336 = por %p334, %p335
      %s338 = sadd.s32 %s337, 1
      %p341 = scmp.eq.s32.totalorder %s32, 3
      %p342 = scmp.ne.s32.totalorder %s337, %s339
      %p343 = scmp.eq.s32.totalorder %s32, 0
      %p344 = por %p342, %p343
      %p345 = scmp.ne.s32.totalorder %s337, %s339
      %p346 = scmp.eq.s32.totalorder %s37, 3
      %p347 = por %p345, %p346
      %p348 = scmp.ne.s32.totalorder %s339, %s340
      %p349 = scmp.eq.s32.totalorder %s37, 0
      %p350 = por %p348, %p349
      %p351 = scmp.ne.s32.totalorder %s339, %s340
      %p352 = scmp.eq.s32.totalorder %s38, 3
      %p353 = por %p351, %p352
      %p355 = scmp.ne.s32.totalorder %s340, %s354
      %p356 = scmp.eq.s32.totalorder %s38, 0
      %p357 = por %p355, %p356
      %s359 = sadd.s32 %s358, 1
      %p362 = scmp.eq.s32.totalorder %s32, 3
      %p363 = scmp.ne.s32.totalorder %s358, %s360
      %p364 = scmp.eq.s32.totalorder %s32, 0
      %p365 = por %p363, %p364
      %p366 = scmp.ne.s32.totalorder %s358, %s360
      %p367 = scmp.eq.s32.totalorder %s37, 3
      %p368 = por %p366, %p367
      %p369 = scmp.ne.s32.totalorder %s360, %s361
      %p370 = scmp.eq.s32.totalorder %s37, 0
      %p371 = por %p369, %p370
      %p372 = scmp.ne.s32.totalorder %s360, %s361
      %p373 = scmp.eq.s32.totalorder %s38, 3
      %p374 = por %p372, %p373
      %p376 = scmp.ne.s32.totalorder %s361, %s375
      %p377 = scmp.eq.s32.totalorder %s38, 0
      %p378 = por %p376, %p377
      %s380 = sadd.s32 %s379, 1
      %p383 = scmp.eq.s32.totalorder %s32, 3
      %p384 = scmp.ne.s32.totalorder %s379, %s381
      %p385 = scmp.eq.s32.totalorder %s32, 0
      %p386 = por %p384, %p385
      %p387 = scmp.ne.s32.totalorder %s379, %s381
      %p388 = scmp.eq.s32.totalorder %s37, 3
      %p389 = por %p387, %p388
      %p390 = scmp.ne.s32.totalorder %s381, %s382
      %p391 = scmp.eq.s32.totalorder %s37, 0
      %p392 = por %p390, %p391
      %p393 = scmp.ne.s32.totalorder %s381, %s382
      %p394 = scmp.eq.s32.totalorder %s38, 3
      %p395 = por %p393, %p394
      %p397 = scmp.ne.s32.totalorder %s382, %s396
      %p398 = scmp.eq.s32.totalorder %s38, 0
      %p399 = por %p397, %p398
      %s401 = sadd.s32 %s400, 1
      %p404 = scmp.eq.s32.totalorder %s32, 3
      %p405 = scmp.ne.s32.totalorder %s400, %s402
      %p406 = scmp.eq.s32.totalorder %s32, 0
      %p407 = por %p405, %p406
      %p408 = scmp.ne.s32.totalorder %s400, %s402
      %p409 = scmp.eq.s32.totalorder %s37, 3
      %p410 = por %p408, %p409
      %p411 = scmp.ne.s32.totalorder %s402, %s403
      %p412 = scmp.eq.s32.totalorder %s37, 0
      %p413 = por %p411, %p412
      %p414 = scmp.ne.s32.totalorder %s402, %s403
      %p415 = scmp.eq.s32.totalorder %s38, 3
      %p416 = por %p414, %p415
      %p418 = scmp.ne.s32.totalorder %s403, %s417
      %p419 = scmp.eq.s32.totalorder %s38, 0
      %p420 = por %p418, %p419
      %s422 = sadd.s32 %s421, 1
      %p425 = scmp.eq.s32.totalorder %s32, 3
      %p426 = scmp.ne.s32.totalorder %s421, %s423
      %p427 = scmp.eq.s32.totalorder %s32, 0
      %p428 = por %p426, %p427
      %p429 = scmp.ne.s32.totalorder %s421, %s423
      %p430 = scmp.eq.s32.totalorder %s37, 3
      %p431 = por %p429, %p430
      %p432 = scmp.ne.s32.totalorder %s423, %s424
      %p433 = scmp.eq.s32.totalorder %s37, 0
      %p434 = por %p432, %p433
      %p435 = scmp.ne.s32.totalorder %s423, %s424
      %p436 = scmp.eq.s32.totalorder %s38, 3
      %p437 = por %p435, %p436
      %p439 = scmp.ne.s32.totalorder %s424, %s438
      %p440 = scmp.eq.s32.totalorder %s38, 0
      %p441 = por %p439, %p440
      %s442 = ssub.s32 %s39, %s51
      %s443 = ssub.s32 %s40, %s47
      %s444 = sor.u32 %s442, %s443
      %p445 = scmp.eq.s32.totalorder %s444, 0
      %s447 = sadd.s32 %s446, 1
      %s448 = scalar_select %p445, %s446, %s447
      %p451 = pneg %p445
      %p452 = scmp.eq.s32.totalorder %s32, 3
      %p453 = por %p451, %p452
      %p454 = scmp.ne.s32.totalorder %s446, %s449
      %p455 = scmp.eq.s32.totalorder %s32, 0
      %p456 = por %p454, %p455
      %p457 = scmp.ne.s32.totalorder %s446, %s449
      %p458 = scmp.eq.s32.totalorder %s37, 3
      %p459 = por %p457, %p458
      %p460 = scmp.ne.s32.totalorder %s449, %s450
      %p461 = scmp.eq.s32.totalorder %s37, 0
      %p462 = por %p460, %p461
      %p463 = scmp.ne.s32.totalorder %s449, %s450
      %p464 = scmp.eq.s32.totalorder %s38, 3
      %p465 = por %p463, %p464
      %p467 = scmp.ne.s32.totalorder %s450, %s466
      %p468 = scmp.eq.s32.totalorder %s38, 0
      %p469 = por %p467, %p468
      %p470 = scmp.le.s32.totalorder 1, %s32
      %p471 = scmp.lt.s32.totalorder %s32, 5
      %p472 = pnand %p470, %p471
      %p473 = pneg %p472
      // Predicated region
      $region9: #{tpu_custom_call.1} parent=5 // pred_check
        _
      $region10: #{tpu_custom_call.1} parent=5 // pred_check_branch
        %475 = sbr.rel (%p472) target = $region12
      $region11: #{tpu_custom_call.1} parent=5 // pred_region
        %s476 = ssub.s32 %s32, 1
        // Predicated region
        $region13: #{tpu_custom_call.1} parent=11 // pred_check
          %p477 = pneg %p98
        $region14: #{tpu_custom_call.1} parent=11 // pred_check_branch
          %479 = sbr.rel (%p477) target = $region16
        $region15: #{tpu_custom_call.1} parent=11 // pred_region
          %p480 = scmp.lt.s32.totalorder %s41, 1
          %s481 = scalar_select %p480, %s41, 1
          %s482 = smul.addr %s481, 2
          %s483 = smul.addr %s482, 8
          %s484 = scalar_lea.vmem %s1, %s483
        $region16: #{tpu_custom_call.1} parent=11 // pred_fallthru
          _
        // Predicated region
        $region17: #{tpu_custom_call.1} parent=11 // pred_check
          %p485 = pneg %p119
        $region18: #{tpu_custom_call.1} parent=11 // pred_check_branch
          %487 = sbr.rel (%p485) target = $region20
        $region19: #{tpu_custom_call.1} parent=11 // pred_region
          %s489 = ssub.s32 16, 16
          %490 = vsyncadd [#allocation6], %s489
          %s492 = sshll.u32 [#allocation5], 4
          %s493 = int_to_ptr.vmem [resolvable:$true] %s492
          %495 = dma.hbm_to_vmem [thread:$0]  %s2, 16, %s493, [#allocation6]
        $region20: #{tpu_custom_call.1} parent=11 // pred_fallthru
          _
        // Predicated region
        $region21: #{tpu_custom_call.1} parent=11 // pred_check
          %p496 = pneg %p140
        $region22: #{tpu_custom_call.1} parent=11 // pred_check_branch
          %498 = sbr.rel (%p496) target = $region24
        $region23: #{tpu_custom_call.1} parent=11 // pred_region
          %s500 = ssub.s32 16, 16
          %501 = vsyncadd [#allocation9], %s500
          %s503 = sshll.u32 [#allocation8], 4
          %s504 = int_to_ptr.vmem [resolvable:$true] %s503
          %506 = dma.hbm_to_vmem [thread:$0]  %s3, 16, %s504, [#allocation9]
        $region24: #{tpu_custom_call.1} parent=11 // pred_fallthru
          _
        // Predicated region
        $region25: #{tpu_custom_call.1} parent=11 // pred_check
          %p507 = pneg %p161
        $region26: #{tpu_custom_call.1} parent=11 // pred_check_branch
          %509 = sbr.rel (%p507) target = $region28
        $region27: #{tpu_custom_call.1} parent=11 // pred_region
          _
        $region28: #{tpu_custom_call.1} parent=11 // pred_fallthru
          _
        // Predicated region
        $region29: #{tpu_custom_call.1} parent=11 // pred_check
          %p510 = pneg %p182
        $region30: #{tpu_custom_call.1} parent=11 // pred_check_branch
          %512 = sbr.rel (%p510) target = $region32
        $region31: #{tpu_custom_call.1} parent=11 // pred_region
          %s514 = ssub.s32 64, 64
          %515 = vsyncadd [#allocation9], %s514
          %s516 = sshll.u32 [#allocation10], 4
          %s517 = int_to_ptr.vmem [resolvable:$true] %s516
          %522 = dma.hbm_to_vmem [thread:$0]  %s5, 64, %s517, [#allocation9], 16, 16, 1
        $region32: #{tpu_custom_call.1} parent=11 // pred_fallthru
          _
        // Predicated region
        $region33: #{tpu_custom_call.1} parent=11 // pred_check
          %p523 = pneg %p203
        $region34: #{tpu_custom_call.1} parent=11 // pred_check_branch
          %525 = sbr.rel (%p523) target = $region36
        $region35: #{tpu_custom_call.1} parent=11 // pred_region
          _
        $region36: #{tpu_custom_call.1} parent=11 // pred_fallthru
          _
        // Predicated region
        $region37: #{tpu_custom_call.1} parent=11 // pred_check
          %p526 = pneg %p224
        $region38: #{tpu_custom_call.1} parent=11 // pred_check_branch
          %528 = sbr.rel (%p526) target = $region40
        $region39: #{tpu_custom_call.1} parent=11 // pred_region
          %s530 = ssub.s32 64, 64
          %531 = vsyncadd [#allocation12], %s530
          %s532 = sshll.u32 [#allocation11], 4
          %s533 = int_to_ptr.vmem [resolvable:$true] %s532
          %538 = dma.hbm_to_vmem [thread:$0]  %s7, 64, %s533, [#allocation12], 16, 16, 1
        $region40: #{tpu_custom_call.1} parent=11 // pred_fallthru
          _
        // Predicated region
        $region41: #{tpu_custom_call.1} parent=11 // pred_check
          %p539 = pneg %p245
        $region42: #{tpu_custom_call.1} parent=11 // pred_check_branch
          %541 = sbr.rel (%p539) target = $region44
        $region43: #{tpu_custom_call.1} parent=11 // pred_region
          _
        $region44: #{tpu_custom_call.1} parent=11 // pred_fallthru
          _
        // Predicated region
        $region45: #{tpu_custom_call.1} parent=11 // pred_check
          %p542 = pneg %p266
        $region46: #{tpu_custom_call.1} parent=11 // pred_check_branch
          %544 = sbr.rel (%p542) target = $region48
        $region47: #{tpu_custom_call.1} parent=11 // pred_region
          _
        $region48: #{tpu_custom_call.1} parent=11 // pred_fallthru
          _
        // Predicated region
        $region49: #{tpu_custom_call.1} parent=11 // pred_check
          %p545 = pneg %p287
        $region50: #{tpu_custom_call.1} parent=11 // pred_check_branch
          %547 = sbr.rel (%p545) target = $region52
        $region51: #{tpu_custom_call.1} parent=11 // pred_region
          %s549 = ssub.s32 256, 256
          %550 = vsyncadd [#allocation12], %s549
          %s551 = sshll.u32 [#allocation13], 4
          %s552 = int_to_ptr.vmem [resolvable:$true] %s551
          %557 = dma.hbm_to_vmem [thread:$0]  %s10, 256, %s552, [#allocation12], 64, 64, 4
        $region52: #{tpu_custom_call.1} parent=11 // pred_fallthru
          _
        // Predicated region
        $region53: #{tpu_custom_call.1} parent=11 // pred_check
          %p558 = pneg %p308
        $region54: #{tpu_custom_call.1} parent=11 // pred_check_branch
          %560 = sbr.rel (%p558) target = $region56
        $region55: #{tpu_custom_call.1} parent=11 // pred_region
          _
        $region56: #{tpu_custom_call.1} parent=11 // pred_fallthru
          _
        // Predicated region
        $region57: #{tpu_custom_call.1} parent=11 // pred_check
          %p561 = pneg %p329
        $region58: #{tpu_custom_call.1} parent=11 // pred_check_branch
          %563 = sbr.rel (%p561) target = $region60
        $region59: #{tpu_custom_call.1} parent=11 // pred_region
          %s565 = ssub.s32 16, 16
          %566 = vsyncadd [#allocation15], %s565
          %s568 = sshll.u32 [#allocation14], 4
          %s569 = int_to_ptr.vmem [resolvable:$true] %s568
          %571 = dma.hbm_to_vmem [thread:$0]  %s12, 16, %s569, [#allocation15]
        $region60: #{tpu_custom_call.1} parent=11 // pred_fallthru
          _
        // Predicated region
        $region61: #{tpu_custom_call.1} parent=11 // pred_check
          %p572 = pneg %p350
        $region62: #{tpu_custom_call.1} parent=11 // pred_check_branch
          %574 = sbr.rel (%p572) target = $region64
        $region63: #{tpu_custom_call.1} parent=11 // pred_region
          %s576 = ssub.s32 16, 16
          %577 = vsyncadd [#allocation15], %s576
          %s579 = sshll.u32 [#allocation16], 4
          %s580 = int_to_ptr.vmem [resolvable:$true] %s579
          %582 = dma.hbm_to_vmem [thread:$0]  %s13, 16, %s580, [#allocation15]
        $region64: #{tpu_custom_call.1} parent=11 // pred_fallthru
          _
        // Predicated region
        $region65: #{tpu_custom_call.1} parent=11 // pred_check
          %p583 = pneg %p371
        $region66: #{tpu_custom_call.1} parent=11 // pred_check_branch
          %585 = sbr.rel (%p583) target = $region68
        $region67: #{tpu_custom_call.1} parent=11 // pred_region
          _
        $region68: #{tpu_custom_call.1} parent=11 // pred_fallthru
          _
        // Predicated region
        $region69: #{tpu_custom_call.1} parent=11 // pred_check
          %p586 = pneg %p392
        $region70: #{tpu_custom_call.1} parent=11 // pred_check_branch
          %588 = sbr.rel (%p586) target = $region72
        $region71: #{tpu_custom_call.1} parent=11 // pred_region
          %s590 = ssub.s32 16, 16
          %591 = vsyncadd [#allocation18], %s590
          %s593 = sshll.u32 [#allocation17], 4
          %s594 = int_to_ptr.vmem [resolvable:$true] %s593
          %596 = dma.hbm_to_vmem [thread:$0]  %s15, 16, %s594, [#allocation18]
        $region72: #{tpu_custom_call.1} parent=11 // pred_fallthru
          _
        // Predicated region
        $region73: #{tpu_custom_call.1} parent=11 // pred_check
          %p597 = pneg %p413
        $region74: #{tpu_custom_call.1} parent=11 // pred_check_branch
          %599 = sbr.rel (%p597) target = $region76
        $region75: #{tpu_custom_call.1} parent=11 // pred_region
          _
        $region76: #{tpu_custom_call.1} parent=11 // pred_fallthru
          _
        // Predicated region
        $region77: #{tpu_custom_call.1} parent=11 // pred_check
          %p600 = pneg %p434
        $region78: #{tpu_custom_call.1} parent=11 // pred_check_branch
          %602 = sbr.rel (%p600) target = $region80
        $region79: #{tpu_custom_call.1} parent=11 // pred_region
          _
        $region80: #{tpu_custom_call.1} parent=11 // pred_fallthru
          _
      $region12: #{tpu_custom_call.1} parent=5 // pred_fallthru
        _
      %p603 = scmp.lt.s32.totalorder %s32, 4
      // Predicated region
      $region81: #{tpu_custom_call.1} parent=5 // pred_check
        %p604 = pneg %p603
      $region82: #{tpu_custom_call.1} parent=5 // pred_check_branch
        %606 = sbr.rel (%p604) target = $region84
      $region83: #{tpu_custom_call.1} parent=5 // pred_region
        // Predicated region
        $region85: #{tpu_custom_call.1} parent=83 // pred_check
          %p607 = pneg %p66
        $region86: #{tpu_custom_call.1} parent=83 // pred_check_branch
          %609 = sbr.rel (%p607) target = $region88
        $region87: #{tpu_custom_call.1} parent=83 // pred_region
          %p610 = scmp.lt.s32.totalorder %s39, 1
          %s611 = scalar_select %p610, %s39, 1
          %p612 = scmp.lt.s32.totalorder %s40, 1
          %s613 = scalar_select %p612, %s40, 1
          %s614 = smul.addr %s611, 2
          %s615 = sadd.s32 %s613, %s614
          %s616 = smul.addr %s615, 8
          %s617 = scalar_lea.vmem %s0, %s616
        $region88: #{tpu_custom_call.1} parent=83 // pred_fallthru
          _
      $region84: #{tpu_custom_call.1} parent=5 // pred_fallthru
        _
      %p618 = scmp.le.s32.totalorder 1, %s32
      %p619 = scmp.lt.s32.totalorder %s32, 5
      %p620 = pnand %p618, %p619
      %p621 = pneg %p620
      // Predicated region
      $region89: #{tpu_custom_call.1} parent=5 // pred_check
        _
      $region90: #{tpu_custom_call.1} parent=5 // pred_check_branch
        %623 = sbr.rel (%p620) target = $region92
      $region91: #{tpu_custom_call.1} parent=5 // pred_region
        %s624 = ssub.s32 %s32, 1
        // Predicated region
        $region93: #{tpu_custom_call.1} parent=91 // pred_check
          %p625 = pneg %p119
        $region94: #{tpu_custom_call.1} parent=91 // pred_check_branch
          %627 = sbr.rel (%p625) target = $region96
        $region95: #{tpu_custom_call.1} parent=91 // pred_region
          %628 = dma.done [#allocation6], 16
        $region96: #{tpu_custom_call.1} parent=91 // pred_fallthru
          _
        // Predicated region
        $region97: #{tpu_custom_call.1} parent=91 // pred_check
          %p629 = pneg %p140
        $region98: #{tpu_custom_call.1} parent=91 // pred_check_branch
          %631 = sbr.rel (%p629) target = $region100
        $region99: #{tpu_custom_call.1} parent=91 // pred_region
          %632 = dma.done [#allocation9], 16
        $region100: #{tpu_custom_call.1} parent=91 // pred_fallthru
          _
        // Predicated region
        $region101: #{tpu_custom_call.1} parent=91 // pred_check
          %p633 = pneg %p182
        $region102: #{tpu_custom_call.1} parent=91 // pred_check_branch
          %635 = sbr.rel (%p633) target = $region104
        $region103: #{tpu_custom_call.1} parent=91 // pred_region
          %636 = dma.done [#allocation9], 64
        $region104: #{tpu_custom_call.1} parent=91 // pred_fallthru
          _
        // Predicated region
        $region105: #{tpu_custom_call.1} parent=91 // pred_check
          %p637 = pneg %p224
        $region106: #{tpu_custom_call.1} parent=91 // pred_check_branch
          %639 = sbr.rel (%p637) target = $region108
        $region107: #{tpu_custom_call.1} parent=91 // pred_region
          %640 = dma.done [#allocation12], 64
        $region108: #{tpu_custom_call.1} parent=91 // pred_fallthru
          _
        // Predicated region
        $region109: #{tpu_custom_call.1} parent=91 // pred_check
          %p641 = pneg %p287
        $region110: #{tpu_custom_call.1} parent=91 // pred_check_branch
          %643 = sbr.rel (%p641) target = $region112
        $region111: #{tpu_custom_call.1} parent=91 // pred_region
          %644 = dma.done [#allocation12], 256
        $region112: #{tpu_custom_call.1} parent=91 // pred_fallthru
          _
        // Predicated region
        $region113: #{tpu_custom_call.1} parent=91 // pred_check
          %p645 = pneg %p329
        $region114: #{tpu_custom_call.1} parent=91 // pred_check_branch
          %647 = sbr.rel (%p645) target = $region116
        $region115: #{tpu_custom_call.1} parent=91 // pred_region
          %648 = dma.done [#allocation15], 16
        $region116: #{tpu_custom_call.1} parent=91 // pred_fallthru
          _
        // Predicated region
        $region117: #{tpu_custom_call.1} parent=91 // pred_check
          %p649 = pneg %p350
        $region118: #{tpu_custom_call.1} parent=91 // pred_check_branch
          %651 = sbr.rel (%p649) target = $region120
        $region119: #{tpu_custom_call.1} parent=91 // pred_region
          %652 = dma.done [#allocation15], 16
        $region120: #{tpu_custom_call.1} parent=91 // pred_fallthru
          _
        // Predicated region
        $region121: #{tpu_custom_call.1} parent=91 // pred_check
          %p653 = pneg %p392
        $region122: #{tpu_custom_call.1} parent=91 // pred_check_branch
          %655 = sbr.rel (%p653) target = $region124
        $region123: #{tpu_custom_call.1} parent=91 // pred_region
          %656 = dma.done [#allocation18], 16
        $region124: #{tpu_custom_call.1} parent=91 // pred_fallthru
          _
        %p657 = scmp.lt.s32.totalorder %s41, 1
        %s658 = scalar_select %p657, %s41, 1
        %p659 = scmp.lt.s32.totalorder %s42, 1
        %s660 = scalar_select %p659, %s42, 1
        %s661 = smul.addr %s658, 2
        %s662 = sadd.s32 %s660, %s661
        %s663 = smul.addr %s662, 8
        %s664 = scalar_lea.vmem %s0, %s663
        %p665 = pneg %p72
        %p666 = pneg %p69
        %p667 = scmp.lt.s32.totalorder %s41, 1
        %s668 = scalar_select %p667, %s41, 1
        %s669 = smul.addr %s668, 2
        %s670 = smul.addr %s669, 8
        %s671 = scalar_lea.vmem %s1, %s670
        %p672 = pneg %p98
        %p673 = pneg %p95
        %p674 = pneg %p119
        %p675 = pneg %p116
        %p676 = pneg %p140
        %p677 = pneg %p137
        %p678 = pneg %p161
        %p679 = pneg %p158
        %p680 = pneg %p182
        %p681 = pneg %p179
        %p682 = pneg %p203
        %p683 = pneg %p200
        %p684 = pneg %p224
        %p685 = pneg %p221
        %p686 = pneg %p245
        %p687 = pneg %p242
        %p688 = pneg %p266
        %p689 = pneg %p263
        %p690 = pneg %p287
        %p691 = pneg %p284
        %p692 = pneg %p308
        %p693 = pneg %p305
        %p694 = pneg %p329
        %p695 = pneg %p326
        %p696 = pneg %p350
        %p697 = pneg %p347
        %p698 = pneg %p371
        %p699 = pneg %p368
        %p700 = pneg %p392
        %p701 = pneg %p389
        %p702 = pneg %p413
        %p703 = pneg %p410
        %p704 = pneg %p434
        %p705 = pneg %p431
        %p706 = pneg %p462
        %p707 = pneg %p459
        %s708 = sand.u32 %s449, 1
        %s709 = scalar_lea.sflag [#allocation7], %s708
        %s710 = sand.u32 %s449, 1
        %s711 = smul.addr %s710, 8
        %s712 = scalar_lea.vmem [#allocation19], %s711
        %p713 = scmp.lt.s32.totalorder %s41, 1
        %s714 = scalar_select %p713, %s41, 1
        %p715 = scmp.lt.s32.totalorder %s42, 1
        %s716 = scalar_select %p715, %s42, 1
        %s717 = smul.addr %s714, 2
        %s718 = sadd.s32 %s716, %s717
        %s719 = smul.addr %s718, 8
        %s720 = scalar_lea.vmem %s0, %s719
        %p721 = scmp.lt.s32.totalorder %s41, 1
        %s722 = scalar_select %p721, %s41, 1
        %s723 = smul.addr %s722, 2
        %s724 = smul.addr %s723, 8
        %s725 = scalar_lea.vmem %s1, %s724
        %v727 = vld [vmem:[#allocation5] sm:$0x1]
        %v728 = vld [vmem:[#allocation8] sm:$0x1]
        %p729 = scmp.eq.s32.totalorder %s42, 0
        // Predicated region
        $region125: #{tpu_custom_call.1} parent=91 // pred_check
          %p730 = pneg %p729
        $region126: #{tpu_custom_call.1} parent=91 // pred_check_branch
          %732 = sbr.rel (%p730) target = $region128
        $region127: #{tpu_custom_call.1} parent=91 // pred_region
          %v733 = vld [vmem:[%s725] sm:$0xff]
          %v734 = vld [vmem:[%s725 + $0x8] sm:$0xff]
          %vm735 = vcmask 261120
          %v736 = vsel %vm735, %v733, 0.0
          %737 = vadd.xlane.f32.xlu0 %v736
          %v738 = vpop.xlane.xlu0 %737
          %v739 = vsel %vm735, %v734, 0.0
          %740 = vadd.xlane.f32.xlu0 %v739
          %v741 = vpop.xlane.xlu0 %740
          %v742 = vrcp.pop 32.0
          %v743 = vmul.f32 %v738, %v742
          %v744 = vmul.f32 %v741, %v742
          %v745 = vsub.f32 %v733, %v743
          %v746 = vsub.f32 %v734, %v744
          %v747 = vmul.f32 %v745, %v745
          %v748 = vmul.f32 %v746, %v746
          %v749 = vsel %vm735, %v747, 0.0
          %750 = vadd.xlane.f32.xlu0 %v749
          %v751 = vpop.xlane.xlu0 %750
          %v752 = vsel %vm735, %v748, 0.0
          %753 = vadd.xlane.f32.xlu0 %v752
          %v754 = vpop.xlane.xlu0 %753
          %v755 = vmul.f32 %v751, %v742
          %v756 = vmul.f32 %v754, %v742
          %v757 = vadd.f32 %v755, 1e-05
          %v758 = vadd.f32 %v756, 1e-05
          %v759 = vrsqrt.pop %v757
          %v760 = vrsqrt.pop %v758
          %v761 = vmul.f32 %v745, %v759
          %v762 = vmul.f32 %v746, %v760
          %v764 = vlaneseq
          %v765 = vshrl.u32 %v764, 7
          %v766 = vsub.s32 0, %v765
          %v767 = vrot.slane %v727, %v766
          %v769 = vmul.f32 %v761, %v767
          %v770 = vmul.f32 %v762, %v767
          %v772 = vlaneseq
          %v773 = vshrl.u32 %v772, 7
          %v774 = vsub.s32 0, %v773
          %v775 = vrot.slane %v728, %v774
          %v777 = vadd.f32 %v769, %v775
          %v778 = vadd.f32 %v770, %v775
          %v779 = vpack.c.bf16 %v778, %v777
          %v780 = vld [vmem:[%s6] sm:$0xf]
          %v781 = vld [vmem:[#allocation11] sm:$0x1]
          %v783 = vlaneseq
          %v784 = vshrl.u32 %v783, 7
          %v785 = vsub.s32 0, %v784
          %v786 = vrot.slane %v781, %v785
          %v789 = vsel %vm735, %v779, 0
          %v792 = vsel %vm735, %v780, 0
          %794 = vmatprep.subr.bf16.mxu0 0
          %795 = vmatpush1.bf16.xpose.msra.mxu0 0
          %796 = vmatprep.subr.bf16.mxu0 0
          %797 = vmatpush1.bf16.xpose.msra.mxu0 0
          %798 = vmatprep.subr.bf16.mxu0 0
          %799 = vmatpush1.bf16.xpose.msra.mxu0 0
          %800 = vmatprep.subr.bf16.mxu0 0
          %801 = vmatpush1.bf16.xpose.msra.mxu0 0
          %802 = vmatprep.subr.bf16.mxu0 0
          %803 = vmatpush1.bf16.xpose.msra.mxu0 0
          %804 = vmatprep.subr.bf16.mxu0 0
          %805 = vmatpush1.bf16.xpose.msra.mxu0 0
          %806 = vmatprep.subr.bf16.mxu0 0
          %807 = vmatpush1.bf16.xpose.msra.mxu0 0
          %808 = vmatprep.subr.bf16.mxu0 0
          %809 = vmatpush1.bf16.xpose.msra.mxu0 %v792
          %810 = vmatprep.subr.bf16.mxu0 0
          %811 = vmatpush2.bf16.xpose.msra.mxu0 0
          %812 = vmatprep.subr.bf16.mxu0 0
          %813 = vmatpush2.bf16.xpose.msra.mxu0 0
          %814 = vmatprep.subr.bf16.mxu0 0
          %815 = vmatpush2.bf16.xpose.msra.mxu0 0
          %816 = vmatprep.subr.bf16.mxu0 0
          %817 = vmatpush2.bf16.xpose.msra.mxu0 0
          %818 = vmatprep.subr.bf16.mxu0 0
          %819 = vmatpush2.bf16.xpose.msra.mxu0 0
          %820 = vmatprep.subr.bf16.mxu0 0
          %821 = vmatpush2.bf16.xpose.msra.mxu0 0
          %822 = vmatprep.subr.bf16.mxu0 0
          %823 = vmatpush2.bf16.xpose.msra.mxu0 0
          %824 = vmatprep.subr.bf16.mxu0 0
          %825 = vmatpush2.bf16.xpose.msra.mxu0 0
          %826 = vmatprep.mubr.bf16.mxu0 0
          %827 = vmatmul.mubr.bf16.gmra.mxu0 %v789
          %v828 = vpop.f32.mrf.mxu0
          %v829 = vadd.f32 %v786, %v828
          %v830 = vpop.f32.mrf.mxu0
          %v831 = vpop.f32.mrf.mxu0
          %v832 = vadd.f32 %v786, %v831
          %v833 = vpop.f32.mrf.mxu0
          %834 = vdwg.mxu0
          %v835 = vpack.c.bf16 %v832, %v829
          %v837 = vunpack.c.l.b16 %v835
          %v838 = vunpack.c.h.b16 %v835
          %v839 = vpack.c.b16 %v837, %v837
          %v840 = vpack.c.b16 %v838, %v838
          %vm843 = vcmask 60416
          %844 = vst.msk [vmem:[#allocation2] sm:$0xf] %vm843, %v839
          %845 = vst.msk [vmem:[#allocation2 + $0x4] sm:$0xf] %vm843, %v840
          %v846 = vld [vmem:[%s8] sm:$0xf]
          %v847 = vld [vmem:[%s9] sm:$0xff]
          %849 = vset.pattern.permute.xlu0 0
          %850 = vperm.xlu0 %849, %v847
          %v851 = vpop.permute.xlu0 %850
          %v854 = vsel %vm735, %v846, 0
          %856 = vmatprep.subr.bf16.mxu0 0
          %857 = vmatpush1.bf16.xpose.msra.mxu0 0
          %858 = vmatprep.subr.bf16.mxu0 0
          %859 = vmatpush1.bf16.xpose.msra.mxu0 0
          %860 = vmatprep.subr.bf16.mxu0 0
          %861 = vmatpush1.bf16.xpose.msra.mxu0 0
          %862 = vmatprep.subr.bf16.mxu0 0
          %863 = vmatpush1.bf16.xpose.msra.mxu0 0
          %864 = vmatprep.subr.bf16.mxu0 0
          %865 = vmatpush1.bf16.xpose.msra.mxu0 0
          %866 = vmatprep.subr.bf16.mxu0 0
          %867 = vmatpush1.bf16.xpose.msra.mxu0 0
          %868 = vmatprep.subr.bf16.mxu0 0
          %869 = vmatpush1.bf16.xpose.msra.mxu0 0
          %870 = vmatprep.subr.bf16.mxu0 0
          %871 = vmatpush1.bf16.xpose.msra.mxu0 %v789
          %872 = vmatprep.subr.bf16.mxu0 0
          %873 = vmatpush2.bf16.xpose.msra.mxu0 0
          %874 = vmatprep.subr.bf16.mxu0 0
          %875 = vmatpush2.bf16.xpose.msra.mxu0 0
          %876 = vmatprep.subr.bf16.mxu0 0
          %877 = vmatpush2.bf16.xpose.msra.mxu0 0
          %878 = vmatprep.subr.bf16.mxu0 0
          %879 = vmatpush2.bf16.xpose.msra.mxu0 0
          %880 = vmatprep.subr.bf16.mxu0 0
          %881 = vmatpush2.bf16.xpose.msra.mxu0 0
          %882 = vmatprep.subr.bf16.mxu0 0
          %883 = vmatpush2.bf16.xpose.msra.mxu0 0
          %884 = vmatprep.subr.bf16.mxu0 0
          %885 = vmatpush2.bf16.xpose.msra.mxu0 0
          %886 = vmatprep.subr.bf16.mxu0 0
          %887 = vmatpush2.bf16.xpose.msra.mxu0 0
          %888 = vmatprep.mubr.bf16.mxu0 0
          %889 = vmatmul.mubr.bf16.gmra.mxu0 %v854
          %v890 = vpop.f32.mrf.mxu0
          %v891 = vadd.f32 %v851, %v890
          %v892 = vpop.f32.mrf.mxu0
          %v893 = vpop.f32.mrf.mxu0
          %v894 = vpop.f32.mrf.mxu0
          %895 = vdwg.mxu0
          %v896 = vpack.c.bf16 %v891, %v891
          %vm897 = vcmask 125952
          %898 = vst.msk [vmem:[#allocation3] sm:$0xf] %vm897, %v896
          %s899 = scalar_lea.vmem %s6, 4
          %v900 = vld [vmem:[%s899] sm:$0xf]
          %s901 = scalar_lea.vmem [#allocation11], 1
          %v902 = vld [vmem:[%s901] sm:$0x1]
          %v904 = vlaneseq
          %v905 = vshrl.u32 %v904, 7
          %v906 = vsub.s32 0, %v905
          %v907 = vrot.slane %v902, %v906
          %v910 = vsel %vm735, %v900, 0
          %912 = vmatprep.subr.bf16.mxu0 0
          %913 = vmatpush1.bf16.xpose.msra.mxu0 0
          %914 = vmatprep.subr.bf16.mxu0 0
          %915 = vmatpush1.bf16.xpose.msra.mxu0 0
          %916 = vmatprep.subr.bf16.mxu0 0
          %917 = vmatpush1.bf16.xpose.msra.mxu0 0
          %918 = vmatprep.subr.bf16.mxu0 0
          %919 = vmatpush1.bf16.xpose.msra.mxu0 0
          %920 = vmatprep.subr.bf16.mxu0 0
          %921 = vmatpush1.bf16.xpose.msra.mxu0 0
          %922 = vmatprep.subr.bf16.mxu0 0
          %923 = vmatpush1.bf16.xpose.msra.mxu0 0
          %924 = vmatprep.subr.bf16.mxu0 0
          %925 = vmatpush1.bf16.xpose.msra.mxu0 0
          %926 = vmatprep.subr.bf16.mxu0 0
          %927 = vmatpush1.bf16.xpose.msra.mxu0 %v910
          %928 = vmatprep.subr.bf16.mxu0 0
          %929 = vmatpush2.bf16.xpose.msra.mxu0 0
          %930 = vmatprep.subr.bf16.mxu0 0
          %931 = vmatpush2.bf16.xpose.msra.mxu0 0
          %932 = vmatprep.subr.bf16.mxu0 0
          %933 = vmatpush2.bf16.xpose.msra.mxu0 0
          %934 = vmatprep.subr.bf16.mxu0 0
          %935 = vmatpush2.bf16.xpose.msra.mxu0 0
          %936 = vmatprep.subr.bf16.mxu0 0
          %937 = vmatpush2.bf16.xpose.msra.mxu0 0
          %938 = vmatprep.subr.bf16.mxu0 0
          %939 = vmatpush2.bf16.xpose.msra.mxu0 0
          %940 = vmatprep.subr.bf16.mxu0 0
          %941 = vmatpush2.bf16.xpose.msra.mxu0 0
          %942 = vmatprep.subr.bf16.mxu0 0
          %943 = vmatpush2.bf16.xpose.msra.mxu0 0
          %944 = vmatprep.mubr.bf16.mxu0 0
          %945 = vmatmul.mubr.bf16.gmra.mxu0 %v789
          %v946 = vpop.f32.mrf.mxu0
          %v947 = vadd.f32 %v907, %v946
          %v948 = vpop.f32.mrf.mxu0
          %v949 = vpop.f32.mrf.mxu0
          %v950 = vadd.f32 %v907, %v949
          %v951 = vpop.f32.mrf.mxu0
          %952 = vdwg.mxu0
          %v953 = vpack.c.bf16 %v950, %v947
          %v955 = vunpack.c.l.b16 %v953
          %v956 = vunpack.c.h.b16 %v953
          %v957 = vpack.c.b16 %v955, %v955
          %v958 = vpack.c.b16 %v956, %v956
          %s961 = scalar_lea.vmem [#allocation2], 8
          %962 = vst.msk [vmem:[%s961] sm:$0xf] %vm843, %v957
          %963 = vst.msk [vmem:[%s961 + $0x4] sm:$0xf] %vm843, %v958
          %s964 = scalar_lea.vmem %s8, 4
          %v965 = vld [vmem:[%s964] sm:$0xf]
          %s966 = scalar_lea.vmem %s9, 8
          %v967 = vld [vmem:[%s966] sm:$0xff]
          %969 = vset.pattern.permute.xlu0 0
          %970 = vperm.xlu0 %969, %v967
          %v971 = vpop.permute.xlu0 %970
          %v974 = vsel %vm735, %v965, 0
          %976 = vmatprep.subr.bf16.mxu0 0
          %977 = vmatpush1.bf16.xpose.msra.mxu0 0
          %978 = vmatprep.subr.bf16.mxu0 0
          %979 = vmatpush1.bf16.xpose.msra.mxu0 0
          %980 = vmatprep.subr.bf16.mxu0 0
          %981 = vmatpush1.bf16.xpose.msra.mxu0 0
          %982 = vmatprep.subr.bf16.mxu0 0
          %983 = vmatpush1.bf16.xpose.msra.mxu0 0
          %984 = vmatprep.subr.bf16.mxu0 0
          %985 = vmatpush1.bf16.xpose.msra.mxu0 0
          %986 = vmatprep.subr.bf16.mxu0 0
          %987 = vmatpush1.bf16.xpose.msra.mxu0 0
          %988 = vmatprep.subr.bf16.mxu0 0
          %989 = vmatpush1.bf16.xpose.msra.mxu0 0
          %990 = vmatprep.subr.bf16.mxu0 0
          %991 = vmatpush1.bf16.xpose.msra.mxu0 %v789
          %992 = vmatprep.subr.bf16.mxu0 0
          %993 = vmatpush2.bf16.xpose.msra.mxu0 0
          %994 = vmatprep.subr.bf16.mxu0 0
          %995 = vmatpush2.bf16.xpose.msra.mxu0 0
          %996 = vmatprep.subr.bf16.mxu0 0
          %997 = vmatpush2.bf16.xpose.msra.mxu0 0
          %998 = vmatprep.subr.bf16.mxu0 0
          %999 = vmatpush2.bf16.xpose.msra.mxu0 0
          %1000 = vmatprep.subr.bf16.mxu0 0
          %1001 = vmatpush2.bf16.xpose.msra.mxu0 0
          %1002 = vmatprep.subr.bf16.mxu0 0
          %1003 = vmatpush2.bf16.xpose.msra.mxu0 0
          %1004 = vmatprep.subr.bf16.mxu0 0
          %1005 = vmatpush2.bf16.xpose.msra.mxu0 0
          %1006 = vmatprep.subr.bf16.mxu0 0
          %1007 = vmatpush2.bf16.xpose.msra.mxu0 0
          %1008 = vmatprep.mubr.bf16.mxu0 0
          %1009 = vmatmul.mubr.bf16.gmra.mxu0 %v974
          %v1010 = vpop.f32.mrf.mxu0
          %v1011 = vadd.f32 %v971, %v1010
          %v1012 = vpop.f32.mrf.mxu0
          %v1013 = vpop.f32.mrf.mxu0
          %v1014 = vpop.f32.mrf.mxu0
          %1015 = vdwg.mxu0
          %v1016 = vpack.c.bf16 %v1011, %v1011
          %s1017 = scalar_lea.vmem [#allocation3], 4
          %1018 = vst.msk [vmem:[%s1017] sm:$0xf] %vm897, %v1016
          %s1019 = scalar_lea.vmem %s6, 8
          %v1020 = vld [vmem:[%s1019] sm:$0xf]
          %s1021 = scalar_lea.vmem [#allocation11], 2
          %v1022 = vld [vmem:[%s1021] sm:$0x1]
          %v1024 = vlaneseq
          %v1025 = vshrl.u32 %v1024, 7
          %v1026 = vsub.s32 0, %v1025
          %v1027 = vrot.slane %v1022, %v1026
          %v1030 = vsel %vm735, %v1020, 0
          %1032 = vmatprep.subr.bf16.mxu0 0
          %1033 = vmatpush1.bf16.xpose.msra.mxu0 0
          %1034 = vmatprep.subr.bf16.mxu0 0
          %1035 = vmatpush1.bf16.xpose.msra.mxu0 0
          %1036 = vmatprep.subr.bf16.mxu0 0
          %1037 = vmatpush1.bf16.xpose.msra.mxu0 0
          %1038 = vmatprep.subr.bf16.mxu0 0
          %1039 = vmatpush1.bf16.xpose.msra.mxu0 0
          %1040 = vmatprep.subr.bf16.mxu0 0
          %1041 = vmatpush1.bf16.xpose.msra.mxu0 0
          %1042 = vmatprep.subr.bf16.mxu0 0
          %1043 = vmatpush1.bf16.xpose.msra.mxu0 0
          %1044 = vmatprep.subr.bf16.mxu0 0
          %1045 = vmatpush1.bf16.xpose.msra.mxu0 0
          %1046 = vmatprep.subr.bf16.mxu0 0
          %1047 = vmatpush1.bf16.xpose.msra.mxu0 %v1030
          %1048 = vmatprep.subr.bf16.mxu0 0
          %1049 = vmatpush2.bf16.xpose.msra.mxu0 0
          %1050 = vmatprep.subr.bf16.mxu0 0
          %1051 = vmatpush2.bf16.xpose.msra.mxu0 0
          %1052 = vmatprep.subr.bf16.mxu0 0
          %1053 = vmatpush2.bf16.xpose.msra.mxu0 0
          %1054 = vmatprep.subr.bf16.mxu0 0
          %1055 = vmatpush2.bf16.xpose.msra.mxu0 0
          %1056 = vmatprep.subr.bf16.mxu0 0
          %1057 = vmatpush2.bf16.xpose.msra.mxu0 0
          %1058 = vmatprep.subr.bf16.mxu0 0
          %1059 = vmatpush2.bf16.xpose.msra.mxu0 0
          %1060 = vmatprep.subr.bf16.mxu0 0
          %1061 = vmatpush2.bf16.xpose.msra.mxu0 0
          %1062 = vmatprep.subr.bf16.mxu0 0
          %1063 = vmatpush2.bf16.xpose.msra.mxu0 0
          %1064 = vmatprep.mubr.bf16.mxu0 0
          %1065 = vmatmul.mubr.bf16.gmra.mxu0 %v789
          %v1066 = vpop.f32.mrf.mxu0
          %v1067 = vadd.f32 %v1027, %v1066
          %v1068 = vpop.f32.mrf.mxu0
          %v1069 = vpop.f32.mrf.mxu0
          %v1070 = vadd.f32 %v1027, %v1069
          %v1071 = vpop.f32.mrf.mxu0
          %1072 = vdwg.mxu0
          %v1073 = vpack.c.bf16 %v1070, %v1067
          %v1075 = vunpack.c.l.b16 %v1073
          %v1076 = vunpack.c.h.b16 %v1073
          %v1077 = vpack.c.b16 %v1075, %v1075
          %v1078 = vpack.c.b16 %v1076, %v1076
          %s1081 = scalar_lea.vmem [#allocation2], 16
          %1082 = vst.msk [vmem:[%s1081] sm:$0xf] %vm843, %v1077
          %1083 = vst.msk [vmem:[%s1081 + $0x4] sm:$0xf] %vm843, %v1078
          %s1084 = scalar_lea.vmem %s8, 8
          %v1085 = vld [vmem:[%s1084] sm:$0xf]
          %s1086 = scalar_lea.vmem %s9, 16
          %v1087 = vld [vmem:[%s1086] sm:$0xff]
          %1089 = vset.pattern.permute.xlu0 0
          %1090 = vperm.xlu0 %1089, %v1087
          %v1091 = vpop.permute.xlu0 %1090
          %v1094 = vsel %vm735, %v1085, 0
          %1096 = vmatprep.subr.bf16.mxu0 0
          %1097 = vmatpush1.bf16.xpose.msra.mxu0 0
          %1098 = vmatprep.subr.bf16.mxu0 0
          %1099 = vmatpush1.bf16.xpose.msra.mxu0 0
          %1100 = vmatprep.subr.bf16.mxu0 0
          %1101 = vmatpush1.bf16.xpose.msra.mxu0 0
          %1102 = vmatprep.subr.bf16.mxu0 0
          %1103 = vmatpush1.bf16.xpose.msra.mxu0 0
          %1104 = vmatprep.subr.bf16.mxu0 0
          %1105 = vmatpush1.bf16.xpose.msra.mxu0 0
          %1106 = vmatprep.subr.bf16.mxu0 0
          %1107 = vmatpush1.bf16.xpose.msra.mxu0 0
          %1108 = vmatprep.subr.bf16.mxu0 0
          %1109 = vmatpush1.bf16.xpose.msra.mxu0 0
          %1110 = vmatprep.subr.bf16.mxu0 0
          %1111 = vmatpush1.bf16.xpose.msra.mxu0 %v789
          %1112 = vmatprep.subr.bf16.mxu0 0
          %1113 = vmatpush2.bf16.xpose.msra.mxu0 0
          %1114 = vmatprep.subr.bf16.mxu0 0
          %1115 = vmatpush2.bf16.xpose.msra.mxu0 0
          %1116 = vmatprep.subr.bf16.mxu0 0
          %1117 = vmatpush2.bf16.xpose.msra.mxu0 0
          %1118 = vmatprep.subr.bf16.mxu0 0
          %1119 = vmatpush2.bf16.xpose.msra.mxu0 0
          %1120 = vmatprep.subr.bf16.mxu0 0
          %1121 = vmatpush2.bf16.xpose.msra.mxu0 0
          %1122 = vmatprep.subr.bf16.mxu0 0
          %1123 = vmatpush2.bf16.xpose.msra.mxu0 0
          %1124 = vmatprep.subr.bf16.mxu0 0
          %1125 = vmatpush2.bf16.xpose.msra.mxu0 0
          %1126 = vmatprep.subr.bf16.mxu0 0
          %1127 = vmatpush2.bf16.xpose.msra.mxu0 0
          %1128 = vmatprep.mubr.bf16.mxu0 0
          %1129 = vmatmul.mubr.bf16.gmra.mxu0 %v1094
          %v1130 = vpop.f32.mrf.mxu0
          %v1131 = vadd.f32 %v1091, %v1130
          %v1132 = vpop.f32.mrf.mxu0
          %v1133 = vpop.f32.mrf.mxu0
          %v1134 = vpop.f32.mrf.mxu0
          %1135 = vdwg.mxu0
          %v1136 = vpack.c.bf16 %v1131, %v1131
          %s1137 = scalar_lea.vmem [#allocation3], 8
          %1138 = vst.msk [vmem:[%s1137] sm:$0xf] %vm897, %v1136
          %s1139 = scalar_lea.vmem %s6, 12
          %v1140 = vld [vmem:[%s1139] sm:$0xf]
          %s1141 = scalar_lea.vmem [#allocation11], 3
          %v1142 = vld [vmem:[%s1141] sm:$0x1]
          %v1144 = vlaneseq
          %v1145 = vshrl.u32 %v1144, 7
          %v1146 = vsub.s32 0, %v1145
          %v1147 = vrot.slane %v1142, %v1146
          %v1150 = vsel %vm735, %v1140, 0
          %1152 = vmatprep.subr.bf16.mxu0 0
          %1153 = vmatpush1.bf16.xpose.msra.mxu0 0
          %1154 = vmatprep.subr.bf16.mxu0 0
          %1155 = vmatpush1.bf16.xpose.msra.mxu0 0
          %1156 = vmatprep.subr.bf16.mxu0 0
          %1157 = vmatpush1.bf16.xpose.msra.mxu0 0
          %1158 = vmatprep.subr.bf16.mxu0 0
          %1159 = vmatpush1.bf16.xpose.msra.mxu0 0
          %1160 = vmatprep.subr.bf16.mxu0 0
          %1161 = vmatpush1.bf16.xpose.msra.mxu0 0
          %1162 = vmatprep.subr.bf16.mxu0 0
          %1163 = vmatpush1.bf16.xpose.msra.mxu0 0
          %1164 = vmatprep.subr.bf16.mxu0 0
          %1165 = vmatpush1.bf16.xpose.msra.mxu0 0
          %1166 = vmatprep.subr.bf16.mxu0 0
          %1167 = vmatpush1.bf16.xpose.msra.mxu0 %v1150
          %1168 = vmatprep.subr.bf16.mxu0 0
          %1169 = vmatpush2.bf16.xpose.msra.mxu0 0
          %1170 = vmatprep.subr.bf16.mxu0 0
          %1171 = vmatpush2.bf16.xpose.msra.mxu0 0
          %1172 = vmatprep.subr.bf16.mxu0 0
          %1173 = vmatpush2.bf16.xpose.msra.mxu0 0
          %1174 = vmatprep.subr.bf16.mxu0 0
          %1175 = vmatpush2.bf16.xpose.msra.mxu0 0
          %1176 = vmatprep.subr.bf16.mxu0 0
          %1177 = vmatpush2.bf16.xpose.msra.mxu0 0
          %1178 = vmatprep.subr.bf16.mxu0 0
          %1179 = vmatpush2.bf16.xpose.msra.mxu0 0
          %1180 = vmatprep.subr.bf16.mxu0 0
          %1181 = vmatpush2.bf16.xpose.msra.mxu0 0
          %1182 = vmatprep.subr.bf16.mxu0 0
          %1183 = vmatpush2.bf16.xpose.msra.mxu0 0
          %1184 = vmatprep.mubr.bf16.mxu0 0
          %1185 = vmatmul.mubr.bf16.gmra.mxu0 %v789
          %v1186 = vpop.f32.mrf.mxu0
          %v1187 = vadd.f32 %v1147, %v1186
          %v1188 = vpop.f32.mrf.mxu0
          %v1189 = vpop.f32.mrf.mxu0
          %v1190 = vadd.f32 %v1147, %v1189
          %v1191 = vpop.f32.mrf.mxu0
          %1192 = vdwg.mxu0
          %v1193 = vpack.c.bf16 %v1190, %v1187
          %v1195 = vunpack.c.l.b16 %v1193
          %v1196 = vunpack.c.h.b16 %v1193
          %v1197 = vpack.c.b16 %v1195, %v1195
          %v1198 = vpack.c.b16 %v1196, %v1196
          %s1201 = scalar_lea.vmem [#allocation2], 24
          %1202 = vst.msk [vmem:[%s1201] sm:$0xf] %vm843, %v1197
          %1203 = vst.msk [vmem:[%s1201 + $0x4] sm:$0xf] %vm843, %v1198
          %s1204 = scalar_lea.vmem %s8, 12
          %v1205 = vld [vmem:[%s1204] sm:$0xf]
          %s1206 = scalar_lea.vmem %s9, 24
          %v1207 = vld [vmem:[%s1206] sm:$0xff]
          %1209 = vset.pattern.permute.xlu0 0
          %1210 = vperm.xlu0 %1209, %v1207
          %v1211 = vpop.permute.xlu0 %1210
          %v1214 = vsel %vm735, %v1205, 0
          %1216 = vmatprep.subr.bf16.mxu0 0
          %1217 = vmatpush1.bf16.xpose.msra.mxu0 0
          %1218 = vmatprep.subr.bf16.mxu0 0
          %1219 = vmatpush1.bf16.xpose.msra.mxu0 0
          %1220 = vmatprep.subr.bf16.mxu0 0
          %1221 = vmatpush1.bf16.xpose.msra.mxu0 0
          %1222 = vmatprep.subr.bf16.mxu0 0
          %1223 = vmatpush1.bf16.xpose.msra.mxu0 0
          %1224 = vmatprep.subr.bf16.mxu0 0
          %1225 = vmatpush1.bf16.xpose.msra.mxu0 0
          %1226 = vmatprep.subr.bf16.mxu0 0
          %1227 = vmatpush1.bf16.xpose.msra.mxu0 0
          %1228 = vmatprep.subr.bf16.mxu0 0
          %1229 = vmatpush1.bf16.xpose.msra.mxu0 0
          %1230 = vmatprep.subr.bf16.mxu0 0
          %1231 = vmatpush1.bf16.xpose.msra.mxu0 %v789
          %1232 = vmatprep.subr.bf16.mxu0 0
          %1233 = vmatpush2.bf16.xpose.msra.mxu0 0
          %1234 = vmatprep.subr.bf16.mxu0 0
          %1235 = vmatpush2.bf16.xpose.msra.mxu0 0
          %1236 = vmatprep.subr.bf16.mxu0 0
          %1237 = vmatpush2.bf16.xpose.msra.mxu0 0
          %1238 = vmatprep.subr.bf16.mxu0 0
          %1239 = vmatpush2.bf16.xpose.msra.mxu0 0
          %1240 = vmatprep.subr.bf16.mxu0 0
          %1241 = vmatpush2.bf16.xpose.msra.mxu0 0
          %1242 = vmatprep.subr.bf16.mxu0 0
          %1243 = vmatpush2.bf16.xpose.msra.mxu0 0
          %1244 = vmatprep.subr.bf16.mxu0 0
          %1245 = vmatpush2.bf16.xpose.msra.mxu0 0
          %1246 = vmatprep.subr.bf16.mxu0 0
          %1247 = vmatpush2.bf16.xpose.msra.mxu0 0
          %1248 = vmatprep.mubr.bf16.mxu0 0
          %1249 = vmatmul.mubr.bf16.gmra.mxu0 %v1214
          %v1250 = vpop.f32.mrf.mxu0
          %v1251 = vadd.f32 %v1211, %v1250
          %v1252 = vpop.f32.mrf.mxu0
          %v1253 = vpop.f32.mrf.mxu0
          %v1254 = vpop.f32.mrf.mxu0
          %1255 = vdwg.mxu0
          %v1256 = vpack.c.bf16 %v1251, %v1251
          %s1257 = scalar_lea.vmem [#allocation3], 12
          %1258 = vst.msk [vmem:[%s1257] sm:$0xf] %vm897, %v1256
        $region128: #{tpu_custom_call.1} parent=91 // pred_fallthru
          _
        %v1259 = vld [vmem:[%s720] sm:$0xff]
        %vm1260 = vcmask 261120
        %v1261 = vsel %vm1260, %v1259, 0.0
        %1262 = vadd.xlane.f32.xlu0 %v1261
        %v1263 = vpop.xlane.xlu0 %1262
        %v1264 = vrcp.pop 32.0
        %v1265 = vmul.f32 %v1263, %v1264
        %v1266 = vsub.f32 %v1259, %v1265
        %v1267 = vmul.f32 %v1266, %v1266
        %v1268 = vsel %vm1260, %v1267, 0.0
        %1269 = vadd.xlane.f32.xlu0 %v1268
        %v1270 = vpop.xlane.xlu0 %1269
        %v1271 = vmul.f32 %v1270, %v1264
        %v1272 = vadd.f32 %v1271, 1e-05
        %v1273 = vrsqrt.pop %v1272
        %v1274 = vmul.f32 %v1266, %v1273
        %v1276 = vlaneseq
        %v1277 = vshrl.u32 %v1276, 7
        %v1278 = vsub.s32 0, %v1277
        %v1279 = vrot.slane %v727, %v1278
        %v1281 = vmul.f32 %v1274, %v1279
        %v1283 = vlaneseq
        %v1284 = vshrl.u32 %v1283, 7
        %v1285 = vsub.s32 0, %v1284
        %v1286 = vrot.slane %v728, %v1285
        %v1288 = vadd.f32 %v1281, %v1286
        %v1289 = vpack.c.bf16 %v1288, %v1288
        %v1290 = vld [vmem:[%s4] sm:$0xf]
        %v1291 = vld [vmem:[#allocation10] sm:$0x1]
        %v1293 = vlaneseq
        %v1294 = vshrl.u32 %v1293, 7
        %v1295 = vsub.s32 0, %v1294
        %v1296 = vrot.slane %v1291, %v1295
        %v1299 = vsel %vm1260, %v1289, 0
        %v1302 = vsel %vm1260, %v1290, 0
        %1304 = vmatprep.subr.bf16.mxu0 0
        %1305 = vmatpush1.bf16.xpose.msra.mxu0 0
        %1306 = vmatprep.subr.bf16.mxu0 0
        %1307 = vmatpush1.bf16.xpose.msra.mxu0 0
        %1308 = vmatprep.subr.bf16.mxu0 0
        %1309 = vmatpush1.bf16.xpose.msra.mxu0 0
        %1310 = vmatprep.subr.bf16.mxu0 0
        %1311 = vmatpush1.bf16.xpose.msra.mxu0 0
        %1312 = vmatprep.subr.bf16.mxu0 0
        %1313 = vmatpush1.bf16.xpose.msra.mxu0 0
        %1314 = vmatprep.subr.bf16.mxu0 0
        %1315 = vmatpush1.bf16.xpose.msra.mxu0 0
        %1316 = vmatprep.subr.bf16.mxu0 0
        %1317 = vmatpush1.bf16.xpose.msra.mxu0 0
        %1318 = vmatprep.subr.bf16.mxu0 0
        %1319 = vmatpush1.bf16.xpose.msra.mxu0 %v1302
        %1320 = vmatprep.subr.bf16.mxu0 0
        %1321 = vmatpush2.bf16.xpose.msra.mxu0 0
        %1322 = vmatprep.subr.bf16.mxu0 0
        %1323 = vmatpush2.bf16.xpose.msra.mxu0 0
        %1324 = vmatprep.subr.bf16.mxu0 0
        %1325 = vmatpush2.bf16.xpose.msra.mxu0 0
        %1326 = vmatprep.subr.bf16.mxu0 0
        %1327 = vmatpush2.bf16.xpose.msra.mxu0 0
        %1328 = vmatprep.subr.bf16.mxu0 0
        %1329 = vmatpush2.bf16.xpose.msra.mxu0 0
        %1330 = vmatprep.subr.bf16.mxu0 0
        %1331 = vmatpush2.bf16.xpose.msra.mxu0 0
        %1332 = vmatprep.subr.bf16.mxu0 0
        %1333 = vmatpush2.bf16.xpose.msra.mxu0 0
        %1334 = vmatprep.subr.bf16.mxu0 0
        %1335 = vmatpush2.bf16.xpose.msra.mxu0 0
        %1336 = vmatprep.mubr.bf16.mxu0 0
        %1337 = vmatmul.mubr.bf16.gmra.mxu0 %v1299
        %v1338 = vpop.f32.mrf.mxu0
        %v1339 = vadd.f32 %v1296, %v1338
        %v1340 = vpop.f32.mrf.mxu0
        %v1341 = vpop.f32.mrf.mxu0
        %v1342 = vpop.f32.mrf.mxu0
        %1343 = vdwg.mxu0
        %v1344 = vmul.f32 %v1339, 0.35355338
        %v1345 = vpack.c.bf16 %v1344, %v1344
        %vm1346 = vcmask 60416
        %1347 = vst.msk [vmem:[#allocation4] sm:$0xf] %vm1346, %v1345
        %s1348 = scalar_lea.vmem %s4, 4
        %v1349 = vld [vmem:[%s1348] sm:$0xf]
        %s1350 = scalar_lea.vmem [#allocation10], 1
        %v1351 = vld [vmem:[%s1350] sm:$0x1]
        %v1353 = vlaneseq
        %v1354 = vshrl.u32 %v1353, 7
        %v1355 = vsub.s32 0, %v1354
        %v1356 = vrot.slane %v1351, %v1355
        %v1359 = vsel %vm1260, %v1349, 0
        %1361 = vmatprep.subr.bf16.mxu0 0
        %1362 = vmatpush1.bf16.xpose.msra.mxu0 0
        %1363 = vmatprep.subr.bf16.mxu0 0
        %1364 = vmatpush1.bf16.xpose.msra.mxu0 0
        %1365 = vmatprep.subr.bf16.mxu0 0
        %1366 = vmatpush1.bf16.xpose.msra.mxu0 0
        %1367 = vmatprep.subr.bf16.mxu0 0
        %1368 = vmatpush1.bf16.xpose.msra.mxu0 0
        %1369 = vmatprep.subr.bf16.mxu0 0
        %1370 = vmatpush1.bf16.xpose.msra.mxu0 0
        %1371 = vmatprep.subr.bf16.mxu0 0
        %1372 = vmatpush1.bf16.xpose.msra.mxu0 0
        %1373 = vmatprep.subr.bf16.mxu0 0
        %1374 = vmatpush1.bf16.xpose.msra.mxu0 0
        %1375 = vmatprep.subr.bf16.mxu0 0
        %1376 = vmatpush1.bf16.xpose.msra.mxu0 %v1359
        %1377 = vmatprep.subr.bf16.mxu0 0
        %1378 = vmatpush2.bf16.xpose.msra.mxu0 0
        %1379 = vmatprep.subr.bf16.mxu0 0
        %1380 = vmatpush2.bf16.xpose.msra.mxu0 0
        %1381 = vmatprep.subr.bf16.mxu0 0
        %1382 = vmatpush2.bf16.xpose.msra.mxu0 0
        %1383 = vmatprep.subr.bf16.mxu0 0
        %1384 = vmatpush2.bf16.xpose.msra.mxu0 0
        %1385 = vmatprep.subr.bf16.mxu0 0
        %1386 = vmatpush2.bf16.xpose.msra.mxu0 0
        %1387 = vmatprep.subr.bf16.mxu0 0
        %1388 = vmatpush2.bf16.xpose.msra.mxu0 0
        %1389 = vmatprep.subr.bf16.mxu0 0
        %1390 = vmatpush2.bf16.xpose.msra.mxu0 0
        %1391 = vmatprep.subr.bf16.mxu0 0
        %1392 = vmatpush2.bf16.xpose.msra.mxu0 0
        %1393 = vmatprep.mubr.bf16.mxu0 0
        %1394 = vmatmul.mubr.bf16.gmra.mxu0 %v1299
        %v1395 = vpop.f32.mrf.mxu0
        %v1396 = vadd.f32 %v1356, %v1395
        %v1397 = vpop.f32.mrf.mxu0
        %v1398 = vpop.f32.mrf.mxu0
        %v1399 = vpop.f32.mrf.mxu0
        %1400 = vdwg.mxu0
        %v1401 = vmul.f32 %v1396, 0.35355338
        %v1402 = vpack.c.bf16 %v1401, %v1401
        %s1403 = scalar_lea.vmem [#allocation4], 4
        %1404 = vst.msk [vmem:[%s1403] sm:$0xf] %vm1346, %v1402
        %s1405 = scalar_lea.vmem %s4, 8
        %v1406 = vld [vmem:[%s1405] sm:$0xf]
        %s1407 = scalar_lea.vmem [#allocation10], 2
        %v1408 = vld [vmem:[%s1407] sm:$0x1]
        %v1410 = vlaneseq
        %v1411 = vshrl.u32 %v1410, 7
        %v1412 = vsub.s32 0, %v1411
        %v1413 = vrot.slane %v1408, %v1412
        %v1416 = vsel %vm1260, %v1406, 0
        %1418 = vmatprep.subr.bf16.mxu0 0
        %1419 = vmatpush1.bf16.xpose.msra.mxu0 0
        %1420 = vmatprep.subr.bf16.mxu0 0
        %1421 = vmatpush1.bf16.xpose.msra.mxu0 0
        %1422 = vmatprep.subr.bf16.mxu0 0
        %1423 = vmatpush1.bf16.xpose.msra.mxu0 0
        %1424 = vmatprep.subr.bf16.mxu0 0
        %1425 = vmatpush1.bf16.xpose.msra.mxu0 0
        %1426 = vmatprep.subr.bf16.mxu0 0
        %1427 = vmatpush1.bf16.xpose.msra.mxu0 0
        %1428 = vmatprep.subr.bf16.mxu0 0
        %1429 = vmatpush1.bf16.xpose.msra.mxu0 0
        %1430 = vmatprep.subr.bf16.mxu0 0
        %1431 = vmatpush1.bf16.xpose.msra.mxu0 0
        %1432 = vmatprep.subr.bf16.mxu0 0
        %1433 = vmatpush1.bf16.xpose.msra.mxu0 %v1416
        %1434 = vmatprep.subr.bf16.mxu0 0
        %1435 = vmatpush2.bf16.xpose.msra.mxu0 0
        %1436 = vmatprep.subr.bf16.mxu0 0
        %1437 = vmatpush2.bf16.xpose.msra.mxu0 0
        %1438 = vmatprep.subr.bf16.mxu0 0
        %1439 = vmatpush2.bf16.xpose.msra.mxu0 0
        %1440 = vmatprep.subr.bf16.mxu0 0
        %1441 = vmatpush2.bf16.xpose.msra.mxu0 0
        %1442 = vmatprep.subr.bf16.mxu0 0
        %1443 = vmatpush2.bf16.xpose.msra.mxu0 0
        %1444 = vmatprep.subr.bf16.mxu0 0
        %1445 = vmatpush2.bf16.xpose.msra.mxu0 0
        %1446 = vmatprep.subr.bf16.mxu0 0
        %1447 = vmatpush2.bf16.xpose.msra.mxu0 0
        %1448 = vmatprep.subr.bf16.mxu0 0
        %1449 = vmatpush2.bf16.xpose.msra.mxu0 0
        %1450 = vmatprep.mubr.bf16.mxu0 0
        %1451 = vmatmul.mubr.bf16.gmra.mxu0 %v1299
        %v1452 = vpop.f32.mrf.mxu0
        %v1453 = vadd.f32 %v1413, %v1452
        %v1454 = vpop.f32.mrf.mxu0
        %v1455 = vpop.f32.mrf.mxu0
        %v1456 = vpop.f32.mrf.mxu0
        %1457 = vdwg.mxu0
        %v1458 = vmul.f32 %v1453, 0.35355338
        %v1459 = vpack.c.bf16 %v1458, %v1458
        %s1460 = scalar_lea.vmem [#allocation4], 8
        %1461 = vst.msk [vmem:[%s1460] sm:$0xf] %vm1346, %v1459
        %s1462 = scalar_lea.vmem %s4, 12
        %v1463 = vld [vmem:[%s1462] sm:$0xf]
        %s1464 = scalar_lea.vmem [#allocation10], 3
        %v1465 = vld [vmem:[%s1464] sm:$0x1]
        %v1467 = vlaneseq
        %v1468 = vshrl.u32 %v1467, 7
        %v1469 = vsub.s32 0, %v1468
        %v1470 = vrot.slane %v1465, %v1469
        %v1473 = vsel %vm1260, %v1463, 0
        %1475 = vmatprep.subr.bf16.mxu0 0
        %1476 = vmatpush1.bf16.xpose.msra.mxu0 0
        %1477 = vmatprep.subr.bf16.mxu0 0
        %1478 = vmatpush1.bf16.xpose.msra.mxu0 0
        %1479 = vmatprep.subr.bf16.mxu0 0
        %1480 = vmatpush1.bf16.xpose.msra.mxu0 0
        %1481 = vmatprep.subr.bf16.mxu0 0
        %1482 = vmatpush1.bf16.xpose.msra.mxu0 0
        %1483 = vmatprep.subr.bf16.mxu0 0
        %1484 = vmatpush1.bf16.xpose.msra.mxu0 0
        %1485 = vmatprep.subr.bf16.mxu0 0
        %1486 = vmatpush1.bf16.xpose.msra.mxu0 0
        %1487 = vmatprep.subr.bf16.mxu0 0
        %1488 = vmatpush1.bf16.xpose.msra.mxu0 0
        %1489 = vmatprep.subr.bf16.mxu0 0
        %1490 = vmatpush1.bf16.xpose.msra.mxu0 %v1473
        %1491 = vmatprep.subr.bf16.mxu0 0
        %1492 = vmatpush2.bf16.xpose.msra.mxu0 0
        %1493 = vmatprep.subr.bf16.mxu0 0
        %1494 = vmatpush2.bf16.xpose.msra.mxu0 0
        %1495 = vmatprep.subr.bf16.mxu0 0
        %1496 = vmatpush2.bf16.xpose.msra.mxu0 0
        %1497 = vmatprep.subr.bf16.mxu0 0
        %1498 = vmatpush2.bf16.xpose.msra.mxu0 0
        %1499 = vmatprep.subr.bf16.mxu0 0
        %1500 = vmatpush2.bf16.xpose.msra.mxu0 0
        %1501 = vmatprep.subr.bf16.mxu0 0
        %1502 = vmatpush2.bf16.xpose.msra.mxu0 0
        %1503 = vmatprep.subr.bf16.mxu0 0
        %1504 = vmatpush2.bf16.xpose.msra.mxu0 0
        %1505 = vmatprep.subr.bf16.mxu0 0
        %1506 = vmatpush2.bf16.xpose.msra.mxu0 0
        %1507 = vmatprep.mubr.bf16.mxu0 0
        %1508 = vmatmul.mubr.bf16.gmra.mxu0 %v1299
        %v1509 = vpop.f32.mrf.mxu0
        %v1510 = vadd.f32 %v1470, %v1509
        %v1511 = vpop.f32.mrf.mxu0
        %v1512 = vpop.f32.mrf.mxu0
        %v1513 = vpop.f32.mrf.mxu0
        %1514 = vdwg.mxu0
        %v1515 = vmul.f32 %v1510, 0.35355338
        %v1516 = vpack.c.bf16 %v1515, %v1515
        %s1517 = scalar_lea.vmem [#allocation4], 12
        %1518 = vst.msk [vmem:[%s1517] sm:$0xf] %vm1346, %v1516
        %v1519 = vld [vmem:[#allocation4] sm:$0xf]
        %v1520 = vld [vmem:[#allocation4 + $0x4] sm:$0xf]
        %v1521 = vld [vmem:[#allocation4 + $0x8] sm:$0xf]
        %v1522 = vld [vmem:[#allocation4 + $0xc] sm:$0xf]
        %v1523 = vld [vmem:[#allocation2] sm:$0xf]
        %v1524 = vld [vmem:[#allocation2 + $0x4] sm:$0xf]
        %v1525 = vld [vmem:[#allocation2 + $0x8] sm:$0xf]
        %v1526 = vld [vmem:[#allocation2 + $0xc] sm:$0xf]
        %v1527 = vld [vmem:[#allocation2 + $0x10] sm:$0xf]
        %v1528 = vld [vmem:[#allocation2 + $0x14] sm:$0xf]
        %v1529 = vld [vmem:[#allocation2 + $0x18] sm:$0xf]
        %v1530 = vld [vmem:[#allocation2 + $0x1c] sm:$0xf]
        %v1531 = vld [vmem:[#allocation3] sm:$0xf]
        %v1532 = vld [vmem:[#allocation3 + $0x4] sm:$0xf]
        %v1533 = vld [vmem:[#allocation3 + $0x8] sm:$0xf]
        %v1534 = vld [vmem:[#allocation3 + $0xc] sm:$0xf]
        %v1537 = vunpack.c.l.b16 %v1523
        %v1538 = vunpack.c.l.b16 %v1524
        %v1539 = vpack.c.b16 %v1538, %v1537
        %vm1540 = vcmask 64512
        %v1542 = vsel %vm1540, %v1519, 0
        %v1545 = vsel %vm1540, %v1539, 0
        %1547 = vmatprep.subr.bf16.mxu0 0
        %1548 = vmatpush1.bf16.xpose.msra.mxu0 0
        %1549 = vmatprep.subr.bf16.mxu0 0
        %1550 = vmatpush1.bf16.xpose.msra.mxu0 0
        %1551 = vmatprep.subr.bf16.mxu0 0
        %1552 = vmatpush1.bf16.xpose.msra.mxu0 0
        %1553 = vmatprep.subr.bf16.mxu0 0
        %1554 = vmatpush1.bf16.xpose.msra.mxu0 0
        %1555 = vmatprep.subr.bf16.mxu0 0
        %1556 = vmatpush1.bf16.xpose.msra.mxu0 0
        %1557 = vmatprep.subr.bf16.mxu0 0
        %1558 = vmatpush1.bf16.xpose.msra.mxu0 0
        %1559 = vmatprep.subr.bf16.mxu0 0
        %1560 = vmatpush1.bf16.xpose.msra.mxu0 0
        %1561 = vmatprep.subr.bf16.mxu0 0
        %1562 = vmatpush1.bf16.xpose.msra.mxu0 %v1545
        %1563 = vmatprep.subr.bf16.mxu0 0
        %1564 = vmatpush2.bf16.xpose.msra.mxu0 0
        %1565 = vmatprep.subr.bf16.mxu0 0
        %1566 = vmatpush2.bf16.xpose.msra.mxu0 0
        %1567 = vmatprep.subr.bf16.mxu0 0
        %1568 = vmatpush2.bf16.xpose.msra.mxu0 0
        %1569 = vmatprep.subr.bf16.mxu0 0
        %1570 = vmatpush2.bf16.xpose.msra.mxu0 0
        %1571 = vmatprep.subr.bf16.mxu0 0
        %1572 = vmatpush2.bf16.xpose.msra.mxu0 0
        %1573 = vmatprep.subr.bf16.mxu0 0
        %1574 = vmatpush2.bf16.xpose.msra.mxu0 0
        %1575 = vmatprep.subr.bf16.mxu0 0
        %1576 = vmatpush2.bf16.xpose.msra.mxu0 0
        %1577 = vmatprep.subr.bf16.mxu0 0
        %1578 = vmatpush2.bf16.xpose.msra.mxu0 0
        %1579 = vmatprep.mubr.bf16.mxu0 0
        %1580 = vmatmul.mubr.bf16.gmra.mxu0 %v1542
        %v1581 = vpop.f32.mrf.mxu0
        %v1582 = vadd.f32 0.0, %v1581
        %v1583 = vpop.f32.mrf.mxu0
        %v1584 = vpop.f32.mrf.mxu0
        %v1585 = vpop.f32.mrf.mxu0
        %1586 = vdwg.mxu0
        %v1589 = vunpack.c.l.b16 %v1525
        %v1590 = vunpack.c.l.b16 %v1526
        %v1591 = vpack.c.b16 %v1590, %v1589
        %v1593 = vsel %vm1540, %v1520, 0
        %v1596 = vsel %vm1540, %v1591, 0
        %1598 = vmatprep.subr.bf16.mxu0 0
        %1599 = vmatpush1.bf16.xpose.msra.mxu0 0
        %1600 = vmatprep.subr.bf16.mxu0 0
        %1601 = vmatpush1.bf16.xpose.msra.mxu0 0
        %1602 = vmatprep.subr.bf16.mxu0 0
        %1603 = vmatpush1.bf16.xpose.msra.mxu0 0
        %1604 = vmatprep.subr.bf16.mxu0 0
        %1605 = vmatpush1.bf16.xpose.msra.mxu0 0
        %1606 = vmatprep.subr.bf16.mxu0 0
        %1607 = vmatpush1.bf16.xpose.msra.mxu0 0
        %1608 = vmatprep.subr.bf16.mxu0 0
        %1609 = vmatpush1.bf16.xpose.msra.mxu0 0
        %1610 = vmatprep.subr.bf16.mxu0 0
        %1611 = vmatpush1.bf16.xpose.msra.mxu0 0
        %1612 = vmatprep.subr.bf16.mxu0 0
        %1613 = vmatpush1.bf16.xpose.msra.mxu0 %v1596
        %1614 = vmatprep.subr.bf16.mxu0 0
        %1615 = vmatpush2.bf16.xpose.msra.mxu0 0
        %1616 = vmatprep.subr.bf16.mxu0 0
        %1617 = vmatpush2.bf16.xpose.msra.mxu0 0
        %1618 = vmatprep.subr.bf16.mxu0 0
        %1619 = vmatpush2.bf16.xpose.msra.mxu0 0
        %1620 = vmatprep.subr.bf16.mxu0 0
        %1621 = vmatpush2.bf16.xpose.msra.mxu0 0
        %1622 = vmatprep.subr.bf16.mxu0 0
        %1623 = vmatpush2.bf16.xpose.msra.mxu0 0
        %1624 = vmatprep.subr.bf16.mxu0 0
        %1625 = vmatpush2.bf16.xpose.msra.mxu0 0
        %1626 = vmatprep.subr.bf16.mxu0 0
        %1627 = vmatpush2.bf16.xpose.msra.mxu0 0
        %1628 = vmatprep.subr.bf16.mxu0 0
        %1629 = vmatpush2.bf16.xpose.msra.mxu0 0
        %1630 = vmatprep.mubr.bf16.mxu0 0
        %1631 = vmatmul.mubr.bf16.gmra.mxu0 %v1593
        %v1632 = vpop.f32.mrf.mxu0
        %v1633 = vadd.f32 0.0, %v1632
        %v1634 = vpop.f32.mrf.mxu0
        %v1635 = vpop.f32.mrf.mxu0
        %v1636 = vpop.f32.mrf.mxu0
        %1637 = vdwg.mxu0
        %v1640 = vunpack.c.l.b16 %v1527
        %v1641 = vunpack.c.l.b16 %v1528
        %v1642 = vpack.c.b16 %v1641, %v1640
        %v1644 = vsel %vm1540, %v1521, 0
        %v1647 = vsel %vm1540, %v1642, 0
        %1649 = vmatprep.subr.bf16.mxu0 0
        %1650 = vmatpush1.bf16.xpose.msra.mxu0 0
        %1651 = vmatprep.subr.bf16.mxu0 0
        %1652 = vmatpush1.bf16.xpose.msra.mxu0 0
        %1653 = vmatprep.subr.bf16.mxu0 0
        %1654 = vmatpush1.bf16.xpose.msra.mxu0 0
        %1655 = vmatprep.subr.bf16.mxu0 0
        %1656 = vmatpush1.bf16.xpose.msra.mxu0 0
        %1657 = vmatprep.subr.bf16.mxu0 0
        %1658 = vmatpush1.bf16.xpose.msra.mxu0 0
        %1659 = vmatprep.subr.bf16.mxu0 0
        %1660 = vmatpush1.bf16.xpose.msra.mxu0 0
        %1661 = vmatprep.subr.bf16.mxu0 0
        %1662 = vmatpush1.bf16.xpose.msra.mxu0 0
        %1663 = vmatprep.subr.bf16.mxu0 0
        %1664 = vmatpush1.bf16.xpose.msra.mxu0 %v1647
        %1665 = vmatprep.subr.bf16.mxu0 0
        %1666 = vmatpush2.bf16.xpose.msra.mxu0 0
        %1667 = vmatprep.subr.bf16.mxu0 0
        %1668 = vmatpush2.bf16.xpose.msra.mxu0 0
        %1669 = vmatprep.subr.bf16.mxu0 0
        %1670 = vmatpush2.bf16.xpose.msra.mxu0 0
        %1671 = vmatprep.subr.bf16.mxu0 0
        %1672 = vmatpush2.bf16.xpose.msra.mxu0 0
        %1673 = vmatprep.subr.bf16.mxu0 0
        %1674 = vmatpush2.bf16.xpose.msra.mxu0 0
        %1675 = vmatprep.subr.bf16.mxu0 0
        %1676 = vmatpush2.bf16.xpose.msra.mxu0 0
        %1677 = vmatprep.subr.bf16.mxu0 0
        %1678 = vmatpush2.bf16.xpose.msra.mxu0 0
        %1679 = vmatprep.subr.bf16.mxu0 0
        %1680 = vmatpush2.bf16.xpose.msra.mxu0 0
        %1681 = vmatprep.mubr.bf16.mxu0 0
        %1682 = vmatmul.mubr.bf16.gmra.mxu0 %v1644
        %v1683 = vpop.f32.mrf.mxu0
        %v1684 = vadd.f32 0.0, %v1683
        %v1685 = vpop.f32.mrf.mxu0
        %v1686 = vpop.f32.mrf.mxu0
        %v1687 = vpop.f32.mrf.mxu0
        %1688 = vdwg.mxu0
        %v1691 = vunpack.c.l.b16 %v1529
        %v1692 = vunpack.c.l.b16 %v1530
        %v1693 = vpack.c.b16 %v1692, %v1691
        %v1695 = vsel %vm1540, %v1522, 0
        %v1698 = vsel %vm1540, %v1693, 0
        %1700 = vmatprep.subr.bf16.mxu0 0
        %1701 = vmatpush1.bf16.xpose.msra.mxu0 0
        %1702 = vmatprep.subr.bf16.mxu0 0
        %1703 = vmatpush1.bf16.xpose.msra.mxu0 0
        %1704 = vmatprep.subr.bf16.mxu0 0
        %1705 = vmatpush1.bf16.xpose.msra.mxu0 0
        %1706 = vmatprep.subr.bf16.mxu0 0
        %1707 = vmatpush1.bf16.xpose.msra.mxu0 0
        %1708 = vmatprep.subr.bf16.mxu0 0
        %1709 = vmatpush1.bf16.xpose.msra.mxu0 0
        %1710 = vmatprep.subr.bf16.mxu0 0
        %1711 = vmatpush1.bf16.xpose.msra.mxu0 0
        %1712 = vmatprep.subr.bf16.mxu0 0
        %1713 = vmatpush1.bf16.xpose.msra.mxu0 0
        %1714 = vmatprep.subr.bf16.mxu0 0
        %1715 = vmatpush1.bf16.xpose.msra.mxu0 %v1698
        %1716 = vmatprep.subr.bf16.mxu0 0
        %1717 = vmatpush2.bf16.xpose.msra.mxu0 0
        %1718 = vmatprep.subr.bf16.mxu0 0
        %1719 = vmatpush2.bf16.xpose.msra.mxu0 0
        %1720 = vmatprep.subr.bf16.mxu0 0
        %1721 = vmatpush2.bf16.xpose.msra.mxu0 0
        %1722 = vmatprep.subr.bf16.mxu0 0
        %1723 = vmatpush2.bf16.xpose.msra.mxu0 0
        %1724 = vmatprep.subr.bf16.mxu0 0
        %1725 = vmatpush2.bf16.xpose.msra.mxu0 0
        %1726 = vmatprep.subr.bf16.mxu0 0
        %1727 = vmatpush2.bf16.xpose.msra.mxu0 0
        %1728 = vmatprep.subr.bf16.mxu0 0
        %1729 = vmatpush2.bf16.xpose.msra.mxu0 0
        %1730 = vmatprep.subr.bf16.mxu0 0
        %1731 = vmatpush2.bf16.xpose.msra.mxu0 0
        %1732 = vmatprep.mubr.bf16.mxu0 0
        %1733 = vmatmul.mubr.bf16.gmra.mxu0 %v1695
        %v1734 = vpop.f32.mrf.mxu0
        %v1735 = vadd.f32 0.0, %v1734
        %v1736 = vpop.f32.mrf.mxu0
        %v1737 = vpop.f32.mrf.mxu0
        %v1738 = vpop.f32.mrf.mxu0
        %1739 = vdwg.mxu0
        %vm1740 = vcmask 130048
        %v1741 = vsel %vm1740, %v1582, -inf
        %1742 = vmax.xlane.f32.xlu0 %v1741
        %v1743 = vpop.xlane.xlu0 %1742
        %v1744 = vsel %vm1740, %v1633, -inf
        %1745 = vmax.xlane.f32.xlu0 %v1744
        %v1746 = vpop.xlane.xlu0 %1745
        %v1747 = vsel %vm1740, %v1684, -inf
        %1748 = vmax.xlane.f32.xlu0 %v1747
        %v1749 = vpop.xlane.xlu0 %1748
        %v1750 = vsel %vm1740, %v1735, -inf
        %1751 = vmax.xlane.f32.xlu0 %v1750
        %v1752 = vpop.xlane.xlu0 %1751
        %v1753 = vsub.f32 %v1582, %v1743
        %v1754 = vsub.f32 %v1633, %v1746
        %v1755 = vsub.f32 %v1684, %v1749
        %v1756 = vsub.f32 %v1735, %v1752
        %v1757 = vmul.f32 %v1753, 1.442695
        %v1758 = vpow.pop %v1757
        %v1759 = vmul.f32 %v1754, 1.442695
        %v1760 = vpow.pop %v1759
        %v1761 = vmul.f32 %v1755, 1.442695
        %v1762 = vpow.pop %v1761
        %v1763 = vmul.f32 %v1756, 1.442695
        %v1764 = vpow.pop %v1763
        %v1765 = vsel %vm1740, %v1758, 0.0
        %1766 = vadd.xlane.f32.xlu0 %v1765
        %v1767 = vpop.xlane.xlu0 %1766
        %v1768 = vsel %vm1740, %v1760, 0.0
        %1769 = vadd.xlane.f32.xlu0 %v1768
        %v1770 = vpop.xlane.xlu0 %1769
        %v1771 = vsel %vm1740, %v1762, 0.0
        %1772 = vadd.xlane.f32.xlu0 %v1771
        %v1773 = vpop.xlane.xlu0 %1772
        %v1774 = vsel %vm1740, %v1764, 0.0
        %1775 = vadd.xlane.f32.xlu0 %v1774
        %v1776 = vpop.xlane.xlu0 %1775
        %v1777 = vrcp.pop %v1767
        %v1778 = vrcp.pop %v1770
        %v1779 = vrcp.pop %v1773
        %v1780 = vrcp.pop %v1776
        %v1781 = vmul.f32 %v1758, %v1777
        %v1782 = vmul.f32 %v1760, %v1778
        %v1783 = vmul.f32 %v1762, %v1779
        %v1784 = vmul.f32 %v1764, %v1780
        %v1785 = vpack.c.bf16 %v1781, %v1781
        %v1786 = vpack.c.bf16 %v1782, %v1782
        %v1787 = vpack.c.bf16 %v1783, %v1783
        %v1788 = vpack.c.bf16 %v1784, %v1784
        %v1790 = vsel %vm1740, %v1531, 0
        %v1793 = vsel %vm1740, %v1785, 0
        %1795 = vmatprep.subr.bf16.mxu0 0
        %1796 = vmatpush1.bf16.xpose.msra.mxu0 0
        %1797 = vmatprep.subr.bf16.mxu0 0
        %1798 = vmatpush1.bf16.xpose.msra.mxu0 0
        %1799 = vmatprep.subr.bf16.mxu0 0
        %1800 = vmatpush1.bf16.xpose.msra.mxu0 0
        %1801 = vmatprep.subr.bf16.mxu0 0
        %1802 = vmatpush1.bf16.xpose.msra.mxu0 0
        %1803 = vmatprep.subr.bf16.mxu0 0
        %1804 = vmatpush1.bf16.xpose.msra.mxu0 0
        %1805 = vmatprep.subr.bf16.mxu0 0
        %1806 = vmatpush1.bf16.xpose.msra.mxu0 0
        %1807 = vmatprep.subr.bf16.mxu0 0
        %1808 = vmatpush1.bf16.xpose.msra.mxu0 0
        %1809 = vmatprep.subr.bf16.mxu0 0
        %1810 = vmatpush1.bf16.xpose.msra.mxu0 %v1793
        %1811 = vmatprep.subr.bf16.mxu0 0
        %1812 = vmatpush2.bf16.xpose.msra.mxu0 0
        %1813 = vmatprep.subr.bf16.mxu0 0
        %1814 = vmatpush2.bf16.xpose.msra.mxu0 0
        %1815 = vmatprep.subr.bf16.mxu0 0
        %1816 = vmatpush2.bf16.xpose.msra.mxu0 0
        %1817 = vmatprep.subr.bf16.mxu0 0
        %1818 = vmatpush2.bf16.xpose.msra.mxu0 0
        %1819 = vmatprep.subr.bf16.mxu0 0
        %1820 = vmatpush2.bf16.xpose.msra.mxu0 0
        %1821 = vmatprep.subr.bf16.mxu0 0
        %1822 = vmatpush2.bf16.xpose.msra.mxu0 0
        %1823 = vmatprep.subr.bf16.mxu0 0
        %1824 = vmatpush2.bf16.xpose.msra.mxu0 0
        %1825 = vmatprep.subr.bf16.mxu0 0
        %1826 = vmatpush2.bf16.xpose.msra.mxu0 0
        %1827 = vmatprep.mubr.bf16.mxu0 0
        %1828 = vmatmul.mubr.bf16.gmra.mxu0 %v1790
        %v1829 = vpop.f32.mrf.mxu0
        %v1830 = vadd.f32 0.0, %v1829
        %v1831 = vpop.f32.mrf.mxu0
        %v1832 = vpop.f32.mrf.mxu0
        %v1833 = vpop.f32.mrf.mxu0
        %1834 = vdwg.mxu0
        %v1836 = vsel %vm1740, %v1532, 0
        %v1839 = vsel %vm1740, %v1786, 0
        %1841 = vmatprep.subr.bf16.mxu0 0
        %1842 = vmatpush1.bf16.xpose.msra.mxu0 0
        %1843 = vmatprep.subr.bf16.mxu0 0
        %1844 = vmatpush1.bf16.xpose.msra.mxu0 0
        %1845 = vmatprep.subr.bf16.mxu0 0
        %1846 = vmatpush1.bf16.xpose.msra.mxu0 0
        %1847 = vmatprep.subr.bf16.mxu0 0
        %1848 = vmatpush1.bf16.xpose.msra.mxu0 0
        %1849 = vmatprep.subr.bf16.mxu0 0
        %1850 = vmatpush1.bf16.xpose.msra.mxu0 0
        %1851 = vmatprep.subr.bf16.mxu0 0
        %1852 = vmatpush1.bf16.xpose.msra.mxu0 0
        %1853 = vmatprep.subr.bf16.mxu0 0
        %1854 = vmatpush1.bf16.xpose.msra.mxu0 0
        %1855 = vmatprep.subr.bf16.mxu0 0
        %1856 = vmatpush1.bf16.xpose.msra.mxu0 %v1839
        %1857 = vmatprep.subr.bf16.mxu0 0
        %1858 = vmatpush2.bf16.xpose.msra.mxu0 0
        %1859 = vmatprep.subr.bf16.mxu0 0
        %1860 = vmatpush2.bf16.xpose.msra.mxu0 0
        %1861 = vmatprep.subr.bf16.mxu0 0
        %1862 = vmatpush2.bf16.xpose.msra.mxu0 0
        %1863 = vmatprep.subr.bf16.mxu0 0
        %1864 = vmatpush2.bf16.xpose.msra.mxu0 0
        %1865 = vmatprep.subr.bf16.mxu0 0
        %1866 = vmatpush2.bf16.xpose.msra.mxu0 0
        %1867 = vmatprep.subr.bf16.mxu0 0
        %1868 = vmatpush2.bf16.xpose.msra.mxu0 0
        %1869 = vmatprep.subr.bf16.mxu0 0
        %1870 = vmatpush2.bf16.xpose.msra.mxu0 0
        %1871 = vmatprep.subr.bf16.mxu0 0
        %1872 = vmatpush2.bf16.xpose.msra.mxu0 0
        %1873 = vmatprep.mubr.bf16.mxu0 0
        %1874 = vmatmul.mubr.bf16.gmra.mxu0 %v1836
        %v1875 = vpop.f32.mrf.mxu0
        %v1876 = vadd.f32 0.0, %v1875
        %v1877 = vpop.f32.mrf.mxu0
        %v1878 = vpop.f32.mrf.mxu0
        %v1879 = vpop.f32.mrf.mxu0
        %1880 = vdwg.mxu0
        %v1882 = vsel %vm1740, %v1533, 0
        %v1885 = vsel %vm1740, %v1787, 0
        %1887 = vmatprep.subr.bf16.mxu0 0
        %1888 = vmatpush1.bf16.xpose.msra.mxu0 0
        %1889 = vmatprep.subr.bf16.mxu0 0
        %1890 = vmatpush1.bf16.xpose.msra.mxu0 0
        %1891 = vmatprep.subr.bf16.mxu0 0
        %1892 = vmatpush1.bf16.xpose.msra.mxu0 0
        %1893 = vmatprep.subr.bf16.mxu0 0
        %1894 = vmatpush1.bf16.xpose.msra.mxu0 0
        %1895 = vmatprep.subr.bf16.mxu0 0
        %1896 = vmatpush1.bf16.xpose.msra.mxu0 0
        %1897 = vmatprep.subr.bf16.mxu0 0
        %1898 = vmatpush1.bf16.xpose.msra.mxu0 0
        %1899 = vmatprep.subr.bf16.mxu0 0
        %1900 = vmatpush1.bf16.xpose.msra.mxu0 0
        %1901 = vmatprep.subr.bf16.mxu0 0
        %1902 = vmatpush1.bf16.xpose.msra.mxu0 %v1885
        %1903 = vmatprep.subr.bf16.mxu0 0
        %1904 = vmatpush2.bf16.xpose.msra.mxu0 0
        %1905 = vmatprep.subr.bf16.mxu0 0
        %1906 = vmatpush2.bf16.xpose.msra.mxu0 0
        %1907 = vmatprep.subr.bf16.mxu0 0
        %1908 = vmatpush2.bf16.xpose.msra.mxu0 0
        %1909 = vmatprep.subr.bf16.mxu0 0
        %1910 = vmatpush2.bf16.xpose.msra.mxu0 0
        %1911 = vmatprep.subr.bf16.mxu0 0
        %1912 = vmatpush2.bf16.xpose.msra.mxu0 0
        %1913 = vmatprep.subr.bf16.mxu0 0
        %1914 = vmatpush2.bf16.xpose.msra.mxu0 0
        %1915 = vmatprep.subr.bf16.mxu0 0
        %1916 = vmatpush2.bf16.xpose.msra.mxu0 0
        %1917 = vmatprep.subr.bf16.mxu0 0
        %1918 = vmatpush2.bf16.xpose.msra.mxu0 0
        %1919 = vmatprep.mubr.bf16.mxu0 0
        %1920 = vmatmul.mubr.bf16.gmra.mxu0 %v1882
        %v1921 = vpop.f32.mrf.mxu0
        %v1922 = vadd.f32 0.0, %v1921
        %v1923 = vpop.f32.mrf.mxu0
        %v1924 = vpop.f32.mrf.mxu0
        %v1925 = vpop.f32.mrf.mxu0
        %1926 = vdwg.mxu0
        %v1928 = vsel %vm1740, %v1534, 0
        %v1931 = vsel %vm1740, %v1788, 0
        %1933 = vmatprep.subr.bf16.mxu0 0
        %1934 = vmatpush1.bf16.xpose.msra.mxu0 0
        %1935 = vmatprep.subr.bf16.mxu0 0
        %1936 = vmatpush1.bf16.xpose.msra.mxu0 0
        %1937 = vmatprep.subr.bf16.mxu0 0
        %1938 = vmatpush1.bf16.xpose.msra.mxu0 0
        %1939 = vmatprep.subr.bf16.mxu0 0
        %1940 = vmatpush1.bf16.xpose.msra.mxu0 0
        %1941 = vmatprep.subr.bf16.mxu0 0
        %1942 = vmatpush1.bf16.xpose.msra.mxu0 0
        %1943 = vmatprep.subr.bf16.mxu0 0
        %1944 = vmatpush1.bf16.xpose.msra.mxu0 0
        %1945 = vmatprep.subr.bf16.mxu0 0
        %1946 = vmatpush1.bf16.xpose.msra.mxu0 0
        %1947 = vmatprep.subr.bf16.mxu0 0
        %1948 = vmatpush1.bf16.xpose.msra.mxu0 %v1931
        %1949 = vmatprep.subr.bf16.mxu0 0
        %1950 = vmatpush2.bf16.xpose.msra.mxu0 0
        %1951 = vmatprep.subr.bf16.mxu0 0
        %1952 = vmatpush2.bf16.xpose.msra.mxu0 0
        %1953 = vmatprep.subr.bf16.mxu0 0
        %1954 = vmatpush2.bf16.xpose.msra.mxu0 0
        %1955 = vmatprep.subr.bf16.mxu0 0
        %1956 = vmatpush2.bf16.xpose.msra.mxu0 0
        %1957 = vmatprep.subr.bf16.mxu0 0
        %1958 = vmatpush2.bf16.xpose.msra.mxu0 0
        %1959 = vmatprep.subr.bf16.mxu0 0
        %1960 = vmatpush2.bf16.xpose.msra.mxu0 0
        %1961 = vmatprep.subr.bf16.mxu0 0
        %1962 = vmatpush2.bf16.xpose.msra.mxu0 0
        %1963 = vmatprep.subr.bf16.mxu0 0
        %1964 = vmatpush2.bf16.xpose.msra.mxu0 0
        %1965 = vmatprep.mubr.bf16.mxu0 0
        %1966 = vmatmul.mubr.bf16.gmra.mxu0 %v1928
        %v1967 = vpop.f32.mrf.mxu0
        %v1968 = vadd.f32 0.0, %v1967
        %v1969 = vpop.f32.mrf.mxu0
        %v1970 = vpop.f32.mrf.mxu0
        %v1971 = vpop.f32.mrf.mxu0
        %1972 = vdwg.mxu0
        %v1973 = vpack.c.bf16 %v1830, %v1830
        %v1974 = vpack.c.bf16 %v1876, %v1876
        %v1975 = vpack.c.bf16 %v1922, %v1922
        %v1976 = vpack.c.bf16 %v1968, %v1968
        %v1977 = vld [vmem:[#allocation13] sm:$0xf]
        %v1978 = vld [vmem:[#allocation13 + $0x4] sm:$0xf]
        %v1979 = vld [vmem:[#allocation13 + $0x8] sm:$0xf]
        %v1980 = vld [vmem:[#allocation13 + $0xc] sm:$0xf]
        %v1981 = vld [vmem:[%s11] sm:$0x1]
        %v1983 = vlaneseq
        %v1984 = vshrl.u32 %v1983, 7
        %v1985 = vsub.s32 0, %v1984
        %v1986 = vrot.slane %v1981, %v1985
        %v1992 = vunpack.c.l.b16 %v1973
        %v1993 = vunpack.c.l.b16 %v1974
        %v1994 = vunpack.c.l.b16 %v1975
        %v1995 = vunpack.c.l.b16 %v1976
        %v1996 = vpack.c.b16 %v1993, %v1992
        %v1997 = vpack.c.b16 %v1995, %v1994
        %2000 = vxpose.xlu0.c.b16.start [1/8] %v1996, 128
        %2001 = vxpose.xlu0.c.b16.cont [2/8] %v1997, 128
        %2002 = vxpose.xlu0.c.b16.cont [3/8] 0, 128
        %2003 = vxpose.xlu0.c.b16.cont [4/8] 0, 128
        %2004 = vxpose.xlu0.c.b16.cont [5/8] 0, 128
        %2005 = vxpose.xlu0.c.b16.cont [6/8] 0, 128
        %2006 = vxpose.xlu0.c.b16.cont [7/8] 0, 128
        %2007 = vxpose.xlu0.c.b16.end [8/8] 0, 128
        %v2008 = vpop.trf.xlu0
        %v2009 = vpop.trf.xlu0
        %v2010 = vpop.trf.xlu0
        %v2011 = vpop.trf.xlu0
        %v2012 = vpop.trf.xlu0
        %v2013 = vpop.trf.xlu0
        %v2014 = vpop.trf.xlu0
        %v2015 = vpop.trf.xlu0
        %v2020 = vunpack.c.l.b16 %v1977
        %v2021 = vunpack.c.l.b16 %v1978
        %v2022 = vunpack.c.l.b16 %v1979
        %v2023 = vunpack.c.l.b16 %v1980
        %v2024 = vpack.c.b16 %v2021, %v2020
        %v2025 = vpack.c.b16 %v2023, %v2022
        %v2027 = vsel %vm1260, %v2008, 0
        %v2030 = vsel %vm1260, %v2024, 0
        %v2033 = vsel %vm1260, %v2025, 0
        %2035 = vmatprep.subr.bf16.mxu0 0
        %2036 = vmatpush1.bf16.xpose.msra.mxu0 0
        %2037 = vmatprep.subr.bf16.mxu0 0
        %2038 = vmatpush1.bf16.xpose.msra.mxu0 0
        %2039 = vmatprep.subr.bf16.mxu0 0
        %2040 = vmatpush1.bf16.xpose.msra.mxu0 0
        %2041 = vmatprep.subr.bf16.mxu0 0
        %2042 = vmatpush1.bf16.xpose.msra.mxu0 0
        %2043 = vmatprep.subr.bf16.mxu0 0
        %2044 = vmatpush1.bf16.xpose.msra.mxu0 0
        %2045 = vmatprep.subr.bf16.mxu0 0
        %2046 = vmatpush1.bf16.xpose.msra.mxu0 0
        %2047 = vmatprep.subr.bf16.mxu0 0
        %2048 = vmatpush1.bf16.xpose.msra.mxu0 %v2033
        %2049 = vmatprep.subr.bf16.mxu0 0
        %2050 = vmatpush1.bf16.xpose.msra.mxu0 %v2030
        %2051 = vmatprep.subr.bf16.mxu0 0
        %2052 = vmatpush2.bf16.xpose.msra.mxu0 0
        %2053 = vmatprep.subr.bf16.mxu0 0
        %2054 = vmatpush2.bf16.xpose.msra.mxu0 0
        %2055 = vmatprep.subr.bf16.mxu0 0
        %2056 = vmatpush2.bf16.xpose.msra.mxu0 0
        %2057 = vmatprep.subr.bf16.mxu0 0
        %2058 = vmatpush2.bf16.xpose.msra.mxu0 0
        %2059 = vmatprep.subr.bf16.mxu0 0
        %2060 = vmatpush2.bf16.xpose.msra.mxu0 0
        %2061 = vmatprep.subr.bf16.mxu0 0
        %2062 = vmatpush2.bf16.xpose.msra.mxu0 0
        %2063 = vmatprep.subr.bf16.mxu0 0
        %2064 = vmatpush2.bf16.xpose.msra.mxu0 0
        %2065 = vmatprep.subr.bf16.mxu0 0
        %2066 = vmatpush2.bf16.xpose.msra.mxu0 0
        %2067 = vmatprep.mubr.bf16.mxu0 0
        %2068 = vmatmul.mubr.bf16.gmra.mxu0 %v2027
        %v2069 = vpop.f32.mrf.mxu0
        %v2070 = vadd.f32 %v1986, %v2069
        %v2071 = vpop.f32.mrf.mxu0
        %v2072 = vpop.f32.mrf.mxu0
        %v2073 = vpop.f32.mrf.mxu0
        %2074 = vdwg.mxu0
        %v2075 = vadd.f32 %v1259, %v2070
        %v2076 = vld [vmem:[#allocation14] sm:$0x1]
        %v2077 = vld [vmem:[#allocation16] sm:$0x1]
        %v2078 = vsel %vm1260, %v2075, 0.0
        %2079 = vadd.xlane.f32.xlu0 %v2078
        %v2080 = vpop.xlane.xlu0 %2079
        %v2081 = vmul.f32 %v2080, %v1264
        %v2082 = vsub.f32 %v2075, %v2081
        %v2083 = vmul.f32 %v2082, %v2082
        %v2084 = vsel %vm1260, %v2083, 0.0
        %2085 = vadd.xlane.f32.xlu0 %v2084
        %v2086 = vpop.xlane.xlu0 %2085
        %v2087 = vmul.f32 %v2086, %v1264
        %v2088 = vadd.f32 %v2087, 1e-05
        %v2089 = vrsqrt.pop %v2088
        %v2090 = vmul.f32 %v2082, %v2089
        %v2092 = vlaneseq
        %v2093 = vshrl.u32 %v2092, 7
        %v2094 = vsub.s32 0, %v2093
        %v2095 = vrot.slane %v2076, %v2094
        %v2097 = vmul.f32 %v2090, %v2095
        %v2099 = vlaneseq
        %v2100 = vshrl.u32 %v2099, 7
        %v2101 = vsub.s32 0, %v2100
        %v2102 = vrot.slane %v2077, %v2101
        %v2104 = vadd.f32 %v2097, %v2102
        %v2105 = vpack.c.bf16 %v2104, %v2104
        %v2106 = vld [vmem:[%s14] sm:$0xf]
        %v2107 = vld [vmem:[%s14 + $0x4] sm:$0xf]
        %v2108 = vld [vmem:[%s14 + $0x8] sm:$0xf]
        %v2109 = vld [vmem:[%s14 + $0xc] sm:$0xf]
        %v2110 = vld [vmem:[%s14 + $0x10] sm:$0xf]
        %v2111 = vld [vmem:[%s14 + $0x14] sm:$0xf]
        %v2112 = vld [vmem:[%s14 + $0x18] sm:$0xf]
        %v2113 = vld [vmem:[%s14 + $0x1c] sm:$0xf]
        %v2114 = vld [vmem:[%s14 + $0x20] sm:$0xf]
        %v2115 = vld [vmem:[%s14 + $0x24] sm:$0xf]
        %v2116 = vld [vmem:[%s14 + $0x28] sm:$0xf]
        %v2117 = vld [vmem:[%s14 + $0x2c] sm:$0xf]
        %v2118 = vld [vmem:[%s14 + $0x30] sm:$0xf]
        %v2119 = vld [vmem:[%s14 + $0x34] sm:$0xf]
        %v2120 = vld [vmem:[%s14 + $0x38] sm:$0xf]
        %v2121 = vld [vmem:[%s14 + $0x3c] sm:$0xf]
        %v2122 = vld [vmem:[#allocation17] sm:$0x1]
        %v2124 = vlaneseq
        %v2125 = vshrl.u32 %v2124, 7
        %v2126 = vsub.s32 0, %v2125
        %v2127 = vrot.slane %v2122, %v2126
        %v2145 = vunpack.c.l.b16 %v2106
        %v2146 = vunpack.c.l.b16 %v2107
        %v2147 = vunpack.c.l.b16 %v2108
        %v2148 = vunpack.c.l.b16 %v2109
        %v2149 = vunpack.c.l.b16 %v2110
        %v2150 = vunpack.c.l.b16 %v2111
        %v2151 = vunpack.c.l.b16 %v2112
        %v2152 = vunpack.c.l.b16 %v2113
        %v2153 = vunpack.c.l.b16 %v2114
        %v2154 = vunpack.c.l.b16 %v2115
        %v2155 = vunpack.c.l.b16 %v2116
        %v2156 = vunpack.c.l.b16 %v2117
        %v2157 = vunpack.c.l.b16 %v2118
        %v2158 = vunpack.c.l.b16 %v2119
        %v2159 = vunpack.c.l.b16 %v2120
        %v2160 = vunpack.c.l.b16 %v2121
        %v2161 = vpack.c.b16 %v2146, %v2145
        %v2162 = vpack.c.b16 %v2148, %v2147
        %v2163 = vpack.c.b16 %v2150, %v2149
        %v2164 = vpack.c.b16 %v2152, %v2151
        %v2165 = vpack.c.b16 %v2154, %v2153
        %v2166 = vpack.c.b16 %v2156, %v2155
        %v2167 = vpack.c.b16 %v2158, %v2157
        %v2168 = vpack.c.b16 %v2160, %v2159
        %v2170 = vsel %vm1260, %v2105, 0
        %v2173 = vsel %vm1260, %v2161, 0
        %v2176 = vsel %vm1260, %v2162, 0
        %v2179 = vsel %vm1260, %v2163, 0
        %v2182 = vsel %vm1260, %v2164, 0
        %v2185 = vsel %vm1260, %v2165, 0
        %v2188 = vsel %vm1260, %v2166, 0
        %v2191 = vsel %vm1260, %v2167, 0
        %v2194 = vsel %vm1260, %v2168, 0
        %2196 = vmatprep.subr.bf16.mxu0 0
        %2197 = vmatpush1.bf16.xpose.msra.mxu0 %v2194
        %2198 = vmatprep.subr.bf16.mxu0 0
        %2199 = vmatpush1.bf16.xpose.msra.mxu0 %v2191
        %2200 = vmatprep.subr.bf16.mxu0 0
        %2201 = vmatpush1.bf16.xpose.msra.mxu0 %v2188
        %2202 = vmatprep.subr.bf16.mxu0 0
        %2203 = vmatpush1.bf16.xpose.msra.mxu0 %v2185
        %2204 = vmatprep.subr.bf16.mxu0 0
        %2205 = vmatpush1.bf16.xpose.msra.mxu0 %v2182
        %2206 = vmatprep.subr.bf16.mxu0 0
        %2207 = vmatpush1.bf16.xpose.msra.mxu0 %v2179
        %2208 = vmatprep.subr.bf16.mxu0 0
        %2209 = vmatpush1.bf16.xpose.msra.mxu0 %v2176
        %2210 = vmatprep.subr.bf16.mxu0 0
        %2211 = vmatpush1.bf16.xpose.msra.mxu0 %v2173
        %2212 = vmatprep.subr.bf16.mxu0 0
        %2213 = vmatpush2.bf16.xpose.msra.mxu0 0
        %2214 = vmatprep.subr.bf16.mxu0 0
        %2215 = vmatpush2.bf16.xpose.msra.mxu0 0
        %2216 = vmatprep.subr.bf16.mxu0 0
        %2217 = vmatpush2.bf16.xpose.msra.mxu0 0
        %2218 = vmatprep.subr.bf16.mxu0 0
        %2219 = vmatpush2.bf16.xpose.msra.mxu0 0
        %2220 = vmatprep.subr.bf16.mxu0 0
        %2221 = vmatpush2.bf16.xpose.msra.mxu0 0
        %2222 = vmatprep.subr.bf16.mxu0 0
        %2223 = vmatpush2.bf16.xpose.msra.mxu0 0
        %2224 = vmatprep.subr.bf16.mxu0 0
        %2225 = vmatpush2.bf16.xpose.msra.mxu0 0
        %2226 = vmatprep.subr.bf16.mxu0 0
        %2227 = vmatpush2.bf16.xpose.msra.mxu0 0
        %2228 = vmatprep.mubr.bf16.mxu0 0
        %2229 = vmatmul.mubr.bf16.gmra.mxu0 %v2170
        %v2230 = vpop.f32.mrf.mxu0
        %v2231 = vadd.f32 %v2127, %v2230
        %v2232 = vpop.f32.mrf.mxu0
        %v2233 = vpop.f32.mrf.mxu0
        %v2234 = vpop.f32.mrf.mxu0
        %2235 = vdwg.mxu0
        %v2236 = vmul.f32 %v2231, 0.5
        %v2237 = vmul.f32 %v2231, 0.70710677
        %v2238 = verf.f32.pop %v2237
        %v2239 = vadd.f32 %v2238, 1.0
        %v2240 = vmul.f32 %v2236, %v2239
        %v2241 = vpack.c.bf16 %v2240, %v2240
        %v2242 = vld [vmem:[%s16] sm:$0xf]
        %v2243 = vld [vmem:[%s16 + $0x4] sm:$0xf]
        %v2244 = vld [vmem:[%s16 + $0x8] sm:$0xf]
        %v2245 = vld [vmem:[%s16 + $0xc] sm:$0xf]
        %v2246 = vld [vmem:[%s17] sm:$0x1]
        %v2248 = vlaneseq
        %v2249 = vshrl.u32 %v2248, 7
        %v2250 = vsub.s32 0, %v2249
        %v2251 = vrot.slane %v2246, %v2250
        %v2257 = vunpack.c.l.b16 %v2242
        %v2258 = vunpack.c.l.b16 %v2243
        %v2259 = vunpack.c.l.b16 %v2244
        %v2260 = vunpack.c.l.b16 %v2245
        %v2261 = vpack.c.b16 %v2258, %v2257
        %v2262 = vpack.c.b16 %v2260, %v2259
        %2265 = vmatprep.subr.bf16.mxu0 0
        %2266 = vmatpush1.bf16.xpose.msra.mxu0 0
        %2267 = vmatprep.subr.bf16.mxu0 0
        %2268 = vmatpush1.bf16.xpose.msra.mxu0 0
        %2269 = vmatprep.subr.bf16.mxu0 0
        %2270 = vmatpush1.bf16.xpose.msra.mxu0 0
        %2271 = vmatprep.subr.bf16.mxu0 0
        %2272 = vmatpush1.bf16.xpose.msra.mxu0 0
        %2273 = vmatprep.subr.bf16.mxu0 0
        %2274 = vmatpush1.bf16.xpose.msra.mxu0 0
        %2275 = vmatprep.subr.bf16.mxu0 0
        %2276 = vmatpush1.bf16.xpose.msra.mxu0 0
        %2277 = vmatprep.subr.bf16.mxu0 0
        %2278 = vmatpush1.bf16.xpose.msra.mxu0 %v2262
        %2279 = vmatprep.subr.bf16.mxu0 0
        %2280 = vmatpush1.bf16.xpose.msra.mxu0 %v2261
        %2281 = vmatprep.subr.bf16.mxu0 0
        %2282 = vmatpush2.bf16.xpose.msra.mxu0 0
        %2283 = vmatprep.subr.bf16.mxu0 0
        %2284 = vmatpush2.bf16.xpose.msra.mxu0 0
        %2285 = vmatprep.subr.bf16.mxu0 0
        %2286 = vmatpush2.bf16.xpose.msra.mxu0 0
        %2287 = vmatprep.subr.bf16.mxu0 0
        %2288 = vmatpush2.bf16.xpose.msra.mxu0 0
        %2289 = vmatprep.subr.bf16.mxu0 0
        %2290 = vmatpush2.bf16.xpose.msra.mxu0 0
        %2291 = vmatprep.subr.bf16.mxu0 0
        %2292 = vmatpush2.bf16.xpose.msra.mxu0 0
        %2293 = vmatprep.subr.bf16.mxu0 0
        %2294 = vmatpush2.bf16.xpose.msra.mxu0 0
        %2295 = vmatprep.subr.bf16.mxu0 0
        %2296 = vmatpush2.bf16.xpose.msra.mxu0 0
        %2297 = vmatprep.mubr.bf16.mxu0 0
        %2298 = vmatmul.mubr.bf16.gmra.mxu0 %v2241
        %v2299 = vpop.f32.mrf.mxu0
        %v2300 = vadd.f32 %v2251, %v2299
        %v2301 = vpop.f32.mrf.mxu0
        %v2302 = vpop.f32.mrf.mxu0
        %v2303 = vpop.f32.mrf.mxu0
        %2304 = vdwg.mxu0
        %v2305 = vadd.f32 %v2075, %v2300
        %2306 = vst.msk [vmem:[%s712] sm:$0xff] %vm1260, %v2305
        %s2307 = sand.u32 %s449, 1
        %s2308 = scalar_lea.sflag [#allocation7], %s2307
        %s2309 = sand.u32 %s449, 1
        %s2310 = smul.addr %s2309, 8
        %s2311 = scalar_lea.vmem [#allocation19], %s2310
        // Predicated region
        $region129: #{tpu_custom_call.1} parent=91 // pred_check
          %p2312 = pneg %p459
        $region130: #{tpu_custom_call.1} parent=91 // pred_check_branch
          %2314 = sbr.rel (%p2312) target = $region132
        $region131: #{tpu_custom_call.1} parent=91 // pred_region
          %s2316 = ssub.s32 128, 128
          %2317 = vsyncadd %s2308, %s2316
          %s2318 = smul.addr %s41, 2
          %s2319 = sadd.s32 %s42, %s2318
          %s2320 = smul.addr %s2319, 128
          %s2321 = scalar_lea.hbm %s18, %s2320
          %s2323 = sshll.u32 %s2311, 4
          %s2324 = int_to_ptr.vmem [resolvable:$true] %s2323
          %2326 = dma.vmem_to_hbm [thread:$0]  %s2324, 128, %s2321, %s2308
        $region132: #{tpu_custom_call.1} parent=91 // pred_fallthru
          _
      $region92: #{tpu_custom_call.1} parent=5 // pred_fallthru
        _
      %p2327 = scmp.le.s32.totalorder 2, %s32
      // Predicated region
      $region133: #{tpu_custom_call.1} parent=5 // pred_check
        %p2328 = pneg %p2327
      $region134: #{tpu_custom_call.1} parent=5 // pred_check_branch
        %2330 = sbr.rel (%p2328) target = $region136
      $region135: #{tpu_custom_call.1} parent=5 // pred_region
        %s2331 = ssub.s32 %s32, 2
        // Predicated region
        $region137: #{tpu_custom_call.1} parent=135 // pred_check
          %p2332 = pneg %p465
        $region138: #{tpu_custom_call.1} parent=135 // pred_check_branch
          %2334 = sbr.rel (%p2332) target = $region140
        $region139: #{tpu_custom_call.1} parent=135 // pred_region
          %s2335 = sand.u32 %s450, 1
          %s2336 = scalar_lea.sflag [#allocation7], %s2335
          %s2337 = sand.u32 %s450, 1
          %s2338 = smul.addr %s2337, 8
          %s2339 = scalar_lea.vmem [#allocation19], %s2338
          %2340 = dma.done %s2336, 128
        $region140: #{tpu_custom_call.1} parent=135 // pred_fallthru
          _
      $region136: #{tpu_custom_call.1} parent=5 // pred_fallthru
        _
    $region6: #{tpu_custom_call.1} parent=1 // loop_footer
      %s36 = sadd.s32 1, %s32
    $region7: #{tpu_custom_call.1} parent=1 // loop_footer_branch
      %31 = sbr.rel target = $region3
    $region8: #{tpu_custom_call.1} parent=1 // loop_exit
      _
    %2341 = vsyncpa [#allocation6], 1
    %s2342 = scalar_lea.sflag [#allocation6], 1
    %2343 = vsyncpa %s2342, 1
    %2344 = vsyncpa [#allocation9], 1
    %2345 = vsyncpa [#allocation12], 1
    %2346 = vsyncpa [#allocation15], 1
    %2347 = vsyncpa [#allocation18], 1
    %2348 = vsyncpa [#allocation7], 1
    %s2349 = scalar_lea.sflag [#allocation7], 1
    %2350 = vsyncpa %s2349, 1

</llo_original>
